<compile_context>
chip_gen: v6e
topology: v6e:2x2x1
jax: 0.10.0
libtpu: 0.0.40
codegen_flags: <defaults>
</compile_context>

<pallas_src>
import functools

import jax
import jax.numpy as jnp
import numpy as np
from jax.experimental import pallas as pl
from jax.experimental.pallas import tpu as pltpu

_BN_EPS = 1e-5


# ------------------------------------------------------------------
# Fused Conv3d(k=3, pad=1) + BN-folded bias (+ReLU) (+residual)
# (+fused MaxPool(1,2,2)) (+fused 1x1x1 head) Pallas kernel.
# Inputs are channels-last with W and C merged on the lane dim: (B, D, H, W*C).
# Weights are pre-"banded" over the W axis on host: (3, 3, W*Cin, Wo*Cout).
# ------------------------------------------------------------------
def _fused_conv_kernel(*refs, n_src, stride, relu, has_res, pool, has_head,
                       spatial, conv_out):
    D, H, _ = spatial
    Do, Ho, Wo = conv_out

    idx = 0
    xs = refs[idx:idx + n_src]; idx += n_src
    wbs = refs[idx:idx + n_src]; idx += n_src
    b_ref = refs[idx]; idx += 1
    res_ref = None
    if has_res:
        res_ref = refs[idx]; idx += 1
    hw_ref = hb_ref = None
    if has_head:
        hw_ref = refs[idx]
        hb_ref = refs[idx + 1]
        idx += 2
    o_ref = refs[idx]; idx += 1
    pads = refs[idx:idx + n_src]; idx += n_src
    acc_ref = refs[idx]

    # 1) Zero the halo only, then copy the interior of each source into its padded
    #    VMEM scratch (W padding / W stride are folded into the banded weights).
    for x_ref, xp in zip(xs, pads):
        Dp, Hp, WC = xp.shape
        xp[0:1] = jnp.zeros((1, Hp, WC), jnp.float32)
        xp[D + 1:Dp] = jnp.zeros((Dp - D - 1, Hp, WC), jnp.float32)
        xp[1:1 + D, 0:1] = jnp.zeros((D, 1, WC), jnp.float32)
        xp[1:1 + D, H + 1:Hp] = jnp.zeros((D, Hp - H - 1, WC), jnp.float32)
        xp[1:1 + D, 1:1 + H, :] = x_ref[0]

    # 2) Whole-volume accumulation: ONE matmul per (source, kd, kh) tap with
    #    M = Do*Ho rows, accumulated into a VMEM f32 scratch.
    acc_ref[...] = jnp.zeros_like(acc_ref)
    WoC = acc_ref.shape[1]
    for xp, wb in zip(pads, wbs):
        WC = xp.shape[2]
        Hp = xp.shape[1]
        for kd in range(3):
            if stride == 1:
                slab = xp[kd:kd + Do]                       # (Do, Hp, WC)
            else:
                slab = xp[kd:kd + 2 * Do]                   # (2*Do, Hp, WC)
                slab = slab.reshape(Do, 2, Hp, WC)[:, 0]    # decimate D, no strided ds
            for kh in range(3):
                if stride == 1:
                    rows = slab[:, kh:kh + Ho, :]
                else:
                    rows = slab[:, kh:kh + 2 * Ho, :]
                    rows = rows.reshape(Do, Ho, 2, WC)[:, :, 0]
                acc_ref[...] += jnp.dot(rows.reshape(Do * Ho, WC), wb[kd, kh],
                                        preferred_element_type=jnp.float32)

    # 3) Epilogue: bias (hoisted, added once) + ReLU + residual + optional fused
    #    1x1x1 head + optional fused MaxPool(1,2,2).
    acc = acc_ref[...] + b_ref[...]
    if relu:
        acc = jnp.maximum(acc, 0.0)
    if has_res:
        acc = acc + res_ref[0].reshape(Do * Ho, WoC)
    if has_head:
        acc = (jnp.dot(acc, hw_ref[...], preferred_element_type=jnp.float32)
               + hb_ref[...])

    c_lane = acc.shape[1] // Wo
    if pool:
        Hq, Wq = Ho // 2, Wo // 2
        v = acc.reshape(Do, Ho, Wo, c_lane)
        if Wo % 2:
            v = v[:, :, :2 * Wq, :]
        v = jnp.max(v.reshape(Do, Ho, Wq, 2, c_lane), axis=3)    # W-pool
        if Ho % 2:
            v = v[:, :2 * Hq]
        v = jnp.max(v.reshape(Do, Hq, 2, Wq * c_lane), axis=2)   # H-pool
        o_ref[0] = v.astype(o_ref.dtype)
    else:
        o_ref[0] = acc.reshape(Do, Ho, acc.shape[1]).astype(o_ref.dtype)


def fused_conv(sources, banded_ws, bias_row, spatial, cout, stride, relu,
               residual=None, pool=False, head=None):
    """sources: list of (B, D, H, W*C_s); banded_ws: list of (3,3,W*C_s,Wo*cout)."""
    B = sources[0].shape[0]
    D, H, W = spatial
    Do = (D - 1) // stride + 1
    Ho = (H - 1) // stride + 1
    Wo = (W - 1) // stride + 1
    n_src = len(sources)
    has_res = residual is not None
    has_head = head is not None

    cfin = cout if not has_head else head[0].shape[1] // Wo
    if pool:
        Hq, Wq = Ho // 2, Wo // 2
        out_shape = (B, Do, Hq, Wq * cfin)
        out_spatial = (Do, Hq, Wq)
    else:
        out_shape = (B, Do, Ho, Wo * cfin)
        out_spatial = (Do, Ho, Wo)

    kern = functools.partial(_fused_conv_kernel, n_src=n_src, stride=stride,
                             relu=relu, has_res=has_res, pool=pool,
                             has_head=has_head, spatial=spatial,
                             conv_out=(Do, Ho, Wo))

    in_specs = [pl.BlockSpec((1,) + s.shape[1:], lambda b: (b, 0, 0, 0))
                for s in sources]
    in_specs += [pl.BlockSpec(wb.shape, lambda b: (0, 0, 0, 0))
                 for wb in banded_ws]
    in_specs.append(pl.BlockSpec(bias_row.shape, lambda b: (0, 0)))
    inputs = list(sources) + list(banded_ws) + [bias_row]
    if has_res:
        in_specs.append(pl.BlockSpec((1,) + residual.shape[1:],
                                     lambda b: (b, 0, 0, 0)))
        inputs.append(residual)
    if has_head:
        hw, hb = head
        in_specs.append(pl.BlockSpec(hw.shape, lambda b: (0, 0)))
        in_specs.append(pl.BlockSpec(hb.shape, lambda b: (0, 0)))
        inputs += [hw, hb]

    if stride == 1:
        Dp, Hp = D + 2, H + 2
    else:
        Dp, Hp = max(D + 2, 2 * Do + 2), max(H + 2, 2 * Ho + 2)
    scratch = [pltpu.VMEM((Dp, Hp, s.shape[3]), jnp.float32) for s in sources]
    scratch.append(pltpu.VMEM((Do * Ho, Wo * cout), jnp.float32))

    out = pl.pallas_call(
        kern,
        out_shape=jax.ShapeDtypeStruct(out_shape, jnp.float32),
        grid=(B,),
        in_specs=in_specs,
        out_specs=pl.BlockSpec((1,) + out_shape[1:], lambda b: (b, 0, 0, 0)),
        scratch_shapes=scratch,
        compiler_params=pltpu.CompilerParams(dimension_semantics=("parallel",)),
    )(*inputs)
    return out, out_spatial


# ------------------------------------------------------------------
# Host-side parameter folding helpers
# ------------------------------------------------------------------
def _fold_bn(bn):
    g = np.asarray(bn["gamma"], np.float32)
    bt = np.asarray(bn["beta"], np.float32)
    m = np.asarray(bn["mean"], np.float32)
    v = np.asarray(bn["var"], np.float32)
    scale = g / np.sqrt(v + _BN_EPS)
    return scale, bt - m * scale


def _band_weight(w, scale, W_in, stride):
    """w: (3,3,3,Cin,Cout) -> banded (3,3, W_in*Cin, Wo*Cout), BN scale folded in."""
    w = np.asarray(w, np.float32) * np.asarray(scale, np.float32)[None, None, None, None, :]
    _, _, kW, cin, cout = w.shape
    Wo = (W_in - 1) // stride + 1
    wb = np.zeros((3, 3, W_in * cin, Wo * cout), np.float32)
    for kw in range(kW):
        for wo in range(Wo):
            wi = stride * wo + kw - 1           # pad=1 baked in here
            if 0 <= wi < W_in:
                wb[:, :, wi * cin:(wi + 1) * cin, wo * cout:(wo + 1) * cout] += w[:, :, kw]
    return jnp.asarray(wb)


def _bias_row(bias, Wo, cout):
    return jnp.asarray(np.tile(np.asarray(bias, np.float32), Wo).reshape(1, Wo * cout))


def _blockdiag(w, Wo):
    """w: (Cin, Cout) 1x1x1-conv matrix -> block-diagonal (Wo*Cin, Wo*Cout)."""
    w = np.asarray(w, np.float32)
    cin, cf = w.shape
    m = np.zeros((Wo * cin, Wo * cf), np.float32)
    for i in range(Wo):
        m[i * cin:(i + 1) * cin, i * cf:(i + 1) * cf] = w
    return jnp.asarray(m)


# ------------------------------------------------------------------
# Deterministic parameter init (matches the module's structure)
# ------------------------------------------------------------------
def _init_conv_w(key, cin, cout, k=3):
    fan_in = cin * k * k * k
    return jax.random.normal(key, (k, k, k, cin, cout), jnp.float32) / jnp.sqrt(fan_in)


def _init_bn(key, c):
    k1, k2, k3, k4 = jax.random.split(key, 4)
    return {"gamma": 1.0 + 0.1 * jax.random.normal(k1, (c,), jnp.float32),
            "beta": 0.1 * jax.random.normal(k2, (c,), jnp.float32),
            "mean": 0.05 * jax.random.normal(k3, (c,), jnp.float32),
            "var": 0.5 + jax.random.uniform(k4, (c,), jnp.float32)}


def init_convblock(key, cin, cout, n_levels):
    keys = jax.random.split(key, 2 * (n_levels + 2))
    p = {"conv": {"w": _init_conv_w(keys[0], cin, cout), "bn": _init_bn(keys[1], cout)},
         "layers": [],
         "final": {"w": _init_conv_w(keys[2], cout, cout), "bn": _init_bn(keys[3], cout)}}
    for i in range(n_levels):
        p["layers"].append({"w": _init_conv_w(keys[4 + 2 * i], cout * (i + 1), cout),
                            "bn": _init_bn(keys[5 + 2 * i], cout)})
    return p


def init_model(key, in_channels, out_channels, hid_dims, n_levels):
    keys = jax.random.split(key, len(hid_dims) + 3)
    params = {"conv": {"w": _init_conv_w(keys[0], in_channels, hid_dims[0]),
                       "b": 0.05 * jax.random.normal(keys[1], (hid_dims[0],), jnp.float32)},
              "blocks": []}
    for i in range(len(hid_dims)):
        cout = out_channels if i == len(hid_dims) - 1 else hid_dims[i + 1]
        params["blocks"].append({"p": init_convblock(keys[2 + i], hid_dims[i], cout, n_levels),
                                 "pool": i != len(hid_dims) - 1})
    kf = keys[-1]
    params["final"] = {
        "w": jax.random.normal(kf, (out_channels, out_channels), jnp.float32)
        / jnp.sqrt(out_channels),
        "b": 0.05 * jax.random.normal(jax.random.fold_in(kf, 1), (out_channels,), jnp.float32)}
    return params


# ------------------------------------------------------------------
# Forward pass
# ------------------------------------------------------------------
def convblock_forward(x, p, pool, spatial, head=None):
    cout = p["conv"]["w"].shape[-1]
    D, H, W = spatial

    # Block conv: stride-2 conv + BN + ReLU, with MaxPool(1,2,2) fused when present.
    scale, bias = _fold_bn(p["conv"]["bn"])
    wb = _band_weight(p["conv"]["w"], scale, W, 2)
    Wo = (W - 1) // 2 + 1
    out, spatial = fused_conv([x], [wb], _bias_row(bias, Wo, cout), (D, H, W),
                              cout, 2, relu=True, pool=pool)

    # DenseNet-style layers (stride 1); residual add (new + out) fused into the last.
    D2, H2, W2 = spatial
    sources = [out]
    new = None
    n = len(p["layers"])
    for i, lp in enumerate(p["layers"]):
        scale, bias = _fold_bn(lp["bn"])
        w_full = np.asarray(lp["w"], np.float32)   # (3,3,3, cout*(i+1), cout)
        wbs = [_band_weight(w_full[:, :, :, j * cout:(j + 1) * cout, :], scale, W2, 1)
               for j in range(i + 1)]
        is_last = (i == n - 1)
        new, _ = fused_conv(sources, wbs, _bias_row(bias, W2, cout), (D2, H2, W2),
                            cout, 1, relu=True,
                            residual=out if is_last else None)
        sources.append(new)
    # TODO(synk): n_levels == 0 would make PyTorch crash (`new` undefined); fall back to `out`.
    mid = new if new is not None else out

    # Final conv: stride-2 conv + BN + ReLU; the model's 1x1x1 head is fused here
    # (block-diagonal matmul in the epilogue) when this is the last block.
    scale, bias = _fold_bn(p["final"]["bn"])
    wb = _band_weight(p["final"]["w"], scale, W2, 2)
    Wo2 = (W2 - 1) // 2 + 1
    head_args = None
    cfin = cout
    if head is not None:
        hw, hb = head
        head_args = (_blockdiag(hw, Wo2), _bias_row(hb, Wo2, hw.shape[1]))
        cfin = hw.shape[1]
    outf, spatial = fused_conv([mid], [wb], _bias_row(bias, Wo2, cout), (D2, H2, W2),
                               cout, 2, relu=True, head=head_args)
    return outf, spatial, cfin


def model_forward(x_ncdhw, params):
    """x_ncdhw: PyTorch-layout (B, C, S1, S2, S3). Returns (B, -1) like the module."""
    B, Cin, S1, S2, S3 = x_ncdhw.shape
    x = jnp.transpose(x_ncdhw, (0, 2, 3, 4, 1)).astype(jnp.float32)
    x = x.reshape(B, S1, S2, S3 * Cin)          # merged channels-last layout
    spatial = (S1, S2, S3)

    # Stem conv: stride 1, bias=True, no BN, no ReLU.
    w0 = params["conv"]["w"]
    c0 = w0.shape[-1]
    wb = _band_weight(w0, np.ones(c0, np.float32), spatial[2], 1)
    brow = _bias_row(params["conv"]["b"], spatial[2], c0)
    out, spatial = fused_conv([x], [wb], brow, spatial, c0, 1, relu=False)

    c_cur = c0
    n_blocks = len(params["blocks"])
    for bi, blk in enumerate(params["blocks"]):
        head = None
        if bi == n_blocks - 1:
            head = (np.asarray(params["final"]["w"], np.float32),
                    np.asarray(params["final"]["b"], np.float32))
        out, spatial, c_cur = convblock_forward(out, blk["p"], blk["pool"], spatial,
                                                head=head)

    # Flatten in PyTorch NCDHW order.
    D, H, W = spatial
    out5 = out.reshape(B, D, H, W, c_cur)
    return jnp.transpose(out5, (0, 4, 1, 2, 3)).reshape(B, -1)


if __name__ == "__main__":
    key = jax.random.PRNGKey(0)
    kx, kp = jax.random.split(key)

    # Small deterministic config: in_channels=2, out_channels=8, hid_dims=[4, 8], n_levels=2
    in_channels, out_channels, hid_dims, n_levels = 2, 8, [4, 8], 2
    B, S = 2, 16
    x = jax.random.normal(kx, (B, in_channels, S, S, S), jnp.float32)

    params = init_model(kp, in_channels, out_channels, hid_dims, n_levels)
    y = model_forward(x, params)
    y = jax.block_until_ready(y)
    assert y.shape == (B, out_channels)   # spatial collapses to 1x1x1 at this size
    print("KERNEL_OK")
</pallas_src>

<mosaic_0001>
module attributes {stable_mosaic.version = 11 : i64} {
  func.func @_fused_conv_kernel(%arg0: i32, %arg1: memref<1x16x16x32xf32, #tpu.memory_space<vmem>>, %arg2: memref<3x3x32x64xf32, #tpu.memory_space<vmem>>, %arg3: memref<1x64xf32, #tpu.memory_space<vmem>>, %arg4: memref<1x16x16x64xf32, #tpu.memory_space<vmem>>, %arg5: memref<18x18x32xf32, #tpu.memory_space<vmem>>, %arg6: memref<256x64xf32, #tpu.memory_space<vmem>>) attributes {dimension_semantics = [#tpu.dimension_semantics<parallel>], iteration_bounds = array<i64: 2>, scalar_prefetch = 0 : i64, scratch_operands = 2 : i64, tpu.core_type = #tpu.core_type<tc>, window_params = [{transform_indices = @transform_0, window_bounds = array<i64: 1, 16, 16, 32>}, {pipeline_mode = #tpu.pipeline_mode<synchronous>, transform_indices = @transform_1, window_bounds = array<i64: 3, 3, 32, 64>}, {pipeline_mode = #tpu.pipeline_mode<synchronous>, transform_indices = @transform_2, window_bounds = array<i64: 1, 64>}, {transform_indices = @transform_3, window_bounds = array<i64: 1, 16, 16, 64>}]} {
    %cst = arith.constant 0.000000e+00 : f32
    %0 = vector.broadcast %cst : f32 to vector<1x18x32xf32>
    %c0 = arith.constant 0 : index
    %c0_0 = arith.constant 0 : index
    %c0_1 = arith.constant 0 : index
    %1 = vector.load %arg5[%c0, %c0_0, %c0_1] : memref<18x18x32xf32, #tpu.memory_space<vmem>>, vector<1x18x32xf32>
    tpu.vector_store %arg5[%c0, %c0_0, %c0_1], %0 {strides = array<i32>} : memref<18x18x32xf32, #tpu.memory_space<vmem>>, vector<1x18x32xf32>,
    %cst_2 = arith.constant 0.000000e+00 : f32
    %2 = vector.broadcast %cst_2 : f32 to vector<1x18x32xf32>
    %c17 = arith.constant 17 : index
    %c0_3 = arith.constant 0 : index
    %c0_4 = arith.constant 0 : index
    %3 = vector.load %arg5[%c17, %c0_3, %c0_4] : memref<18x18x32xf32, #tpu.memory_space<vmem>>, vector<1x18x32xf32>
    tpu.vector_store %arg5[%c17, %c0_3, %c0_4], %2 {strides = array<i32>} : memref<18x18x32xf32, #tpu.memory_space<vmem>>, vector<1x18x32xf32>,
    %cst_5 = arith.constant 0.000000e+00 : f32
    %4 = vector.broadcast %cst_5 : f32 to vector<16x1x32xf32>
    %c1 = arith.constant 1 : index
    %c0_6 = arith.constant 0 : index
    %c0_7 = arith.constant 0 : index
    %5 = vector.load %arg5[%c1, %c0_6, %c0_7] : memref<18x18x32xf32, #tpu.memory_space<vmem>>, vector<16x1x32xf32>
    tpu.vector_store %arg5[%c1, %c0_6, %c0_7], %4 {strides = array<i32>} : memref<18x18x32xf32, #tpu.memory_space<vmem>>, vector<16x1x32xf32>,
    %cst_8 = arith.constant 0.000000e+00 : f32
    %6 = vector.broadcast %cst_8 : f32 to vector<16x1x32xf32>
    %c1_9 = arith.constant 1 : index
    %c17_10 = arith.constant 17 : index
    %c0_11 = arith.constant 0 : index
    %7 = vector.load %arg5[%c1_9, %c17_10, %c0_11] : memref<18x18x32xf32, #tpu.memory_space<vmem>>, vector<16x1x32xf32>
    tpu.vector_store %arg5[%c1_9, %c17_10, %c0_11], %6 {strides = array<i32>} : memref<18x18x32xf32, #tpu.memory_space<vmem>>, vector<16x1x32xf32>,
    %c0_12 = arith.constant 0 : index
    %c0_13 = arith.constant 0 : index
    %c0_14 = arith.constant 0 : index
    %c0_15 = arith.constant 0 : index
    %8 = vector.load %arg1[%c0_12, %c0_13, %c0_14, %c0_15] : memref<1x16x16x32xf32, #tpu.memory_space<vmem>>, vector<1x16x16x32xf32>
    %9 = vector.shape_cast %8 : vector<1x16x16x32xf32> to vector<16x16x32xf32>
    %c1_16 = arith.constant 1 : index
    %c1_17 = arith.constant 1 : index
    %c0_18 = arith.constant 0 : index
    %10 = vector.load %arg5[%c1_16, %c1_17, %c0_18] : memref<18x18x32xf32, #tpu.memory_space<vmem>>, vector<16x16x32xf32>
    tpu.vector_store %arg5[%c1_16, %c1_17, %c0_18], %9 {strides = array<i32>} : memref<18x18x32xf32, #tpu.memory_space<vmem>>, vector<16x16x32xf32>,
    %cst_19 = arith.constant 0.000000e+00 : f32
    %11 = vector.broadcast %cst_19 : f32 to vector<256x64xf32>
    %c0_20 = arith.constant 0 : index
    %c0_21 = arith.constant 0 : index
    %12 = vector.load %arg6[%c0_20, %c0_21] : memref<256x64xf32, #tpu.memory_space<vmem>>, vector<256x64xf32>
    tpu.vector_store %arg6[%c0_20, %c0_21], %11 {strides = array<i32>} : memref<256x64xf32, #tpu.memory_space<vmem>>, vector<256x64xf32>,
    %c0_22 = arith.constant 0 : index
    %c0_23 = arith.constant 0 : index
    %c0_24 = arith.constant 0 : index
    %13 = vector.load %arg5[%c0_22, %c0_23, %c0_24] : memref<18x18x32xf32, #tpu.memory_space<vmem>>, vector<16x18x32xf32>
    %14 = vector.extract_strided_slice %13 {offsets = [0, 0, 0], sizes = [16, 16, 32], strides = [1, 1, 1]} : vector<16x18x32xf32> to vector<16x16x32xf32>
    %c0_25 = arith.constant 0 : index
    %c0_26 = arith.constant 0 : index
    %15 = vector.load %arg6[%c0_25, %c0_26] : memref<256x64xf32, #tpu.memory_space<vmem>>, vector<256x64xf32>
    %16 = vector.shape_cast %14 : vector<16x16x32xf32> to vector<256x32xf32>
    %c0_27 = arith.constant 0 : index
    %c0_28 = arith.constant 0 : index
    %c0_29 = arith.constant 0 : index
    %c0_30 = arith.constant 0 : index
    %17 = vector.load %arg2[%c0_27, %c0_28, %c0_29, %c0_30] : memref<3x3x32x64xf32, #tpu.memory_space<vmem>>, vector<1x1x32x64xf32>
    %18 = vector.shape_cast %17 : vector<1x1x32x64xf32> to vector<32x64xf32>
    %cst_31 = arith.constant dense<0.000000e+00> : vector<256x64xf32>
    %19 = tpu.matmul %16, %18, %cst_31 {dimension_numbers = #tpu.dot_dimension_numbers<[1], [0], [0], [1], [0, 0, 1, 1], [], []>} : vector<256x32xf32>, vector<32x64xf32>, vector<256x64xf32> -> vector<256x64xf32>
    %20 = arith.addf %15, %19 : vector<256x64xf32>
    %c0_32 = arith.constant 0 : index
    %c0_33 = arith.constant 0 : index
    %21 = vector.load %arg6[%c0_32, %c0_33] : memref<256x64xf32, #tpu.memory_space<vmem>>, vector<256x64xf32>
    tpu.vector_store %arg6[%c0_32, %c0_33], %20 {strides = array<i32>} : memref<256x64xf32, #tpu.memory_space<vmem>>, vector<256x64xf32>,
    %22 = vector.extract_strided_slice %13 {offsets = [0, 1, 0], sizes = [16, 16, 32], strides = [1, 1, 1]} : vector<16x18x32xf32> to vector<16x16x32xf32>
    %c0_34 = arith.constant 0 : index
    %c0_35 = arith.constant 0 : index
    %23 = vector.load %arg6[%c0_34, %c0_35] : memref<256x64xf32, #tpu.memory_space<vmem>>, vector<256x64xf32>
    %24 = vector.shape_cast %22 : vector<16x16x32xf32> to vector<256x32xf32>
    %c0_36 = arith.constant 0 : index
    %c1_37 = arith.constant 1 : index
    %c0_38 = arith.constant 0 : index
    %c0_39 = arith.constant 0 : index
    %25 = vector.load %arg2[%c0_36, %c1_37, %c0_38, %c0_39] : memref<3x3x32x64xf32, #tpu.memory_space<vmem>>, vector<1x1x32x64xf32>
    %26 = vector.shape_cast %25 : vector<1x1x32x64xf32> to vector<32x64xf32>
    %cst_40 = arith.constant dense<0.000000e+00> : vector<256x64xf32>
    %27 = tpu.matmul %24, %26, %cst_40 {dimension_numbers = #tpu.dot_dimension_numbers<[1], [0], [0], [1], [0, 0, 1, 1], [], []>} : vector<256x32xf32>, vector<32x64xf32>, vector<256x64xf32> -> vector<256x64xf32>
    %28 = arith.addf %23, %27 : vector<256x64xf32>
    %c0_41 = arith.constant 0 : index
    %c0_42 = arith.constant 0 : index
    %29 = vector.load %arg6[%c0_41, %c0_42] : memref<256x64xf32, #tpu.memory_space<vmem>>, vector<256x64xf32>
    tpu.vector_store %arg6[%c0_41, %c0_42], %28 {strides = array<i32>} : memref<256x64xf32, #tpu.memory_space<vmem>>, vector<256x64xf32>,
    %30 = vector.extract_strided_slice %13 {offsets = [0, 2, 0], sizes = [16, 16, 32], strides = [1, 1, 1]} : vector<16x18x32xf32> to vector<16x16x32xf32>
    %c0_43 = arith.constant 0 : index
    %c0_44 = arith.constant 0 : index
    %31 = vector.load %arg6[%c0_43, %c0_44] : memref<256x64xf32, #tpu.memory_space<vmem>>, vector<256x64xf32>
    %32 = vector.shape_cast %30 : vector<16x16x32xf32> to vector<256x32xf32>
    %c0_45 = arith.constant 0 : index
    %c2 = arith.constant 2 : index
    %c0_46 = arith.constant 0 : index
    %c0_47 = arith.constant 0 : index
    %33 = vector.load %arg2[%c0_45, %c2, %c0_46, %c0_47] : memref<3x3x32x64xf32, #tpu.memory_space<vmem>>, vector<1x1x32x64xf32>
    %34 = vector.shape_cast %33 : vector<1x1x32x64xf32> to vector<32x64xf32>
    %cst_48 = arith.constant dense<0.000000e+00> : vector<256x64xf32>
    %35 = tpu.matmul %32, %34, %cst_48 {dimension_numbers = #tpu.dot_dimension_numbers<[1], [0], [0], [1], [0, 0, 1, 1], [], []>} : vector<256x32xf32>, vector<32x64xf32>, vector<256x64xf32> -> vector<256x64xf32>
    %36 = arith.addf %31, %35 : vector<256x64xf32>
    %c0_49 = arith.constant 0 : index
    %c0_50 = arith.constant 0 : index
    %37 = vector.load %arg6[%c0_49, %c0_50] : memref<256x64xf32, #tpu.memory_space<vmem>>, vector<256x64xf32>
    tpu.vector_store %arg6[%c0_49, %c0_50], %36 {strides = array<i32>} : memref<256x64xf32, #tpu.memory_space<vmem>>, vector<256x64xf32>,
    %c1_51 = arith.constant 1 : index
    %c0_52 = arith.constant 0 : index
    %c0_53 = arith.constant 0 : index
    %38 = vector.load %arg5[%c1_51, %c0_52, %c0_53] : memref<18x18x32xf32, #tpu.memory_space<vmem>>, vector<16x18x32xf32>
    %39 = vector.extract_strided_slice %38 {offsets = [0, 0, 0], sizes = [16, 16, 32], strides = [1, 1, 1]} : vector<16x18x32xf32> to vector<16x16x32xf32>
    %c0_54 = arith.constant 0 : index
    %c0_55 = arith.constant 0 : index
    %40 = vector.load %arg6[%c0_54, %c0_55] : memref<256x64xf32, #tpu.memory_space<vmem>>, vector<256x64xf32>
    %41 = vector.shape_cast %39 : vector<16x16x32xf32> to vector<256x32xf32>
    %c1_56 = arith.constant 1 : index
    %c0_57 = arith.constant 0 : index
    %c0_58 = arith.constant 0 : index
    %c0_59 = arith.constant 0 : index
    %42 = vector.load %arg2[%c1_56, %c0_57, %c0_58, %c0_59] : memref<3x3x32x64xf32, #tpu.memory_space<vmem>>, vector<1x1x32x64xf32>
    %43 = vector.shape_cast %42 : vector<1x1x32x64xf32> to vector<32x64xf32>
    %cst_60 = arith.constant dense<0.000000e+00> : vector<256x64xf32>
    %44 = tpu.matmul %41, %43, %cst_60 {dimension_numbers = #tpu.dot_dimension_numbers<[1], [0], [0], [1], [0, 0, 1, 1], [], []>} : vector<256x32xf32>, vector<32x64xf32>, vector<256x64xf32> -> vector<256x64xf32>
    %45 = arith.addf %40, %44 : vector<256x64xf32>
    %c0_61 = arith.constant 0 : index
    %c0_62 = arith.constant 0 : index
    %46 = vector.load %arg6[%c0_61, %c0_62] : memref<256x64xf32, #tpu.memory_space<vmem>>, vector<256x64xf32>
    tpu.vector_store %arg6[%c0_61, %c0_62], %45 {strides = array<i32>} : memref<256x64xf32, #tpu.memory_space<vmem>>, vector<256x64xf32>,
    %47 = vector.extract_strided_slice %38 {offsets = [0, 1, 0], sizes = [16, 16, 32], strides = [1, 1, 1]} : vector<16x18x32xf32> to vector<16x16x32xf32>
    %c0_63 = arith.constant 0 : index
    %c0_64 = arith.constant 0 : index
    %48 = vector.load %arg6[%c0_63, %c0_64] : memref<256x64xf32, #tpu.memory_space<vmem>>, vector<256x64xf32>
    %49 = vector.shape_cast %47 : vector<16x16x32xf32> to vector<256x32xf32>
    %c1_65 = arith.constant 1 : index
    %c1_66 = arith.constant 1 : index
    %c0_67 = arith.constant 0 : index
    %c0_68 = arith.constant 0 : index
    %50 = vector.load %arg2[%c1_65, %c1_66, %c0_67, %c0_68] : memref<3x3x32x64xf32, #tpu.memory_space<vmem>>, vector<1x1x32x64xf32>
    %51 = vector.shape_cast %50 : vector<1x1x32x64xf32> to vector<32x64xf32>
    %cst_69 = arith.constant dense<0.000000e+00> : vector<256x64xf32>
    %52 = tpu.matmul %49, %51, %cst_69 {dimension_numbers = #tpu.dot_dimension_numbers<[1], [0], [0], [1], [0, 0, 1, 1], [], []>} : vector<256x32xf32>, vector<32x64xf32>, vector<256x64xf32> -> vector<256x64xf32>
    %53 = arith.addf %48, %52 : vector<256x64xf32>
    %c0_70 = arith.constant 0 : index
    %c0_71 = arith.constant 0 : index
    %54 = vector.load %arg6[%c0_70, %c0_71] : memref<256x64xf32, #tpu.memory_space<vmem>>, vector<256x64xf32>
    tpu.vector_store %arg6[%c0_70, %c0_71], %53 {strides = array<i32>} : memref<256x64xf32, #tpu.memory_space<vmem>>, vector<256x64xf32>,
    %55 = vector.extract_strided_slice %38 {offsets = [0, 2, 0], sizes = [16, 16, 32], strides = [1, 1, 1]} : vector<16x18x32xf32> to vector<16x16x32xf32>
    %c0_72 = arith.constant 0 : index
    %c0_73 = arith.constant 0 : index
    %56 = vector.load %arg6[%c0_72, %c0_73] : memref<256x64xf32, #tpu.memory_space<vmem>>, vector<256x64xf32>
    %57 = vector.shape_cast %55 : vector<16x16x32xf32> to vector<256x32xf32>
    %c1_74 = arith.constant 1 : index
    %c2_75 = arith.constant 2 : index
    %c0_76 = arith.constant 0 : index
    %c0_77 = arith.constant 0 : index
    %58 = vector.load %arg2[%c1_74, %c2_75, %c0_76, %c0_77] : memref<3x3x32x64xf32, #tpu.memory_space<vmem>>, vector<1x1x32x64xf32>
    %59 = vector.shape_cast %58 : vector<1x1x32x64xf32> to vector<32x64xf32>
    %cst_78 = arith.constant dense<0.000000e+00> : vector<256x64xf32>
    %60 = tpu.matmul %57, %59, %cst_78 {dimension_numbers = #tpu.dot_dimension_numbers<[1], [0], [0], [1], [0, 0, 1, 1], [], []>} : vector<256x32xf32>, vector<32x64xf32>, vector<256x64xf32> -> vector<256x64xf32>
    %61 = arith.addf %56, %60 : vector<256x64xf32>
    %c0_79 = arith.constant 0 : index
    %c0_80 = arith.constant 0 : index
    %62 = vector.load %arg6[%c0_79, %c0_80] : memref<256x64xf32, #tpu.memory_space<vmem>>, vector<256x64xf32>
    tpu.vector_store %arg6[%c0_79, %c0_80], %61 {strides = array<i32>} : memref<256x64xf32, #tpu.memory_space<vmem>>, vector<256x64xf32>,
    %c2_81 = arith.constant 2 : index
    %c0_82 = arith.constant 0 : index
    %c0_83 = arith.constant 0 : index
    %63 = vector.load %arg5[%c2_81, %c0_82, %c0_83] : memref<18x18x32xf32, #tpu.memory_space<vmem>>, vector<16x18x32xf32>
    %64 = vector.extract_strided_slice %63 {offsets = [0, 0, 0], sizes = [16, 16, 32], strides = [1, 1, 1]} : vector<16x18x32xf32> to vector<16x16x32xf32>
    %c0_84 = arith.constant 0 : index
    %c0_85 = arith.constant 0 : index
    %65 = vector.load %arg6[%c0_84, %c0_85] : memref<256x64xf32, #tpu.memory_space<vmem>>, vector<256x64xf32>
    %66 = vector.shape_cast %64 : vector<16x16x32xf32> to vector<256x32xf32>
    %c2_86 = arith.constant 2 : index
    %c0_87 = arith.constant 0 : index
    %c0_88 = arith.constant 0 : index
    %c0_89 = arith.constant 0 : index
    %67 = vector.load %arg2[%c2_86, %c0_87, %c0_88, %c0_89] : memref<3x3x32x64xf32, #tpu.memory_space<vmem>>, vector<1x1x32x64xf32>
    %68 = vector.shape_cast %67 : vector<1x1x32x64xf32> to vector<32x64xf32>
    %cst_90 = arith.constant dense<0.000000e+00> : vector<256x64xf32>
    %69 = tpu.matmul %66, %68, %cst_90 {dimension_numbers = #tpu.dot_dimension_numbers<[1], [0], [0], [1], [0, 0, 1, 1], [], []>} : vector<256x32xf32>, vector<32x64xf32>, vector<256x64xf32> -> vector<256x64xf32>
    %70 = arith.addf %65, %69 : vector<256x64xf32>
    %c0_91 = arith.constant 0 : index
    %c0_92 = arith.constant 0 : index
    %71 = vector.load %arg6[%c0_91, %c0_92] : memref<256x64xf32, #tpu.memory_space<vmem>>, vector<256x64xf32>
    tpu.vector_store %arg6[%c0_91, %c0_92], %70 {strides = array<i32>} : memref<256x64xf32, #tpu.memory_space<vmem>>, vector<256x64xf32>,
    %72 = vector.extract_strided_slice %63 {offsets = [0, 1, 0], sizes = [16, 16, 32], strides = [1, 1, 1]} : vector<16x18x32xf32> to vector<16x16x32xf32>
    %c0_93 = arith.constant 0 : index
    %c0_94 = arith.constant 0 : index
    %73 = vector.load %arg6[%c0_93, %c0_94] : memref<256x64xf32, #tpu.memory_space<vmem>>, vector<256x64xf32>
    %74 = vector.shape_cast %72 : vector<16x16x32xf32> to vector<256x32xf32>
    %c2_95 = arith.constant 2 : index
    %c1_96 = arith.constant 1 : index
    %c0_97 = arith.constant 0 : index
    %c0_98 = arith.constant 0 : index
    %75 = vector.load %arg2[%c2_95, %c1_96, %c0_97, %c0_98] : memref<3x3x32x64xf32, #tpu.memory_space<vmem>>, vector<1x1x32x64xf32>
    %76 = vector.shape_cast %75 : vector<1x1x32x64xf32> to vector<32x64xf32>
    %cst_99 = arith.constant dense<0.000000e+00> : vector<256x64xf32>
    %77 = tpu.matmul %74, %76, %cst_99 {dimension_numbers = #tpu.dot_dimension_numbers<[1], [0], [0], [1], [0, 0, 1, 1], [], []>} : vector<256x32xf32>, vector<32x64xf32>, vector<256x64xf32> -> vector<256x64xf32>
    %78 = arith.addf %73, %77 : vector<256x64xf32>
    %c0_100 = arith.constant 0 : index
    %c0_101 = arith.constant 0 : index
    %79 = vector.load %arg6[%c0_100, %c0_101] : memref<256x64xf32, #tpu.memory_space<vmem>>, vector<256x64xf32>
    tpu.vector_store %arg6[%c0_100, %c0_101], %78 {strides = array<i32>} : memref<256x64xf32, #tpu.memory_space<vmem>>, vector<256x64xf32>,
    %80 = vector.extract_strided_slice %63 {offsets = [0, 2, 0], sizes = [16, 16, 32], strides = [1, 1, 1]} : vector<16x18x32xf32> to vector<16x16x32xf32>
    %c0_102 = arith.constant 0 : index
    %c0_103 = arith.constant 0 : index
    %81 = vector.load %arg6[%c0_102, %c0_103] : memref<256x64xf32, #tpu.memory_space<vmem>>, vector<256x64xf32>
    %82 = vector.shape_cast %80 : vector<16x16x32xf32> to vector<256x32xf32>
    %c2_104 = arith.constant 2 : index
    %c2_105 = arith.constant 2 : index
    %c0_106 = arith.constant 0 : index
    %c0_107 = arith.constant 0 : index
    %83 = vector.load %arg2[%c2_104, %c2_105, %c0_106, %c0_107] : memref<3x3x32x64xf32, #tpu.memory_space<vmem>>, vector<1x1x32x64xf32>
    %84 = vector.shape_cast %83 : vector<1x1x32x64xf32> to vector<32x64xf32>
    %cst_108 = arith.constant dense<0.000000e+00> : vector<256x64xf32>
    %85 = tpu.matmul %82, %84, %cst_108 {dimension_numbers = #tpu.dot_dimension_numbers<[1], [0], [0], [1], [0, 0, 1, 1], [], []>} : vector<256x32xf32>, vector<32x64xf32>, vector<256x64xf32> -> vector<256x64xf32>
    %86 = arith.addf %81, %85 : vector<256x64xf32>
    %c0_109 = arith.constant 0 : index
    %c0_110 = arith.constant 0 : index
    %87 = vector.load %arg6[%c0_109, %c0_110] : memref<256x64xf32, #tpu.memory_space<vmem>>, vector<256x64xf32>
    tpu.vector_store %arg6[%c0_109, %c0_110], %86 {strides = array<i32>} : memref<256x64xf32, #tpu.memory_space<vmem>>, vector<256x64xf32>,
    %c0_111 = arith.constant 0 : index
    %c0_112 = arith.constant 0 : index
    %88 = vector.load %arg6[%c0_111, %c0_112] : memref<256x64xf32, #tpu.memory_space<vmem>>, vector<256x64xf32>
    %c0_113 = arith.constant 0 : index
    %c0_114 = arith.constant 0 : index
    %89 = vector.load %arg3[%c0_113, %c0_114] : memref<1x64xf32, #tpu.memory_space<vmem>>, vector<1x64xf32>
    %90 = vector.broadcast %89 : vector<1x64xf32> to vector<256x64xf32>
    %91 = arith.addf %88, %90 : vector<256x64xf32>
    %92 = vector.shape_cast %91 : vector<256x64xf32> to vector<16x16x64xf32>
    %c0_115 = arith.constant 0 : index
    %c0_116 = arith.constant 0 : index
    %c0_117 = arith.constant 0 : index
    %c0_118 = arith.constant 0 : index
    %93 = vector.load %arg4[%c0_115, %c0_116, %c0_117, %c0_118] : memref<1x16x16x64xf32, #tpu.memory_space<vmem>>, vector<1x16x16x64xf32>
    %94 = vector.shape_cast %93 : vector<1x16x16x64xf32> to vector<16x16x64xf32>
    %95 = vector.shape_cast %92 : vector<16x16x64xf32> to vector<1x16x16x64xf32>
    tpu.vector_store %arg4[%c0_115, %c0_116, %c0_117, %c0_118], %95 {strides = array<i32>} : memref<1x16x16x64xf32, #tpu.memory_space<vmem>>, vector<1x16x16x64xf32>,
    return
  }
  func.func @transform_0(%arg0: i32) -> (i32, i32, i32, i32) {
    %c0_i32 = arith.constant 0 : i32
    %c0_i32_0 = arith.constant 0 : i32
    %c0_i32_1 = arith.constant 0 : i32
    %c0_i32_2 = arith.constant 0 : i32
    return %arg0, %c0_i32, %c0_i32_0, %c0_i32_1 : i32, i32, i32, i32
  }
  func.func @transform_1(%arg0: i32) -> (i32, i32, i32, i32) {
    %c0_i32 = arith.constant 0 : i32
    %c0_i32_0 = arith.constant 0 : i32
    %c0_i32_1 = arith.constant 0 : i32
    %c0_i32_2 = arith.constant 0 : i32
    %c0_i32_3 = arith.constant 0 : i32
    return %c0_i32, %c0_i32_0, %c0_i32_1, %c0_i32_2 : i32, i32, i32, i32
  }
  func.func @transform_2(%arg0: i32) -> (i32, i32) {
    %c0_i32 = arith.constant 0 : i32
    %c0_i32_0 = arith.constant 0 : i32
    %c0_i32_1 = arith.constant 0 : i32
    return %c0_i32, %c0_i32_0 : i32, i32
  }
  func.func @transform_3(%arg0: i32) -> (i32, i32, i32, i32) {
    %c0_i32 = arith.constant 0 : i32
    %c0_i32_0 = arith.constant 0 : i32
    %c0_i32_1 = arith.constant 0 : i32
    %c0_i32_2 = arith.constant 0 : i32
    return %arg0, %c0_i32, %c0_i32_0, %c0_i32_1 : i32, i32, i32, i32
  }
}

</mosaic_0001>

<llo_original>
// kernel: tpu_custom_call.1
$region0: #{tpu_custom_call.1}
  #allocation0 [shape = 'u32[]', space=smem, size = 0x4, offset = 0x4, fixed_abs, tag = 'smem constant byte address 0x4 - core index']
  #allocation1 [shape = 'u32[144,128]{1,0:T(1,128)}', space=vmem, size = 0x12000, scoped, tag = 'internal scratch']
  #allocation2 [shape = 'f32[18,18,32]{2,1,0:T(8,128)}', space=vmem, size = 0x36000, scoped, tag = 'scratch operand']
  #allocation3 [shape = 'f32[256,64]{1,0:T(8,128)}', space=vmem, size = 0x20000, scoped, tag = 'scratch operand']
  %s0 = inlined_call_operand.hbm [shape: f32[2,16,16,32], index: 0, kind: input, shape index: {}]
  %s1 = inlined_call_operand.hbm [shape: f32[3,3,32,64], index: 1, kind: input, shape index: {}]
  %s2 = inlined_call_operand.vmem [shape: f32[1,64], index: 2, kind: input, shape index: {}]
  %s3 = inlined_call_operand.hbm [shape: f32[2,16,16,64], index: 3, kind: output, shape index: {}]
  %s4 = sld [smem:[#allocation0]]
  $region53: #{tpu_custom_call.1} parent=0
    _
  %s6 = ssub.s32 1, %s4
  %s7 = scalar_select 0, %s6, %s4
  $region1: #{tpu_custom_call.1} parent=0
    #allocation4 [shape = 'u8[262144]{0}', space=vmem, size = 0x40000, scoped, tag = 'input window, operand 0']
    #allocation5 [shape = 's32[2]{0}', space=sflag, size = 0x8, scoped, tag = 'scoped memory for tpu_custom_call.1']
    #allocation6 [shape = 's32[2]{0}', space=sflag, size = 0x8, scoped, tag = 'scoped memory for tpu_custom_call.1']
    #allocation7 [shape = 'u8[147456]{0}', space=vmem, size = 0x24000, scoped, tag = 'input window, operand 1, single buffered']
    #allocation8 [shape = 's32[1]{0}', space=sflag, size = 0x4, scoped, tag = 'scoped memory for tpu_custom_call.1']
    #allocation9 [shape = 'u8[262144]{0}', space=vmem, size = 0x40000, scoped, tag = 'output window, operand 0']
    %8 = vsyncpa [#allocation5], 0
    %s9 = scalar_lea.sflag [#allocation5], 1
    %10 = vsyncpa %s9, 0
    %11 = vsyncpa [#allocation8], 0
    %12 = vsyncpa [#allocation6], 0
    %s13 = scalar_lea.sflag [#allocation6], 1
    %14 = vsyncpa %s13, 0
    loop: start=0, step=1, limit=4
    $region2: #{tpu_custom_call.1} parent=1 // loop_pre_header
      _
    $region3: #{tpu_custom_call.1} parent=1 // loop_header
      %s16 = sphi 0, %s20
      %p17 = scmp.ge.s32.totalorder %s16, 4
      %s26 = sphi 0, %s28
      %s29 = sphi 0, %s26
      %s30 = sphi 0, %s29
      %s46 = sphi 0, %s30
      %s50 = sphi 0, %s50
      %s52 = sphi 0, %s50
      %s53 = sphi 0, %s52
      %s67 = sphi 0, %s53
      %s71 = sphi 0, %s71
      %s73 = sphi 0, %s71
      %s74 = sphi 0, %s73
      %s88 = sphi 0, %s74
      %s94 = sphi 0, %s96
      %s97 = sphi 0, %s94
      %s98 = sphi 0, %s97
      %s114 = sphi 0, %s98
    $region4: #{tpu_custom_call.1} parent=1 // loop_header_branch
      %19 = sbr.rel (%p17) target = $region8
    $region5: #{tpu_custom_call.1} parent=1 // loop_body
      %s21 = ssub.s32 %s16, 1
      %s22 = ssub.s32 %s16, 2
      %s23 = sadd.s32 %s16, 1
      %s24 = ssub.s32 %s16, %s23
      %p25 = scmp.eq.s32.totalorder %s24, 0
      %s27 = sadd.s32 %s26, 1
      %s28 = scalar_select %p25, %s26, %s27
      %p31 = pneg %p25
      %p32 = scmp.eq.s32.totalorder %s16, 1
      %p33 = por %p31, %p32
      %p34 = scmp.ne.s32.totalorder %s26, %s29
      %p35 = scmp.eq.s32.totalorder %s16, 0
      %p36 = por %p34, %p35
      %p37 = scmp.ne.s32.totalorder %s26, %s29
      %p38 = scmp.eq.s32.totalorder %s21, 1
      %p39 = por %p37, %p38
      %p40 = scmp.ne.s32.totalorder %s29, %s30
      %p41 = scmp.eq.s32.totalorder %s21, 0
      %p42 = por %p40, %p41
      %p43 = scmp.ne.s32.totalorder %s29, %s30
      %p44 = scmp.eq.s32.totalorder %s22, 1
      %p45 = por %p43, %p44
      %p47 = scmp.ne.s32.totalorder %s30, %s46
      %p48 = scmp.eq.s32.totalorder %s22, 0
      %p49 = por %p47, %p48
      %s51 = sadd.s32 %s50, 1
      %p54 = scmp.eq.s32.totalorder %s16, 1
      %p55 = scmp.ne.s32.totalorder %s50, %s52
      %p56 = scmp.eq.s32.totalorder %s16, 0
      %p57 = por %p55, %p56
      %p58 = scmp.ne.s32.totalorder %s50, %s52
      %p59 = scmp.eq.s32.totalorder %s21, 1
      %p60 = por %p58, %p59
      %p61 = scmp.ne.s32.totalorder %s52, %s53
      %p62 = scmp.eq.s32.totalorder %s21, 0
      %p63 = por %p61, %p62
      %p64 = scmp.ne.s32.totalorder %s52, %s53
      %p65 = scmp.eq.s32.totalorder %s22, 1
      %p66 = por %p64, %p65
      %p68 = scmp.ne.s32.totalorder %s53, %s67
      %p69 = scmp.eq.s32.totalorder %s22, 0
      %p70 = por %p68, %p69
      %s72 = sadd.s32 %s71, 1
      %p75 = scmp.eq.s32.totalorder %s16, 1
      %p76 = scmp.ne.s32.totalorder %s71, %s73
      %p77 = scmp.eq.s32.totalorder %s16, 0
      %p78 = por %p76, %p77
      %p79 = scmp.ne.s32.totalorder %s71, %s73
      %p80 = scmp.eq.s32.totalorder %s21, 1
      %p81 = por %p79, %p80
      %p82 = scmp.ne.s32.totalorder %s73, %s74
      %p83 = scmp.eq.s32.totalorder %s21, 0
      %p84 = por %p82, %p83
      %p85 = scmp.ne.s32.totalorder %s73, %s74
      %p86 = scmp.eq.s32.totalorder %s22, 1
      %p87 = por %p85, %p86
      %p89 = scmp.ne.s32.totalorder %s74, %s88
      %p90 = scmp.eq.s32.totalorder %s22, 0
      %p91 = por %p89, %p90
      %s92 = ssub.s32 %s16, %s23
      %p93 = scmp.eq.s32.totalorder %s92, 0
      %s95 = sadd.s32 %s94, 1
      %s96 = scalar_select %p93, %s94, %s95
      %p99 = pneg %p93
      %p100 = scmp.eq.s32.totalorder %s16, 1
      %p101 = por %p99, %p100
      %p102 = scmp.ne.s32.totalorder %s94, %s97
      %p103 = scmp.eq.s32.totalorder %s16, 0
      %p104 = por %p102, %p103
      %p105 = scmp.ne.s32.totalorder %s94, %s97
      %p106 = scmp.eq.s32.totalorder %s21, 1
      %p107 = por %p105, %p106
      %p108 = scmp.ne.s32.totalorder %s97, %s98
      %p109 = scmp.eq.s32.totalorder %s21, 0
      %p110 = por %p108, %p109
      %p111 = scmp.ne.s32.totalorder %s97, %s98
      %p112 = scmp.eq.s32.totalorder %s22, 1
      %p113 = por %p111, %p112
      %p115 = scmp.ne.s32.totalorder %s98, %s114
      %p116 = scmp.eq.s32.totalorder %s22, 0
      %p117 = por %p115, %p116
      %p118 = scmp.le.s32.totalorder 1, %s16
      %p119 = scmp.lt.s32.totalorder %s16, 3
      %p120 = pnand %p118, %p119
      %p121 = pneg %p120
      // Predicated region
      $region9: #{tpu_custom_call.1} parent=5 // pred_check
        _
      $region10: #{tpu_custom_call.1} parent=5 // pred_check_branch
        %123 = sbr.rel (%p120) target = $region12
      $region11: #{tpu_custom_call.1} parent=5 // pred_region
        %s124 = ssub.s32 %s16, 1
        // Predicated region
        $region13: #{tpu_custom_call.1} parent=11 // pred_check
          %p125 = pneg %p63
        $region14: #{tpu_custom_call.1} parent=11 // pred_check_branch
          %127 = sbr.rel (%p125) target = $region16
        $region15: #{tpu_custom_call.1} parent=11 // pred_region
          %s129 = ssub.s32 4608, 4608
          %130 = vsyncadd [#allocation8], %s129
          %s131 = sshll.u32 [#allocation7], 4
          %s132 = int_to_ptr.vmem [resolvable:$true] %s131
          %137 = dma.hbm_to_vmem [thread:$0]  %s1, 4608, %s132, [#allocation8], 128, 128, 8
        $region16: #{tpu_custom_call.1} parent=11 // pred_fallthru
          _
        // Predicated region
        $region17: #{tpu_custom_call.1} parent=11 // pred_check
          %p138 = pneg %p84
        $region18: #{tpu_custom_call.1} parent=11 // pred_check_branch
          %140 = sbr.rel (%p138) target = $region20
        $region19: #{tpu_custom_call.1} parent=11 // pred_region
          _
        $region20: #{tpu_custom_call.1} parent=11 // pred_fallthru
          _
      $region12: #{tpu_custom_call.1} parent=5 // pred_fallthru
        _
      %p141 = scmp.lt.s32.totalorder %s16, 2
      // Predicated region
      $region21: #{tpu_custom_call.1} parent=5 // pred_check
        %p142 = pneg %p141
      $region22: #{tpu_custom_call.1} parent=5 // pred_check_branch
        %144 = sbr.rel (%p142) target = $region24
      $region23: #{tpu_custom_call.1} parent=5 // pred_region
        // Predicated region
        $region25: #{tpu_custom_call.1} parent=23 // pred_check
          %p145 = pneg %p36
        $region26: #{tpu_custom_call.1} parent=23 // pred_check_branch
          %147 = sbr.rel (%p145) target = $region28
        $region27: #{tpu_custom_call.1} parent=23 // pred_region
          %s148 = sand.u32 %s26, 1
          %s149 = scalar_lea.sflag [#allocation5], %s148
          %s150 = sand.u32 %s26, 1
          %s151 = smul.addr %s150, 256
          %s152 = scalar_lea.vmem [#allocation4], %s151
          %s154 = ssub.s32 4096, 4096
          %155 = vsyncadd %s149, %s154
          %s156 = smul.addr %s16, 32
          %s157 = smul.addr %s156, 128
          %s158 = scalar_lea.hbm %s0, %s157
          %s159 = sshll.u32 %s152, 4
          %s160 = int_to_ptr.vmem [resolvable:$true] %s159
          %165 = dma.hbm_to_vmem [thread:$0]  %s158, 4096, %s160, %s149, 128, 128, 8
        $region28: #{tpu_custom_call.1} parent=23 // pred_fallthru
          _
      $region24: #{tpu_custom_call.1} parent=5 // pred_fallthru
        _
      %p166 = scmp.le.s32.totalorder 1, %s16
      %p167 = scmp.lt.s32.totalorder %s16, 3
      %p168 = pnand %p166, %p167
      %p169 = pneg %p168
      // Predicated region
      $region29: #{tpu_custom_call.1} parent=5 // pred_check
        _
      $region30: #{tpu_custom_call.1} parent=5 // pred_check_branch
        %171 = sbr.rel (%p168) target = $region32
      $region31: #{tpu_custom_call.1} parent=5 // pred_region
        %s172 = ssub.s32 %s16, 1
        %s173 = sand.u32 %s29, 1
        %s174 = scalar_lea.sflag [#allocation5], %s173
        %s175 = sand.u32 %s29, 1
        %s176 = smul.addr %s175, 256
        %s177 = scalar_lea.vmem [#allocation4], %s176
        // Predicated region
        $region33: #{tpu_custom_call.1} parent=31 // pred_check
          %p178 = pneg %p42
        $region34: #{tpu_custom_call.1} parent=31 // pred_check_branch
          %180 = sbr.rel (%p178) target = $region36
        $region35: #{tpu_custom_call.1} parent=31 // pred_region
          %181 = dma.done %s174, 4096
        $region36: #{tpu_custom_call.1} parent=31 // pred_fallthru
          _
        // Predicated region
        $region37: #{tpu_custom_call.1} parent=31 // pred_check
          %p182 = pneg %p63
        $region38: #{tpu_custom_call.1} parent=31 // pred_check_branch
          %184 = sbr.rel (%p182) target = $region40
        $region39: #{tpu_custom_call.1} parent=31 // pred_region
          %185 = dma.done [#allocation8], 4608
        $region40: #{tpu_custom_call.1} parent=31 // pred_fallthru
          _
        %s186 = sand.u32 %s29, 1
        %s187 = scalar_lea.sflag [#allocation5], %s186
        %s188 = sand.u32 %s29, 1
        %s189 = smul.addr %s188, 256
        %s190 = scalar_lea.vmem [#allocation4], %s189
        %p191 = pneg %p42
        %p192 = pneg %p39
        %p193 = pneg %p63
        %p194 = pneg %p60
        %p195 = pneg %p84
        %p196 = pneg %p81
        %p197 = pneg %p110
        %p198 = pneg %p107
        %s199 = sand.u32 %s97, 1
        %s200 = scalar_lea.sflag [#allocation6], %s199
        %s201 = sand.u32 %s97, 1
        %s202 = smul.addr %s201, 256
        %s203 = scalar_lea.vmem [#allocation9], %s202
        %vm204 = vcmask 261120
        %205 = vst.msk [vmem:[#allocation2] sm:$0xff] %vm204, 0.0
        %206 = vst.msk [vmem:[#allocation2 + $0x8] sm:$0xff] %vm204, 0.0
        %vm207 = vcmask 254976
        %208 = vst.msk [vmem:[#allocation2 + $0x10] sm:$0x3] %vm207, 0.0
        %s209 = scalar_lea.vmem [#allocation2], 408
        %210 = vst.msk [vmem:[%s209] sm:$0xff] %vm204, 0.0
        %211 = vst.msk [vmem:[%s209 + $0x8] sm:$0xff] %vm204, 0.0
        %212 = vst.msk [vmem:[%s209 + $0x10] sm:$0x3] %vm207, 0.0
        %s213 = scalar_lea.vmem [#allocation2], 24
        %vm214 = vcmask 253952
        %215 = vst.msk [vmem:[%s213] sm:$0x1] %vm214, 0.0
        %216 = vst.msk [vmem:[%s213 + $0x18] sm:$0x1] %vm214, 0.0
        %217 = vst.msk [vmem:[%s213 + $0x30] sm:$0x1] %vm214, 0.0
        %218 = vst.msk [vmem:[%s213 + $0x48] sm:$0x1] %vm214, 0.0
        %219 = vst.msk [vmem:[%s213 + $0x60] sm:$0x1] %vm214, 0.0
        %220 = vst.msk [vmem:[%s213 + $0x78] sm:$0x1] %vm214, 0.0
        %221 = vst.msk [vmem:[%s213 + $0x90] sm:$0x1] %vm214, 0.0
        %222 = vst.msk [vmem:[%s213 + $0xa8] sm:$0x1] %vm214, 0.0
        %223 = vst.msk [vmem:[%s213 + $0xc0] sm:$0x1] %vm214, 0.0
        %224 = vst.msk [vmem:[%s213 + $0xd8] sm:$0x1] %vm214, 0.0
        %225 = vst.msk [vmem:[%s213 + $0xf0] sm:$0x1] %vm214, 0.0
        %226 = vst.msk [vmem:[%s213 + $0x108] sm:$0x1] %vm214, 0.0
        %227 = vst.msk [vmem:[%s213 + $0x120] sm:$0x1] %vm214, 0.0
        %228 = vst.msk [vmem:[%s213 + $0x138] sm:$0x1] %vm214, 0.0
        %229 = vst.msk [vmem:[%s213 + $0x150] sm:$0x1] %vm214, 0.0
        %230 = vst.msk [vmem:[%s213 + $0x168] sm:$0x1] %vm214, 0.0
        %231 = vst.msk [vmem:[%s213 + $0x11] sm:$0x1] %vm214, 0.0
        %232 = vst.msk [vmem:[%s213 + $0x29] sm:$0x1] %vm214, 0.0
        %233 = vst.msk [vmem:[%s213 + $0x41] sm:$0x1] %vm214, 0.0
        %234 = vst.msk [vmem:[%s213 + $0x59] sm:$0x1] %vm214, 0.0
        %235 = vst.msk [vmem:[%s213 + $0x71] sm:$0x1] %vm214, 0.0
        %236 = vst.msk [vmem:[%s213 + $0x89] sm:$0x1] %vm214, 0.0
        %237 = vst.msk [vmem:[%s213 + $0xa1] sm:$0x1] %vm214, 0.0
        %238 = vst.msk [vmem:[%s213 + $0xb9] sm:$0x1] %vm214, 0.0
        %239 = vst.msk [vmem:[%s213 + $0xd1] sm:$0x1] %vm214, 0.0
        %240 = vst.msk [vmem:[%s213 + $0xe9] sm:$0x1] %vm214, 0.0
        %241 = vst.msk [vmem:[%s213 + $0x101] sm:$0x1] %vm214, 0.0
        %242 = vst.msk [vmem:[%s213 + $0x119] sm:$0x1] %vm214, 0.0
        %243 = vst.msk [vmem:[%s213 + $0x131] sm:$0x1] %vm214, 0.0
        %244 = vst.msk [vmem:[%s213 + $0x149] sm:$0x1] %vm214, 0.0
        %245 = vst.msk [vmem:[%s213 + $0x161] sm:$0x1] %vm214, 0.0
        %246 = vst.msk [vmem:[%s213 + $0x179] sm:$0x1] %vm214, 0.0
        %v247 = vld [vmem:[%s177] sm:$0xff]
        %v248 = vld [vmem:[%s177 + $0x8] sm:$0xff]
        %v249 = vld [vmem:[%s177 + $0x10] sm:$0xff]
        %v250 = vld [vmem:[%s177 + $0x18] sm:$0xff]
        %v251 = vld [vmem:[%s177 + $0x20] sm:$0xff]
        %v252 = vld [vmem:[%s177 + $0x28] sm:$0xff]
        %v253 = vld [vmem:[%s177 + $0x30] sm:$0xff]
        %v254 = vld [vmem:[%s177 + $0x38] sm:$0xff]
        %v255 = vld [vmem:[%s177 + $0x40] sm:$0xff]
        %v256 = vld [vmem:[%s177 + $0x48] sm:$0xff]
        %v257 = vld [vmem:[%s177 + $0x50] sm:$0xff]
        %v258 = vld [vmem:[%s177 + $0x58] sm:$0xff]
        %v259 = vld [vmem:[%s177 + $0x60] sm:$0xff]
        %v260 = vld [vmem:[%s177 + $0x68] sm:$0xff]
        %v261 = vld [vmem:[%s177 + $0x70] sm:$0xff]
        %v262 = vld [vmem:[%s177 + $0x78] sm:$0xff]
        %v263 = vld [vmem:[%s177 + $0x80] sm:$0xff]
        %v264 = vld [vmem:[%s177 + $0x88] sm:$0xff]
        %v265 = vld [vmem:[%s177 + $0x90] sm:$0xff]
        %v266 = vld [vmem:[%s177 + $0x98] sm:$0xff]
        %v267 = vld [vmem:[%s177 + $0xa0] sm:$0xff]
        %v268 = vld [vmem:[%s177 + $0xa8] sm:$0xff]
        %v269 = vld [vmem:[%s177 + $0xb0] sm:$0xff]
        %v270 = vld [vmem:[%s177 + $0xb8] sm:$0xff]
        %v271 = vld [vmem:[%s177 + $0xc0] sm:$0xff]
        %v272 = vld [vmem:[%s177 + $0xc8] sm:$0xff]
        %v273 = vld [vmem:[%s177 + $0xd0] sm:$0xff]
        %v274 = vld [vmem:[%s177 + $0xd8] sm:$0xff]
        %v275 = vld [vmem:[%s177 + $0xe0] sm:$0xff]
        %v276 = vld [vmem:[%s177 + $0xe8] sm:$0xff]
        %v277 = vld [vmem:[%s177 + $0xf0] sm:$0xff]
        %v278 = vld [vmem:[%s177 + $0xf8] sm:$0xff]
        %279 = vst.msk [vmem:[%s213 + $0x1] sm:$0xff] %vm204, %v247
        %280 = vst.msk [vmem:[%s213 + $0x9] sm:$0xff] %vm204, %v248
        %281 = vst.msk [vmem:[%s213 + $0x19] sm:$0xff] %vm204, %v249
        %282 = vst.msk [vmem:[%s213 + $0x21] sm:$0xff] %vm204, %v250
        %283 = vst.msk [vmem:[%s213 + $0x31] sm:$0xff] %vm204, %v251
        %284 = vst.msk [vmem:[%s213 + $0x39] sm:$0xff] %vm204, %v252
        %285 = vst.msk [vmem:[%s213 + $0x49] sm:$0xff] %vm204, %v253
        %286 = vst.msk [vmem:[%s213 + $0x51] sm:$0xff] %vm204, %v254
        %287 = vst.msk [vmem:[%s213 + $0x61] sm:$0xff] %vm204, %v255
        %288 = vst.msk [vmem:[%s213 + $0x69] sm:$0xff] %vm204, %v256
        %289 = vst.msk [vmem:[%s213 + $0x79] sm:$0xff] %vm204, %v257
        %290 = vst.msk [vmem:[%s213 + $0x81] sm:$0xff] %vm204, %v258
        %291 = vst.msk [vmem:[%s213 + $0x91] sm:$0xff] %vm204, %v259
        %292 = vst.msk [vmem:[%s213 + $0x99] sm:$0xff] %vm204, %v260
        %293 = vst.msk [vmem:[%s213 + $0xa9] sm:$0xff] %vm204, %v261
        %294 = vst.msk [vmem:[%s213 + $0xb1] sm:$0xff] %vm204, %v262
        %295 = vst.msk [vmem:[%s213 + $0xc1] sm:$0xff] %vm204, %v263
        %296 = vst.msk [vmem:[%s213 + $0xc9] sm:$0xff] %vm204, %v264
        %297 = vst.msk [vmem:[%s213 + $0xd9] sm:$0xff] %vm204, %v265
        %298 = vst.msk [vmem:[%s213 + $0xe1] sm:$0xff] %vm204, %v266
        %299 = vst.msk [vmem:[%s213 + $0xf1] sm:$0xff] %vm204, %v267
        %300 = vst.msk [vmem:[%s213 + $0xf9] sm:$0xff] %vm204, %v268
        %301 = vst.msk [vmem:[%s213 + $0x109] sm:$0xff] %vm204, %v269
        %302 = vst.msk [vmem:[%s213 + $0x111] sm:$0xff] %vm204, %v270
        %303 = vst.msk [vmem:[%s213 + $0x121] sm:$0xff] %vm204, %v271
        %304 = vst.msk [vmem:[%s213 + $0x129] sm:$0xff] %vm204, %v272
        %305 = vst.msk [vmem:[%s213 + $0x139] sm:$0xff] %vm204, %v273
        %306 = vst.msk [vmem:[%s213 + $0x141] sm:$0xff] %vm204, %v274
        %307 = vst.msk [vmem:[%s213 + $0x151] sm:$0xff] %vm204, %v275
        %308 = vst.msk [vmem:[%s213 + $0x159] sm:$0xff] %vm204, %v276
        %309 = vst.msk [vmem:[%s213 + $0x169] sm:$0xff] %vm204, %v277
        %310 = vst.msk [vmem:[%s213 + $0x171] sm:$0xff] %vm204, %v278
        %vm311 = vcmask 523264
        %312 = vst.msk [vmem:[#allocation3] sm:$0xff] %vm311, 0.0
        %313 = vst.msk [vmem:[#allocation3 + $0x8] sm:$0xff] %vm311, 0.0
        %314 = vst.msk [vmem:[#allocation3 + $0x10] sm:$0xff] %vm311, 0.0
        %315 = vst.msk [vmem:[#allocation3 + $0x18] sm:$0xff] %vm311, 0.0
        %316 = vst.msk [vmem:[#allocation3 + $0x20] sm:$0xff] %vm311, 0.0
        %317 = vst.msk [vmem:[#allocation3 + $0x28] sm:$0xff] %vm311, 0.0
        %318 = vst.msk [vmem:[#allocation3 + $0x30] sm:$0xff] %vm311, 0.0
        %319 = vst.msk [vmem:[#allocation3 + $0x38] sm:$0xff] %vm311, 0.0
        %320 = vst.msk [vmem:[#allocation3 + $0x40] sm:$0xff] %vm311, 0.0
        %321 = vst.msk [vmem:[#allocation3 + $0x48] sm:$0xff] %vm311, 0.0
        %322 = vst.msk [vmem:[#allocation3 + $0x50] sm:$0xff] %vm311, 0.0
        %323 = vst.msk [vmem:[#allocation3 + $0x58] sm:$0xff] %vm311, 0.0
        %324 = vst.msk [vmem:[#allocation3 + $0x60] sm:$0xff] %vm311, 0.0
        %325 = vst.msk [vmem:[#allocation3 + $0x68] sm:$0xff] %vm311, 0.0
        %326 = vst.msk [vmem:[#allocation3 + $0x70] sm:$0xff] %vm311, 0.0
        %327 = vst.msk [vmem:[#allocation3 + $0x78] sm:$0xff] %vm311, 0.0
        %328 = vst.msk [vmem:[#allocation3 + $0x80] sm:$0xff] %vm311, 0.0
        %329 = vst.msk [vmem:[#allocation3 + $0x88] sm:$0xff] %vm311, 0.0
        %330 = vst.msk [vmem:[#allocation3 + $0x90] sm:$0xff] %vm311, 0.0
        %331 = vst.msk [vmem:[#allocation3 + $0x98] sm:$0xff] %vm311, 0.0
        %332 = vst.msk [vmem:[#allocation3 + $0xa0] sm:$0xff] %vm311, 0.0
        %333 = vst.msk [vmem:[#allocation3 + $0xa8] sm:$0xff] %vm311, 0.0
        %334 = vst.msk [vmem:[#allocation3 + $0xb0] sm:$0xff] %vm311, 0.0
        %335 = vst.msk [vmem:[#allocation3 + $0xb8] sm:$0xff] %vm311, 0.0
        %336 = vst.msk [vmem:[#allocation3 + $0xc0] sm:$0xff] %vm311, 0.0
        %337 = vst.msk [vmem:[#allocation3 + $0xc8] sm:$0xff] %vm311, 0.0
        %338 = vst.msk [vmem:[#allocation3 + $0xd0] sm:$0xff] %vm311, 0.0
        %339 = vst.msk [vmem:[#allocation3 + $0xd8] sm:$0xff] %vm311, 0.0
        %340 = vst.msk [vmem:[#allocation3 + $0xe0] sm:$0xff] %vm311, 0.0
        %341 = vst.msk [vmem:[#allocation3 + $0xe8] sm:$0xff] %vm311, 0.0
        %342 = vst.msk [vmem:[#allocation3 + $0xf0] sm:$0xff] %vm311, 0.0
        %343 = vst.msk [vmem:[#allocation3 + $0xf8] sm:$0xff] %vm311, 0.0
        %v344 = vld [vmem:[#allocation2] sm:$0xff]
        %v345 = vld [vmem:[#allocation2 + $0x8] sm:$0xff]
        %v346 = vld [vmem:[#allocation2 + $0x10] sm:$0x3]
        %v347 = vld [vmem:[#allocation2 + $0x18] sm:$0xff]
        %v348 = vld [vmem:[#allocation2 + $0x20] sm:$0xff]
        %v349 = vld [vmem:[#allocation2 + $0x28] sm:$0x3]
        %v350 = vld [vmem:[#allocation2 + $0x30] sm:$0xff]
        %v351 = vld [vmem:[#allocation2 + $0x38] sm:$0xff]
        %v352 = vld [vmem:[#allocation2 + $0x40] sm:$0x3]
        %v353 = vld [vmem:[#allocation2 + $0x48] sm:$0xff]
        %v354 = vld [vmem:[#allocation2 + $0x50] sm:$0xff]
        %v355 = vld [vmem:[#allocation2 + $0x58] sm:$0x3]
        %v356 = vld [vmem:[#allocation2 + $0x60] sm:$0xff]
        %v357 = vld [vmem:[#allocation2 + $0x68] sm:$0xff]
        %v358 = vld [vmem:[#allocation2 + $0x70] sm:$0x3]
        %v359 = vld [vmem:[#allocation2 + $0x78] sm:$0xff]
        %v360 = vld [vmem:[#allocation2 + $0x80] sm:$0xff]
        %v361 = vld [vmem:[#allocation2 + $0x88] sm:$0x3]
        %v362 = vld [vmem:[#allocation2 + $0x90] sm:$0xff]
        %v363 = vld [vmem:[#allocation2 + $0x98] sm:$0xff]
        %v364 = vld [vmem:[#allocation2 + $0xa0] sm:$0x3]
        %v365 = vld [vmem:[#allocation2 + $0xa8] sm:$0xff]
        %v366 = vld [vmem:[#allocation2 + $0xb0] sm:$0xff]
        %v367 = vld [vmem:[#allocation2 + $0xb8] sm:$0x3]
        %v368 = vld [vmem:[#allocation2 + $0xc0] sm:$0xff]
        %v369 = vld [vmem:[#allocation2 + $0xc8] sm:$0xff]
        %v370 = vld [vmem:[#allocation2 + $0xd0] sm:$0x3]
        %v371 = vld [vmem:[#allocation2 + $0xd8] sm:$0xff]
        %v372 = vld [vmem:[#allocation2 + $0xe0] sm:$0xff]
        %v373 = vld [vmem:[#allocation2 + $0xe8] sm:$0x3]
        %v374 = vld [vmem:[#allocation2 + $0xf0] sm:$0xff]
        %v375 = vld [vmem:[#allocation2 + $0xf8] sm:$0xff]
        %v376 = vld [vmem:[#allocation2 + $0x100] sm:$0x3]
        %v377 = vld [vmem:[#allocation2 + $0x108] sm:$0xff]
        %v378 = vld [vmem:[#allocation2 + $0x110] sm:$0xff]
        %v379 = vld [vmem:[#allocation2 + $0x118] sm:$0x3]
        %v380 = vld [vmem:[#allocation2 + $0x120] sm:$0xff]
        %v381 = vld [vmem:[#allocation2 + $0x128] sm:$0xff]
        %v382 = vld [vmem:[#allocation2 + $0x130] sm:$0x3]
        %v383 = vld [vmem:[#allocation2 + $0x138] sm:$0xff]
        %v384 = vld [vmem:[#allocation2 + $0x140] sm:$0xff]
        %v385 = vld [vmem:[#allocation2 + $0x148] sm:$0x3]
        %v386 = vld [vmem:[#allocation2 + $0x150] sm:$0xff]
        %v387 = vld [vmem:[#allocation2 + $0x158] sm:$0xff]
        %v388 = vld [vmem:[#allocation2 + $0x160] sm:$0x3]
        %v389 = vld [vmem:[#allocation2 + $0x168] sm:$0xff]
        %v390 = vld [vmem:[#allocation2 + $0x170] sm:$0xff]
        %v391 = vld [vmem:[#allocation2 + $0x178] sm:$0x3]
        %v392 = vld [vmem:[#allocation3] sm:$0xff]
        %v393 = vld [vmem:[#allocation3 + $0x8] sm:$0xff]
        %v394 = vld [vmem:[#allocation3 + $0x10] sm:$0xff]
        %v395 = vld [vmem:[#allocation3 + $0x18] sm:$0xff]
        %v396 = vld [vmem:[#allocation3 + $0x20] sm:$0xff]
        %v397 = vld [vmem:[#allocation3 + $0x28] sm:$0xff]
        %v398 = vld [vmem:[#allocation3 + $0x30] sm:$0xff]
        %v399 = vld [vmem:[#allocation3 + $0x38] sm:$0xff]
        %v400 = vld [vmem:[#allocation3 + $0x40] sm:$0xff]
        %v401 = vld [vmem:[#allocation3 + $0x48] sm:$0xff]
        %v402 = vld [vmem:[#allocation3 + $0x50] sm:$0xff]
        %v403 = vld [vmem:[#allocation3 + $0x58] sm:$0xff]
        %v404 = vld [vmem:[#allocation3 + $0x60] sm:$0xff]
        %v405 = vld [vmem:[#allocation3 + $0x68] sm:$0xff]
        %v406 = vld [vmem:[#allocation3 + $0x70] sm:$0xff]
        %v407 = vld [vmem:[#allocation3 + $0x78] sm:$0xff]
        %v408 = vld [vmem:[#allocation3 + $0x80] sm:$0xff]
        %v409 = vld [vmem:[#allocation3 + $0x88] sm:$0xff]
        %v410 = vld [vmem:[#allocation3 + $0x90] sm:$0xff]
        %v411 = vld [vmem:[#allocation3 + $0x98] sm:$0xff]
        %v412 = vld [vmem:[#allocation3 + $0xa0] sm:$0xff]
        %v413 = vld [vmem:[#allocation3 + $0xa8] sm:$0xff]
        %v414 = vld [vmem:[#allocation3 + $0xb0] sm:$0xff]
        %v415 = vld [vmem:[#allocation3 + $0xb8] sm:$0xff]
        %v416 = vld [vmem:[#allocation3 + $0xc0] sm:$0xff]
        %v417 = vld [vmem:[#allocation3 + $0xc8] sm:$0xff]
        %v418 = vld [vmem:[#allocation3 + $0xd0] sm:$0xff]
        %v419 = vld [vmem:[#allocation3 + $0xd8] sm:$0xff]
        %v420 = vld [vmem:[#allocation3 + $0xe0] sm:$0xff]
        %v421 = vld [vmem:[#allocation3 + $0xe8] sm:$0xff]
        %v422 = vld [vmem:[#allocation3 + $0xf0] sm:$0xff]
        %v423 = vld [vmem:[#allocation3 + $0xf8] sm:$0xff]
        %v424 = vld [vmem:[#allocation7] sm:$0xff]
        %v425 = vld [vmem:[#allocation7 + $0x8] sm:$0xff]
        %v426 = vld [vmem:[#allocation7 + $0x10] sm:$0xff]
        %v427 = vld [vmem:[#allocation7 + $0x18] sm:$0xff]
        %v429 = vsel %vm204, %v344, 0
        %v432 = vsel %vm204, %v345, 0
        %v435 = vsel %vm204, %v347, 0
        %v438 = vsel %vm204, %v348, 0
        %v441 = vsel %vm204, %v350, 0
        %v444 = vsel %vm204, %v351, 0
        %v447 = vsel %vm204, %v353, 0
        %v450 = vsel %vm204, %v354, 0
        %v453 = vsel %vm204, %v356, 0
        %v456 = vsel %vm204, %v357, 0
        %v459 = vsel %vm204, %v359, 0
        %v462 = vsel %vm204, %v360, 0
        %v465 = vsel %vm204, %v362, 0
        %v468 = vsel %vm204, %v363, 0
        %v471 = vsel %vm204, %v365, 0
        %v474 = vsel %vm204, %v366, 0
        %v477 = vsel %vm204, %v368, 0
        %v480 = vsel %vm204, %v369, 0
        %v483 = vsel %vm204, %v371, 0
        %v486 = vsel %vm204, %v372, 0
        %v489 = vsel %vm204, %v374, 0
        %v492 = vsel %vm204, %v375, 0
        %v495 = vsel %vm204, %v377, 0
        %v498 = vsel %vm204, %v378, 0
        %v501 = vsel %vm204, %v380, 0
        %v504 = vsel %vm204, %v381, 0
        %v507 = vsel %vm204, %v383, 0
        %v510 = vsel %vm204, %v384, 0
        %v513 = vsel %vm204, %v386, 0
        %v516 = vsel %vm204, %v387, 0
        %v519 = vsel %vm204, %v389, 0
        %v522 = vsel %vm204, %v390, 0
        %524 = vmatprep.subr.mxu0 0.0
        %525 = vmatpush1.msra.mxu0 0.0
        %526 = vmatprep.subr.mxu0 0.0
        %527 = vmatpush1.msra.mxu0 0.0
        %528 = vmatprep.subr.mxu0 0.0
        %529 = vmatpush1.msra.mxu0 0.0
        %530 = vmatprep.subr.mxu0 0.0
        %531 = vmatpush1.msra.mxu0 0.0
        %532 = vmatprep.subr.mxu0 0.0
        %533 = vmatpush1.msra.mxu0 0.0
        %534 = vmatprep.subr.mxu0 0.0
        %535 = vmatpush1.msra.mxu0 0.0
        %536 = vmatprep.subr.mxu0 0.0
        %537 = vmatpush1.msra.mxu0 0.0
        %538 = vmatprep.subr.mxu0 0.0
        %539 = vmatpush1.msra.mxu0 0.0
        %540 = vmatprep.subr.mxu0 0.0
        %541 = vmatpush1.msra.mxu0 0.0
        %542 = vmatprep.subr.mxu0 0.0
        %543 = vmatpush1.msra.mxu0 0.0
        %544 = vmatprep.subr.mxu0 0.0
        %545 = vmatpush1.msra.mxu0 0.0
        %546 = vmatprep.subr.mxu0 0.0
        %547 = vmatpush1.msra.mxu0 0.0
        %548 = vmatprep.subr.mxu0 0.0
        %549 = vmatpush1.msra.mxu0 %v427
        %550 = vmatprep.subr.mxu0 0.0
        %551 = vmatpush1.msra.mxu0 %v426
        %552 = vmatprep.subr.mxu0 0.0
        %553 = vmatpush1.msra.mxu0 %v425
        %554 = vmatprep.subr.mxu0 0.0
        %555 = vmatpush1.msra.mxu0 %v424
        %556 = vmatprep.subr.mxu0 0.0
        %557 = vmatpush2.msra.mxu0 0.0
        %558 = vmatprep.subr.mxu0 0.0
        %559 = vmatpush2.msra.mxu0 0.0
        %560 = vmatprep.subr.mxu0 0.0
        %561 = vmatpush2.msra.mxu0 0.0
        %562 = vmatprep.subr.mxu0 0.0
        %563 = vmatpush2.msra.mxu0 0.0
        %564 = vmatprep.subr.mxu0 0.0
        %565 = vmatpush2.msra.mxu0 0.0
        %566 = vmatprep.subr.mxu0 0.0
        %567 = vmatpush2.msra.mxu0 0.0
        %568 = vmatprep.subr.mxu0 0.0
        %569 = vmatpush2.msra.mxu0 0.0
        %570 = vmatprep.subr.mxu0 0.0
        %571 = vmatpush2.msra.mxu0 0.0
        %572 = vmatprep.subr.mxu0 0.0
        %573 = vmatpush2.msra.mxu0 0.0
        %574 = vmatprep.subr.mxu0 0.0
        %575 = vmatpush2.msra.mxu0 0.0
        %576 = vmatprep.subr.mxu0 0.0
        %577 = vmatpush2.msra.mxu0 0.0
        %578 = vmatprep.subr.mxu0 0.0
        %579 = vmatpush2.msra.mxu0 0.0
        %580 = vmatprep.subr.mxu0 0.0
        %581 = vmatpush2.msra.mxu0 0.0
        %582 = vmatprep.subr.mxu0 0.0
        %583 = vmatpush2.msra.mxu0 0.0
        %584 = vmatprep.subr.mxu0 0.0
        %585 = vmatpush2.msra.mxu0 0.0
        %586 = vmatprep.subr.mxu0 0.0
        %587 = vmatpush2.msra.mxu0 0.0
        %588 = vmatprep.mubr.f32.mxu0 0.0
        %589 = vmatmul.mubr.f32.gmra.mxu0 %v429
        %v590 = vpop.f32.mrf.mxu0
        %v591 = vadd.f32 0.0, %v590
        %v592 = vpop.f32.mrf.mxu0
        %593 = vmatprep.mubr.f32.mxu0 0.0
        %594 = vmatmul.mubr.f32.gmra.mxu0 %v432
        %v595 = vpop.f32.mrf.mxu0
        %v596 = vadd.f32 0.0, %v595
        %v597 = vpop.f32.mrf.mxu0
        %598 = vmatprep.mubr.f32.mxu0 0.0
        %599 = vmatmul.mubr.f32.gmra.mxu0 %v435
        %v600 = vpop.f32.mrf.mxu0
        %v601 = vadd.f32 0.0, %v600
        %v602 = vpop.f32.mrf.mxu0
        %603 = vmatprep.mubr.f32.mxu0 0.0
        %604 = vmatmul.mubr.f32.gmra.mxu0 %v438
        %v605 = vpop.f32.mrf.mxu0
        %v606 = vadd.f32 0.0, %v605
        %v607 = vpop.f32.mrf.mxu0
        %608 = vmatprep.mubr.f32.mxu0 0.0
        %609 = vmatmul.mubr.f32.gmra.mxu0 %v441
        %v610 = vpop.f32.mrf.mxu0
        %v611 = vadd.f32 0.0, %v610
        %v612 = vpop.f32.mrf.mxu0
        %613 = vmatprep.mubr.f32.mxu0 0.0
        %614 = vmatmul.mubr.f32.gmra.mxu0 %v444
        %v615 = vpop.f32.mrf.mxu0
        %v616 = vadd.f32 0.0, %v615
        %v617 = vpop.f32.mrf.mxu0
        %618 = vmatprep.mubr.f32.mxu0 0.0
        %619 = vmatmul.mubr.f32.gmra.mxu0 %v447
        %v620 = vpop.f32.mrf.mxu0
        %v621 = vadd.f32 0.0, %v620
        %v622 = vpop.f32.mrf.mxu0
        %623 = vmatprep.mubr.f32.mxu0 0.0
        %624 = vmatmul.mubr.f32.gmra.mxu0 %v450
        %v625 = vpop.f32.mrf.mxu0
        %v626 = vadd.f32 0.0, %v625
        %v627 = vpop.f32.mrf.mxu0
        %628 = vmatprep.mubr.f32.mxu0 0.0
        %629 = vmatmul.mubr.f32.gmra.mxu0 %v453
        %v630 = vpop.f32.mrf.mxu0
        %v631 = vadd.f32 0.0, %v630
        %v632 = vpop.f32.mrf.mxu0
        %633 = vmatprep.mubr.f32.mxu0 0.0
        %634 = vmatmul.mubr.f32.gmra.mxu0 %v456
        %v635 = vpop.f32.mrf.mxu0
        %v636 = vadd.f32 0.0, %v635
        %v637 = vpop.f32.mrf.mxu0
        %638 = vmatprep.mubr.f32.mxu0 0.0
        %639 = vmatmul.mubr.f32.gmra.mxu0 %v459
        %v640 = vpop.f32.mrf.mxu0
        %v641 = vadd.f32 0.0, %v640
        %v642 = vpop.f32.mrf.mxu0
        %643 = vmatprep.mubr.f32.mxu0 0.0
        %644 = vmatmul.mubr.f32.gmra.mxu0 %v462
        %v645 = vpop.f32.mrf.mxu0
        %v646 = vadd.f32 0.0, %v645
        %v647 = vpop.f32.mrf.mxu0
        %648 = vmatprep.mubr.f32.mxu0 0.0
        %649 = vmatmul.mubr.f32.gmra.mxu0 %v465
        %v650 = vpop.f32.mrf.mxu0
        %v651 = vadd.f32 0.0, %v650
        %v652 = vpop.f32.mrf.mxu0
        %653 = vmatprep.mubr.f32.mxu0 0.0
        %654 = vmatmul.mubr.f32.gmra.mxu0 %v468
        %v655 = vpop.f32.mrf.mxu0
        %v656 = vadd.f32 0.0, %v655
        %v657 = vpop.f32.mrf.mxu0
        %658 = vmatprep.mubr.f32.mxu0 0.0
        %659 = vmatmul.mubr.f32.gmra.mxu0 %v471
        %v660 = vpop.f32.mrf.mxu0
        %v661 = vadd.f32 0.0, %v660
        %v662 = vpop.f32.mrf.mxu0
        %663 = vmatprep.mubr.f32.mxu0 0.0
        %664 = vmatmul.mubr.f32.gmra.mxu0 %v474
        %v665 = vpop.f32.mrf.mxu0
        %v666 = vadd.f32 0.0, %v665
        %v667 = vpop.f32.mrf.mxu0
        %668 = vmatprep.mubr.f32.mxu0 0.0
        %669 = vmatmul.mubr.f32.gmra.mxu0 %v477
        %v670 = vpop.f32.mrf.mxu0
        %v671 = vadd.f32 0.0, %v670
        %v672 = vpop.f32.mrf.mxu0
        %673 = vmatprep.mubr.f32.mxu0 0.0
        %674 = vmatmul.mubr.f32.gmra.mxu0 %v480
        %v675 = vpop.f32.mrf.mxu0
        %v676 = vadd.f32 0.0, %v675
        %v677 = vpop.f32.mrf.mxu0
        %678 = vmatprep.mubr.f32.mxu0 0.0
        %679 = vmatmul.mubr.f32.gmra.mxu0 %v483
        %v680 = vpop.f32.mrf.mxu0
        %v681 = vadd.f32 0.0, %v680
        %v682 = vpop.f32.mrf.mxu0
        %683 = vmatprep.mubr.f32.mxu0 0.0
        %684 = vmatmul.mubr.f32.gmra.mxu0 %v486
        %v685 = vpop.f32.mrf.mxu0
        %v686 = vadd.f32 0.0, %v685
        %v687 = vpop.f32.mrf.mxu0
        %688 = vmatprep.mubr.f32.mxu0 0.0
        %689 = vmatmul.mubr.f32.gmra.mxu0 %v489
        %v690 = vpop.f32.mrf.mxu0
        %v691 = vadd.f32 0.0, %v690
        %v692 = vpop.f32.mrf.mxu0
        %693 = vmatprep.mubr.f32.mxu0 0.0
        %694 = vmatmul.mubr.f32.gmra.mxu0 %v492
        %v695 = vpop.f32.mrf.mxu0
        %v696 = vadd.f32 0.0, %v695
        %v697 = vpop.f32.mrf.mxu0
        %698 = vmatprep.mubr.f32.mxu0 0.0
        %699 = vmatmul.mubr.f32.gmra.mxu0 %v495
        %v700 = vpop.f32.mrf.mxu0
        %v701 = vadd.f32 0.0, %v700
        %v702 = vpop.f32.mrf.mxu0
        %703 = vmatprep.mubr.f32.mxu0 0.0
        %704 = vmatmul.mubr.f32.gmra.mxu0 %v498
        %v705 = vpop.f32.mrf.mxu0
        %v706 = vadd.f32 0.0, %v705
        %v707 = vpop.f32.mrf.mxu0
        %708 = vmatprep.mubr.f32.mxu0 0.0
        %709 = vmatmul.mubr.f32.gmra.mxu0 %v501
        %v710 = vpop.f32.mrf.mxu0
        %v711 = vadd.f32 0.0, %v710
        %v712 = vpop.f32.mrf.mxu0
        %713 = vmatprep.mubr.f32.mxu0 0.0
        %714 = vmatmul.mubr.f32.gmra.mxu0 %v504
        %v715 = vpop.f32.mrf.mxu0
        %v716 = vadd.f32 0.0, %v715
        %v717 = vpop.f32.mrf.mxu0
        %718 = vmatprep.mubr.f32.mxu0 0.0
        %719 = vmatmul.mubr.f32.gmra.mxu0 %v507
        %v720 = vpop.f32.mrf.mxu0
        %v721 = vadd.f32 0.0, %v720
        %v722 = vpop.f32.mrf.mxu0
        %723 = vmatprep.mubr.f32.mxu0 0.0
        %724 = vmatmul.mubr.f32.gmra.mxu0 %v510
        %v725 = vpop.f32.mrf.mxu0
        %v726 = vadd.f32 0.0, %v725
        %v727 = vpop.f32.mrf.mxu0
        %728 = vmatprep.mubr.f32.mxu0 0.0
        %729 = vmatmul.mubr.f32.gmra.mxu0 %v513
        %v730 = vpop.f32.mrf.mxu0
        %v731 = vadd.f32 0.0, %v730
        %v732 = vpop.f32.mrf.mxu0
        %733 = vmatprep.mubr.f32.mxu0 0.0
        %734 = vmatmul.mubr.f32.gmra.mxu0 %v516
        %v735 = vpop.f32.mrf.mxu0
        %v736 = vadd.f32 0.0, %v735
        %v737 = vpop.f32.mrf.mxu0
        %738 = vmatprep.mubr.f32.mxu0 0.0
        %739 = vmatmul.mubr.f32.gmra.mxu0 %v519
        %v740 = vpop.f32.mrf.mxu0
        %v741 = vadd.f32 0.0, %v740
        %v742 = vpop.f32.mrf.mxu0
        %743 = vmatprep.mubr.f32.mxu0 0.0
        %744 = vmatmul.mubr.f32.gmra.mxu0 %v522
        %v745 = vpop.f32.mrf.mxu0
        %v746 = vadd.f32 0.0, %v745
        %v747 = vpop.f32.mrf.mxu0
        %748 = vdwg.mxu0
        %v749 = vadd.f32 %v392, %v591
        %v750 = vadd.f32 %v393, %v596
        %v751 = vadd.f32 %v394, %v601
        %v752 = vadd.f32 %v395, %v606
        %v753 = vadd.f32 %v396, %v611
        %v754 = vadd.f32 %v397, %v616
        %v755 = vadd.f32 %v398, %v621
        %v756 = vadd.f32 %v399, %v626
        %v757 = vadd.f32 %v400, %v631
        %v758 = vadd.f32 %v401, %v636
        %v759 = vadd.f32 %v402, %v641
        %v760 = vadd.f32 %v403, %v646
        %v761 = vadd.f32 %v404, %v651
        %v762 = vadd.f32 %v405, %v656
        %v763 = vadd.f32 %v406, %v661
        %v764 = vadd.f32 %v407, %v666
        %v765 = vadd.f32 %v408, %v671
        %v766 = vadd.f32 %v409, %v676
        %v767 = vadd.f32 %v410, %v681
        %v768 = vadd.f32 %v411, %v686
        %v769 = vadd.f32 %v412, %v691
        %v770 = vadd.f32 %v413, %v696
        %v771 = vadd.f32 %v414, %v701
        %v772 = vadd.f32 %v415, %v706
        %v773 = vadd.f32 %v416, %v711
        %v774 = vadd.f32 %v417, %v716
        %v775 = vadd.f32 %v418, %v721
        %v776 = vadd.f32 %v419, %v726
        %v777 = vadd.f32 %v420, %v731
        %v778 = vadd.f32 %v421, %v736
        %v779 = vadd.f32 %v422, %v741
        %v780 = vadd.f32 %v423, %v746
        %781 = vst.msk [vmem:[#allocation3] sm:$0xff] %vm311, %v749
        %782 = vst.msk [vmem:[#allocation3 + $0x8] sm:$0xff] %vm311, %v750
        %783 = vst.msk [vmem:[#allocation3 + $0x10] sm:$0xff] %vm311, %v751
        %784 = vst.msk [vmem:[#allocation3 + $0x18] sm:$0xff] %vm311, %v752
        %785 = vst.msk [vmem:[#allocation3 + $0x20] sm:$0xff] %vm311, %v753
        %786 = vst.msk [vmem:[#allocation3 + $0x28] sm:$0xff] %vm311, %v754
        %787 = vst.msk [vmem:[#allocation3 + $0x30] sm:$0xff] %vm311, %v755
        %788 = vst.msk [vmem:[#allocation3 + $0x38] sm:$0xff] %vm311, %v756
        %789 = vst.msk [vmem:[#allocation3 + $0x40] sm:$0xff] %vm311, %v757
        %790 = vst.msk [vmem:[#allocation3 + $0x48] sm:$0xff] %vm311, %v758
        %791 = vst.msk [vmem:[#allocation3 + $0x50] sm:$0xff] %vm311, %v759
        %792 = vst.msk [vmem:[#allocation3 + $0x58] sm:$0xff] %vm311, %v760
        %793 = vst.msk [vmem:[#allocation3 + $0x60] sm:$0xff] %vm311, %v761
        %794 = vst.msk [vmem:[#allocation3 + $0x68] sm:$0xff] %vm311, %v762
        %795 = vst.msk [vmem:[#allocation3 + $0x70] sm:$0xff] %vm311, %v763
        %796 = vst.msk [vmem:[#allocation3 + $0x78] sm:$0xff] %vm311, %v764
        %797 = vst.msk [vmem:[#allocation3 + $0x80] sm:$0xff] %vm311, %v765
        %798 = vst.msk [vmem:[#allocation3 + $0x88] sm:$0xff] %vm311, %v766
        %799 = vst.msk [vmem:[#allocation3 + $0x90] sm:$0xff] %vm311, %v767
        %800 = vst.msk [vmem:[#allocation3 + $0x98] sm:$0xff] %vm311, %v768
        %801 = vst.msk [vmem:[#allocation3 + $0xa0] sm:$0xff] %vm311, %v769
        %802 = vst.msk [vmem:[#allocation3 + $0xa8] sm:$0xff] %vm311, %v770
        %803 = vst.msk [vmem:[#allocation3 + $0xb0] sm:$0xff] %vm311, %v771
        %804 = vst.msk [vmem:[#allocation3 + $0xb8] sm:$0xff] %vm311, %v772
        %805 = vst.msk [vmem:[#allocation3 + $0xc0] sm:$0xff] %vm311, %v773
        %806 = vst.msk [vmem:[#allocation3 + $0xc8] sm:$0xff] %vm311, %v774
        %807 = vst.msk [vmem:[#allocation3 + $0xd0] sm:$0xff] %vm311, %v775
        %808 = vst.msk [vmem:[#allocation3 + $0xd8] sm:$0xff] %vm311, %v776
        %809 = vst.msk [vmem:[#allocation3 + $0xe0] sm:$0xff] %vm311, %v777
        %810 = vst.msk [vmem:[#allocation3 + $0xe8] sm:$0xff] %vm311, %v778
        %811 = vst.msk [vmem:[#allocation3 + $0xf0] sm:$0xff] %vm311, %v779
        %812 = vst.msk [vmem:[#allocation3 + $0xf8] sm:$0xff] %vm311, %v780
        %v813 = vld [vmem:[#allocation3] sm:$0xff]
        %v814 = vld [vmem:[#allocation3 + $0x8] sm:$0xff]
        %v815 = vld [vmem:[#allocation3 + $0x10] sm:$0xff]
        %v816 = vld [vmem:[#allocation3 + $0x18] sm:$0xff]
        %v817 = vld [vmem:[#allocation3 + $0x20] sm:$0xff]
        %v818 = vld [vmem:[#allocation3 + $0x28] sm:$0xff]
        %v819 = vld [vmem:[#allocation3 + $0x30] sm:$0xff]
        %v820 = vld [vmem:[#allocation3 + $0x38] sm:$0xff]
        %v821 = vld [vmem:[#allocation3 + $0x40] sm:$0xff]
        %v822 = vld [vmem:[#allocation3 + $0x48] sm:$0xff]
        %v823 = vld [vmem:[#allocation3 + $0x50] sm:$0xff]
        %v824 = vld [vmem:[#allocation3 + $0x58] sm:$0xff]
        %v825 = vld [vmem:[#allocation3 + $0x60] sm:$0xff]
        %v826 = vld [vmem:[#allocation3 + $0x68] sm:$0xff]
        %v827 = vld [vmem:[#allocation3 + $0x70] sm:$0xff]
        %v828 = vld [vmem:[#allocation3 + $0x78] sm:$0xff]
        %v829 = vld [vmem:[#allocation3 + $0x80] sm:$0xff]
        %v830 = vld [vmem:[#allocation3 + $0x88] sm:$0xff]
        %v831 = vld [vmem:[#allocation3 + $0x90] sm:$0xff]
        %v832 = vld [vmem:[#allocation3 + $0x98] sm:$0xff]
        %v833 = vld [vmem:[#allocation3 + $0xa0] sm:$0xff]
        %v834 = vld [vmem:[#allocation3 + $0xa8] sm:$0xff]
        %v835 = vld [vmem:[#allocation3 + $0xb0] sm:$0xff]
        %v836 = vld [vmem:[#allocation3 + $0xb8] sm:$0xff]
        %v837 = vld [vmem:[#allocation3 + $0xc0] sm:$0xff]
        %v838 = vld [vmem:[#allocation3 + $0xc8] sm:$0xff]
        %v839 = vld [vmem:[#allocation3 + $0xd0] sm:$0xff]
        %v840 = vld [vmem:[#allocation3 + $0xd8] sm:$0xff]
        %v841 = vld [vmem:[#allocation3 + $0xe0] sm:$0xff]
        %v842 = vld [vmem:[#allocation3 + $0xe8] sm:$0xff]
        %v843 = vld [vmem:[#allocation3 + $0xf0] sm:$0xff]
        %v844 = vld [vmem:[#allocation3 + $0xf8] sm:$0xff]
        %vm861 = vcmask 1046528
        %v862 = vrot.slane %v344, 1
        %v863 = vrot.slane %v345, 1
        %v864 = vsel %vm861, %v862, %v863
        %v865 = vrot.slane %v346, 1
        %v866 = vsel %vm861, %v863, %v865
        %v867 = vrot.slane %v347, 1
        %v868 = vrot.slane %v348, 1
        %v869 = vsel %vm861, %v867, %v868
        %v870 = vrot.slane %v349, 1
        %v871 = vsel %vm861, %v868, %v870
        %v872 = vrot.slane %v350, 1
        %v873 = vrot.slane %v351, 1
        %v874 = vsel %vm861, %v872, %v873
        %v875 = vrot.slane %v352, 1
        %v876 = vsel %vm861, %v873, %v875
        %v877 = vrot.slane %v353, 1
        %v878 = vrot.slane %v354, 1
        %v879 = vsel %vm861, %v877, %v878
        %v880 = vrot.slane %v355, 1
        %v881 = vsel %vm861, %v878, %v880
        %v882 = vrot.slane %v356, 1
        %v883 = vrot.slane %v357, 1
        %v884 = vsel %vm861, %v882, %v883
        %v885 = vrot.slane %v358, 1
        %v886 = vsel %vm861, %v883, %v885
        %v887 = vrot.slane %v359, 1
        %v888 = vrot.slane %v360, 1
        %v889 = vsel %vm861, %v887, %v888
        %v890 = vrot.slane %v361, 1
        %v891 = vsel %vm861, %v888, %v890
        %v892 = vrot.slane %v362, 1
        %v893 = vrot.slane %v363, 1
        %v894 = vsel %vm861, %v892, %v893
        %v895 = vrot.slane %v364, 1
        %v896 = vsel %vm861, %v893, %v895
        %v897 = vrot.slane %v365, 1
        %v898 = vrot.slane %v366, 1
        %v899 = vsel %vm861, %v897, %v898
        %v900 = vrot.slane %v367, 1
        %v901 = vsel %vm861, %v898, %v900
        %v902 = vrot.slane %v368, 1
        %v903 = vrot.slane %v369, 1
        %v904 = vsel %vm861, %v902, %v903
        %v905 = vrot.slane %v370, 1
        %v906 = vsel %vm861, %v903, %v905
        %v907 = vrot.slane %v371, 1
        %v908 = vrot.slane %v372, 1
        %v909 = vsel %vm861, %v907, %v908
        %v910 = vrot.slane %v373, 1
        %v911 = vsel %vm861, %v908, %v910
        %v912 = vrot.slane %v374, 1
        %v913 = vrot.slane %v375, 1
        %v914 = vsel %vm861, %v912, %v913
        %v915 = vrot.slane %v376, 1
        %v916 = vsel %vm861, %v913, %v915
        %v917 = vrot.slane %v377, 1
        %v918 = vrot.slane %v378, 1
        %v919 = vsel %vm861, %v917, %v918
        %v920 = vrot.slane %v379, 1
        %v921 = vsel %vm861, %v918, %v920
        %v922 = vrot.slane %v380, 1
        %v923 = vrot.slane %v381, 1
        %v924 = vsel %vm861, %v922, %v923
        %v925 = vrot.slane %v382, 1
        %v926 = vsel %vm861, %v923, %v925
        %v927 = vrot.slane %v383, 1
        %v928 = vrot.slane %v384, 1
        %v929 = vsel %vm861, %v927, %v928
        %v930 = vrot.slane %v385, 1
        %v931 = vsel %vm861, %v928, %v930
        %v932 = vrot.slane %v386, 1
        %v933 = vrot.slane %v387, 1
        %v934 = vsel %vm861, %v932, %v933
        %v935 = vrot.slane %v388, 1
        %v936 = vsel %vm861, %v933, %v935
        %v937 = vrot.slane %v389, 1
        %v938 = vrot.slane %v390, 1
        %v939 = vsel %vm861, %v937, %v938
        %v940 = vrot.slane %v391, 1
        %v941 = vsel %vm861, %v938, %v940
        %s942 = scalar_lea.vmem [#allocation7], 32
        %v943 = vld [vmem:[%s942] sm:$0xff]
        %v944 = vld [vmem:[%s942 + $0x8] sm:$0xff]
        %v945 = vld [vmem:[%s942 + $0x10] sm:$0xff]
        %v946 = vld [vmem:[%s942 + $0x18] sm:$0xff]
        %v947 = vsel %vm204, %v864, 0
        %v949 = vsel %vm204, %v866, 0
        %v951 = vsel %vm204, %v869, 0
        %v953 = vsel %vm204, %v871, 0
        %v955 = vsel %vm204, %v874, 0
        %v957 = vsel %vm204, %v876, 0
        %v959 = vsel %vm204, %v879, 0
        %v961 = vsel %vm204, %v881, 0
        %v963 = vsel %vm204, %v884, 0
        %v965 = vsel %vm204, %v886, 0
        %v967 = vsel %vm204, %v889, 0
        %v969 = vsel %vm204, %v891, 0
        %v971 = vsel %vm204, %v894, 0
        %v973 = vsel %vm204, %v896, 0
        %v975 = vsel %vm204, %v899, 0
        %v977 = vsel %vm204, %v901, 0
        %v979 = vsel %vm204, %v904, 0
        %v981 = vsel %vm204, %v906, 0
        %v983 = vsel %vm204, %v909, 0
        %v985 = vsel %vm204, %v911, 0
        %v987 = vsel %vm204, %v914, 0
        %v989 = vsel %vm204, %v916, 0
        %v991 = vsel %vm204, %v919, 0
        %v993 = vsel %vm204, %v921, 0
        %v995 = vsel %vm204, %v924, 0
        %v997 = vsel %vm204, %v926, 0
        %v999 = vsel %vm204, %v929, 0
        %v1001 = vsel %vm204, %v931, 0
        %v1003 = vsel %vm204, %v934, 0
        %v1005 = vsel %vm204, %v936, 0
        %v1007 = vsel %vm204, %v939, 0
        %v1009 = vsel %vm204, %v941, 0
        %1011 = vmatprep.subr.mxu0 0.0
        %1012 = vmatpush1.msra.mxu0 0.0
        %1013 = vmatprep.subr.mxu0 0.0
        %1014 = vmatpush1.msra.mxu0 0.0
        %1015 = vmatprep.subr.mxu0 0.0
        %1016 = vmatpush1.msra.mxu0 0.0
        %1017 = vmatprep.subr.mxu0 0.0
        %1018 = vmatpush1.msra.mxu0 0.0
        %1019 = vmatprep.subr.mxu0 0.0
        %1020 = vmatpush1.msra.mxu0 0.0
        %1021 = vmatprep.subr.mxu0 0.0
        %1022 = vmatpush1.msra.mxu0 0.0
        %1023 = vmatprep.subr.mxu0 0.0
        %1024 = vmatpush1.msra.mxu0 0.0
        %1025 = vmatprep.subr.mxu0 0.0
        %1026 = vmatpush1.msra.mxu0 0.0
        %1027 = vmatprep.subr.mxu0 0.0
        %1028 = vmatpush1.msra.mxu0 0.0
        %1029 = vmatprep.subr.mxu0 0.0
        %1030 = vmatpush1.msra.mxu0 0.0
        %1031 = vmatprep.subr.mxu0 0.0
        %1032 = vmatpush1.msra.mxu0 0.0
        %1033 = vmatprep.subr.mxu0 0.0
        %1034 = vmatpush1.msra.mxu0 0.0
        %1035 = vmatprep.subr.mxu0 0.0
        %1036 = vmatpush1.msra.mxu0 %v946
        %1037 = vmatprep.subr.mxu0 0.0
        %1038 = vmatpush1.msra.mxu0 %v945
        %1039 = vmatprep.subr.mxu0 0.0
        %1040 = vmatpush1.msra.mxu0 %v944
        %1041 = vmatprep.subr.mxu0 0.0
        %1042 = vmatpush1.msra.mxu0 %v943
        %1043 = vmatprep.subr.mxu0 0.0
        %1044 = vmatpush2.msra.mxu0 0.0
        %1045 = vmatprep.subr.mxu0 0.0
        %1046 = vmatpush2.msra.mxu0 0.0
        %1047 = vmatprep.subr.mxu0 0.0
        %1048 = vmatpush2.msra.mxu0 0.0
        %1049 = vmatprep.subr.mxu0 0.0
        %1050 = vmatpush2.msra.mxu0 0.0
        %1051 = vmatprep.subr.mxu0 0.0
        %1052 = vmatpush2.msra.mxu0 0.0
        %1053 = vmatprep.subr.mxu0 0.0
        %1054 = vmatpush2.msra.mxu0 0.0
        %1055 = vmatprep.subr.mxu0 0.0
        %1056 = vmatpush2.msra.mxu0 0.0
        %1057 = vmatprep.subr.mxu0 0.0
        %1058 = vmatpush2.msra.mxu0 0.0
        %1059 = vmatprep.subr.mxu0 0.0
        %1060 = vmatpush2.msra.mxu0 0.0
        %1061 = vmatprep.subr.mxu0 0.0
        %1062 = vmatpush2.msra.mxu0 0.0
        %1063 = vmatprep.subr.mxu0 0.0
        %1064 = vmatpush2.msra.mxu0 0.0
        %1065 = vmatprep.subr.mxu0 0.0
        %1066 = vmatpush2.msra.mxu0 0.0
        %1067 = vmatprep.subr.mxu0 0.0
        %1068 = vmatpush2.msra.mxu0 0.0
        %1069 = vmatprep.subr.mxu0 0.0
        %1070 = vmatpush2.msra.mxu0 0.0
        %1071 = vmatprep.subr.mxu0 0.0
        %1072 = vmatpush2.msra.mxu0 0.0
        %1073 = vmatprep.subr.mxu0 0.0
        %1074 = vmatpush2.msra.mxu0 0.0
        %1075 = vmatprep.mubr.f32.mxu0 0.0
        %1076 = vmatmul.mubr.f32.gmra.mxu0 %v947
        %v1077 = vpop.f32.mrf.mxu0
        %v1078 = vadd.f32 0.0, %v1077
        %v1079 = vpop.f32.mrf.mxu0
        %1080 = vmatprep.mubr.f32.mxu0 0.0
        %1081 = vmatmul.mubr.f32.gmra.mxu0 %v949
        %v1082 = vpop.f32.mrf.mxu0
        %v1083 = vadd.f32 0.0, %v1082
        %v1084 = vpop.f32.mrf.mxu0
        %1085 = vmatprep.mubr.f32.mxu0 0.0
        %1086 = vmatmul.mubr.f32.gmra.mxu0 %v951
        %v1087 = vpop.f32.mrf.mxu0
        %v1088 = vadd.f32 0.0, %v1087
        %v1089 = vpop.f32.mrf.mxu0
        %1090 = vmatprep.mubr.f32.mxu0 0.0
        %1091 = vmatmul.mubr.f32.gmra.mxu0 %v953
        %v1092 = vpop.f32.mrf.mxu0
        %v1093 = vadd.f32 0.0, %v1092
        %v1094 = vpop.f32.mrf.mxu0
        %1095 = vmatprep.mubr.f32.mxu0 0.0
        %1096 = vmatmul.mubr.f32.gmra.mxu0 %v955
        %v1097 = vpop.f32.mrf.mxu0
        %v1098 = vadd.f32 0.0, %v1097
        %v1099 = vpop.f32.mrf.mxu0
        %1100 = vmatprep.mubr.f32.mxu0 0.0
        %1101 = vmatmul.mubr.f32.gmra.mxu0 %v957
        %v1102 = vpop.f32.mrf.mxu0
        %v1103 = vadd.f32 0.0, %v1102
        %v1104 = vpop.f32.mrf.mxu0
        %1105 = vmatprep.mubr.f32.mxu0 0.0
        %1106 = vmatmul.mubr.f32.gmra.mxu0 %v959
        %v1107 = vpop.f32.mrf.mxu0
        %v1108 = vadd.f32 0.0, %v1107
        %v1109 = vpop.f32.mrf.mxu0
        %1110 = vmatprep.mubr.f32.mxu0 0.0
        %1111 = vmatmul.mubr.f32.gmra.mxu0 %v961
        %v1112 = vpop.f32.mrf.mxu0
        %v1113 = vadd.f32 0.0, %v1112
        %v1114 = vpop.f32.mrf.mxu0
        %1115 = vmatprep.mubr.f32.mxu0 0.0
        %1116 = vmatmul.mubr.f32.gmra.mxu0 %v963
        %v1117 = vpop.f32.mrf.mxu0
        %v1118 = vadd.f32 0.0, %v1117
        %v1119 = vpop.f32.mrf.mxu0
        %1120 = vmatprep.mubr.f32.mxu0 0.0
        %1121 = vmatmul.mubr.f32.gmra.mxu0 %v965
        %v1122 = vpop.f32.mrf.mxu0
        %v1123 = vadd.f32 0.0, %v1122
        %v1124 = vpop.f32.mrf.mxu0
        %1125 = vmatprep.mubr.f32.mxu0 0.0
        %1126 = vmatmul.mubr.f32.gmra.mxu0 %v967
        %v1127 = vpop.f32.mrf.mxu0
        %v1128 = vadd.f32 0.0, %v1127
        %v1129 = vpop.f32.mrf.mxu0
        %1130 = vmatprep.mubr.f32.mxu0 0.0
        %1131 = vmatmul.mubr.f32.gmra.mxu0 %v969
        %v1132 = vpop.f32.mrf.mxu0
        %v1133 = vadd.f32 0.0, %v1132
        %v1134 = vpop.f32.mrf.mxu0
        %1135 = vmatprep.mubr.f32.mxu0 0.0
        %1136 = vmatmul.mubr.f32.gmra.mxu0 %v971
        %v1137 = vpop.f32.mrf.mxu0
        %v1138 = vadd.f32 0.0, %v1137
        %v1139 = vpop.f32.mrf.mxu0
        %1140 = vmatprep.mubr.f32.mxu0 0.0
        %1141 = vmatmul.mubr.f32.gmra.mxu0 %v973
        %v1142 = vpop.f32.mrf.mxu0
        %v1143 = vadd.f32 0.0, %v1142
        %v1144 = vpop.f32.mrf.mxu0
        %1145 = vmatprep.mubr.f32.mxu0 0.0
        %1146 = vmatmul.mubr.f32.gmra.mxu0 %v975
        %v1147 = vpop.f32.mrf.mxu0
        %v1148 = vadd.f32 0.0, %v1147
        %v1149 = vpop.f32.mrf.mxu0
        %1150 = vmatprep.mubr.f32.mxu0 0.0
        %1151 = vmatmul.mubr.f32.gmra.mxu0 %v977
        %v1152 = vpop.f32.mrf.mxu0
        %v1153 = vadd.f32 0.0, %v1152
        %v1154 = vpop.f32.mrf.mxu0
        %1155 = vmatprep.mubr.f32.mxu0 0.0
        %1156 = vmatmul.mubr.f32.gmra.mxu0 %v979
        %v1157 = vpop.f32.mrf.mxu0
        %v1158 = vadd.f32 0.0, %v1157
        %v1159 = vpop.f32.mrf.mxu0
        %1160 = vmatprep.mubr.f32.mxu0 0.0
        %1161 = vmatmul.mubr.f32.gmra.mxu0 %v981
        %v1162 = vpop.f32.mrf.mxu0
        %v1163 = vadd.f32 0.0, %v1162
        %v1164 = vpop.f32.mrf.mxu0
        %1165 = vmatprep.mubr.f32.mxu0 0.0
        %1166 = vmatmul.mubr.f32.gmra.mxu0 %v983
        %v1167 = vpop.f32.mrf.mxu0
        %v1168 = vadd.f32 0.0, %v1167
        %v1169 = vpop.f32.mrf.mxu0
        %1170 = vmatprep.mubr.f32.mxu0 0.0
        %1171 = vmatmul.mubr.f32.gmra.mxu0 %v985
        %v1172 = vpop.f32.mrf.mxu0
        %v1173 = vadd.f32 0.0, %v1172
        %v1174 = vpop.f32.mrf.mxu0
        %1175 = vmatprep.mubr.f32.mxu0 0.0
        %1176 = vmatmul.mubr.f32.gmra.mxu0 %v987
        %v1177 = vpop.f32.mrf.mxu0
        %v1178 = vadd.f32 0.0, %v1177
        %v1179 = vpop.f32.mrf.mxu0
        %1180 = vmatprep.mubr.f32.mxu0 0.0
        %1181 = vmatmul.mubr.f32.gmra.mxu0 %v989
        %v1182 = vpop.f32.mrf.mxu0
        %v1183 = vadd.f32 0.0, %v1182
        %v1184 = vpop.f32.mrf.mxu0
        %1185 = vmatprep.mubr.f32.mxu0 0.0
        %1186 = vmatmul.mubr.f32.gmra.mxu0 %v991
        %v1187 = vpop.f32.mrf.mxu0
        %v1188 = vadd.f32 0.0, %v1187
        %v1189 = vpop.f32.mrf.mxu0
        %1190 = vmatprep.mubr.f32.mxu0 0.0
        %1191 = vmatmul.mubr.f32.gmra.mxu0 %v993
        %v1192 = vpop.f32.mrf.mxu0
        %v1193 = vadd.f32 0.0, %v1192
        %v1194 = vpop.f32.mrf.mxu0
        %1195 = vmatprep.mubr.f32.mxu0 0.0
        %1196 = vmatmul.mubr.f32.gmra.mxu0 %v995
        %v1197 = vpop.f32.mrf.mxu0
        %v1198 = vadd.f32 0.0, %v1197
        %v1199 = vpop.f32.mrf.mxu0
        %1200 = vmatprep.mubr.f32.mxu0 0.0
        %1201 = vmatmul.mubr.f32.gmra.mxu0 %v997
        %v1202 = vpop.f32.mrf.mxu0
        %v1203 = vadd.f32 0.0, %v1202
        %v1204 = vpop.f32.mrf.mxu0
        %1205 = vmatprep.mubr.f32.mxu0 0.0
        %1206 = vmatmul.mubr.f32.gmra.mxu0 %v999
        %v1207 = vpop.f32.mrf.mxu0
        %v1208 = vadd.f32 0.0, %v1207
        %v1209 = vpop.f32.mrf.mxu0
        %1210 = vmatprep.mubr.f32.mxu0 0.0
        %1211 = vmatmul.mubr.f32.gmra.mxu0 %v1001
        %v1212 = vpop.f32.mrf.mxu0
        %v1213 = vadd.f32 0.0, %v1212
        %v1214 = vpop.f32.mrf.mxu0
        %1215 = vmatprep.mubr.f32.mxu0 0.0
        %1216 = vmatmul.mubr.f32.gmra.mxu0 %v1003
        %v1217 = vpop.f32.mrf.mxu0
        %v1218 = vadd.f32 0.0, %v1217
        %v1219 = vpop.f32.mrf.mxu0
        %1220 = vmatprep.mubr.f32.mxu0 0.0
        %1221 = vmatmul.mubr.f32.gmra.mxu0 %v1005
        %v1222 = vpop.f32.mrf.mxu0
        %v1223 = vadd.f32 0.0, %v1222
        %v1224 = vpop.f32.mrf.mxu0
        %1225 = vmatprep.mubr.f32.mxu0 0.0
        %1226 = vmatmul.mubr.f32.gmra.mxu0 %v1007
        %v1227 = vpop.f32.mrf.mxu0
        %v1228 = vadd.f32 0.0, %v1227
        %v1229 = vpop.f32.mrf.mxu0
        %1230 = vmatprep.mubr.f32.mxu0 0.0
        %1231 = vmatmul.mubr.f32.gmra.mxu0 %v1009
        %v1232 = vpop.f32.mrf.mxu0
        %v1233 = vadd.f32 0.0, %v1232
        %v1234 = vpop.f32.mrf.mxu0
        %1235 = vdwg.mxu0
        %v1236 = vadd.f32 %v813, %v1078
        %v1237 = vadd.f32 %v814, %v1083
        %v1238 = vadd.f32 %v815, %v1088
        %v1239 = vadd.f32 %v816, %v1093
        %v1240 = vadd.f32 %v817, %v1098
        %v1241 = vadd.f32 %v818, %v1103
        %v1242 = vadd.f32 %v819, %v1108
        %v1243 = vadd.f32 %v820, %v1113
        %v1244 = vadd.f32 %v821, %v1118
        %v1245 = vadd.f32 %v822, %v1123
        %v1246 = vadd.f32 %v823, %v1128
        %v1247 = vadd.f32 %v824, %v1133
        %v1248 = vadd.f32 %v825, %v1138
        %v1249 = vadd.f32 %v826, %v1143
        %v1250 = vadd.f32 %v827, %v1148
        %v1251 = vadd.f32 %v828, %v1153
        %v1252 = vadd.f32 %v829, %v1158
        %v1253 = vadd.f32 %v830, %v1163
        %v1254 = vadd.f32 %v831, %v1168
        %v1255 = vadd.f32 %v832, %v1173
        %v1256 = vadd.f32 %v833, %v1178
        %v1257 = vadd.f32 %v834, %v1183
        %v1258 = vadd.f32 %v835, %v1188
        %v1259 = vadd.f32 %v836, %v1193
        %v1260 = vadd.f32 %v837, %v1198
        %v1261 = vadd.f32 %v838, %v1203
        %v1262 = vadd.f32 %v839, %v1208
        %v1263 = vadd.f32 %v840, %v1213
        %v1264 = vadd.f32 %v841, %v1218
        %v1265 = vadd.f32 %v842, %v1223
        %v1266 = vadd.f32 %v843, %v1228
        %v1267 = vadd.f32 %v844, %v1233
        %1268 = vst.msk [vmem:[#allocation3] sm:$0xff] %vm311, %v1236
        %1269 = vst.msk [vmem:[#allocation3 + $0x8] sm:$0xff] %vm311, %v1237
        %1270 = vst.msk [vmem:[#allocation3 + $0x10] sm:$0xff] %vm311, %v1238
        %1271 = vst.msk [vmem:[#allocation3 + $0x18] sm:$0xff] %vm311, %v1239
        %1272 = vst.msk [vmem:[#allocation3 + $0x20] sm:$0xff] %vm311, %v1240
        %1273 = vst.msk [vmem:[#allocation3 + $0x28] sm:$0xff] %vm311, %v1241
        %1274 = vst.msk [vmem:[#allocation3 + $0x30] sm:$0xff] %vm311, %v1242
        %1275 = vst.msk [vmem:[#allocation3 + $0x38] sm:$0xff] %vm311, %v1243
        %1276 = vst.msk [vmem:[#allocation3 + $0x40] sm:$0xff] %vm311, %v1244
        %1277 = vst.msk [vmem:[#allocation3 + $0x48] sm:$0xff] %vm311, %v1245
        %1278 = vst.msk [vmem:[#allocation3 + $0x50] sm:$0xff] %vm311, %v1246
        %1279 = vst.msk [vmem:[#allocation3 + $0x58] sm:$0xff] %vm311, %v1247
        %1280 = vst.msk [vmem:[#allocation3 + $0x60] sm:$0xff] %vm311, %v1248
        %1281 = vst.msk [vmem:[#allocation3 + $0x68] sm:$0xff] %vm311, %v1249
        %1282 = vst.msk [vmem:[#allocation3 + $0x70] sm:$0xff] %vm311, %v1250
        %1283 = vst.msk [vmem:[#allocation3 + $0x78] sm:$0xff] %vm311, %v1251
        %1284 = vst.msk [vmem:[#allocation3 + $0x80] sm:$0xff] %vm311, %v1252
        %1285 = vst.msk [vmem:[#allocation3 + $0x88] sm:$0xff] %vm311, %v1253
        %1286 = vst.msk [vmem:[#allocation3 + $0x90] sm:$0xff] %vm311, %v1254
        %1287 = vst.msk [vmem:[#allocation3 + $0x98] sm:$0xff] %vm311, %v1255
        %1288 = vst.msk [vmem:[#allocation3 + $0xa0] sm:$0xff] %vm311, %v1256
        %1289 = vst.msk [vmem:[#allocation3 + $0xa8] sm:$0xff] %vm311, %v1257
        %1290 = vst.msk [vmem:[#allocation3 + $0xb0] sm:$0xff] %vm311, %v1258
        %1291 = vst.msk [vmem:[#allocation3 + $0xb8] sm:$0xff] %vm311, %v1259
        %1292 = vst.msk [vmem:[#allocation3 + $0xc0] sm:$0xff] %vm311, %v1260
        %1293 = vst.msk [vmem:[#allocation3 + $0xc8] sm:$0xff] %vm311, %v1261
        %1294 = vst.msk [vmem:[#allocation3 + $0xd0] sm:$0xff] %vm311, %v1262
        %1295 = vst.msk [vmem:[#allocation3 + $0xd8] sm:$0xff] %vm311, %v1263
        %1296 = vst.msk [vmem:[#allocation3 + $0xe0] sm:$0xff] %vm311, %v1264
        %1297 = vst.msk [vmem:[#allocation3 + $0xe8] sm:$0xff] %vm311, %v1265
        %1298 = vst.msk [vmem:[#allocation3 + $0xf0] sm:$0xff] %vm311, %v1266
        %1299 = vst.msk [vmem:[#allocation3 + $0xf8] sm:$0xff] %vm311, %v1267
        %v1300 = vld [vmem:[#allocation3] sm:$0xff]
        %v1301 = vld [vmem:[#allocation3 + $0x8] sm:$0xff]
        %v1302 = vld [vmem:[#allocation3 + $0x10] sm:$0xff]
        %v1303 = vld [vmem:[#allocation3 + $0x18] sm:$0xff]
        %v1304 = vld [vmem:[#allocation3 + $0x20] sm:$0xff]
        %v1305 = vld [vmem:[#allocation3 + $0x28] sm:$0xff]
        %v1306 = vld [vmem:[#allocation3 + $0x30] sm:$0xff]
        %v1307 = vld [vmem:[#allocation3 + $0x38] sm:$0xff]
        %v1308 = vld [vmem:[#allocation3 + $0x40] sm:$0xff]
        %v1309 = vld [vmem:[#allocation3 + $0x48] sm:$0xff]
        %v1310 = vld [vmem:[#allocation3 + $0x50] sm:$0xff]
        %v1311 = vld [vmem:[#allocation3 + $0x58] sm:$0xff]
        %v1312 = vld [vmem:[#allocation3 + $0x60] sm:$0xff]
        %v1313 = vld [vmem:[#allocation3 + $0x68] sm:$0xff]
        %v1314 = vld [vmem:[#allocation3 + $0x70] sm:$0xff]
        %v1315 = vld [vmem:[#allocation3 + $0x78] sm:$0xff]
        %v1316 = vld [vmem:[#allocation3 + $0x80] sm:$0xff]
        %v1317 = vld [vmem:[#allocation3 + $0x88] sm:$0xff]
        %v1318 = vld [vmem:[#allocation3 + $0x90] sm:$0xff]
        %v1319 = vld [vmem:[#allocation3 + $0x98] sm:$0xff]
        %v1320 = vld [vmem:[#allocation3 + $0xa0] sm:$0xff]
        %v1321 = vld [vmem:[#allocation3 + $0xa8] sm:$0xff]
        %v1322 = vld [vmem:[#allocation3 + $0xb0] sm:$0xff]
        %v1323 = vld [vmem:[#allocation3 + $0xb8] sm:$0xff]
        %v1324 = vld [vmem:[#allocation3 + $0xc0] sm:$0xff]
        %v1325 = vld [vmem:[#allocation3 + $0xc8] sm:$0xff]
        %v1326 = vld [vmem:[#allocation3 + $0xd0] sm:$0xff]
        %v1327 = vld [vmem:[#allocation3 + $0xd8] sm:$0xff]
        %v1328 = vld [vmem:[#allocation3 + $0xe0] sm:$0xff]
        %v1329 = vld [vmem:[#allocation3 + $0xe8] sm:$0xff]
        %v1330 = vld [vmem:[#allocation3 + $0xf0] sm:$0xff]
        %v1331 = vld [vmem:[#allocation3 + $0xf8] sm:$0xff]
        %vm1332 = vcmask 1045504
        %v1333 = vrot.slane %v344, 2
        %v1334 = vrot.slane %v345, 2
        %v1335 = vsel %vm1332, %v1333, %v1334
        %v1336 = vrot.slane %v346, 2
        %v1337 = vsel %vm1332, %v1334, %v1336
        %v1338 = vrot.slane %v347, 2
        %v1339 = vrot.slane %v348, 2
        %v1340 = vsel %vm1332, %v1338, %v1339
        %v1341 = vrot.slane %v349, 2
        %v1342 = vsel %vm1332, %v1339, %v1341
        %v1343 = vrot.slane %v350, 2
        %v1344 = vrot.slane %v351, 2
        %v1345 = vsel %vm1332, %v1343, %v1344
        %v1346 = vrot.slane %v352, 2
        %v1347 = vsel %vm1332, %v1344, %v1346
        %v1348 = vrot.slane %v353, 2
        %v1349 = vrot.slane %v354, 2
        %v1350 = vsel %vm1332, %v1348, %v1349
        %v1351 = vrot.slane %v355, 2
        %v1352 = vsel %vm1332, %v1349, %v1351
        %v1353 = vrot.slane %v356, 2
        %v1354 = vrot.slane %v357, 2
        %v1355 = vsel %vm1332, %v1353, %v1354
        %v1356 = vrot.slane %v358, 2
        %v1357 = vsel %vm1332, %v1354, %v1356
        %v1358 = vrot.slane %v359, 2
        %v1359 = vrot.slane %v360, 2
        %v1360 = vsel %vm1332, %v1358, %v1359
        %v1361 = vrot.slane %v361, 2
        %v1362 = vsel %vm1332, %v1359, %v1361
        %v1363 = vrot.slane %v362, 2
        %v1364 = vrot.slane %v363, 2
        %v1365 = vsel %vm1332, %v1363, %v1364
        %v1366 = vrot.slane %v364, 2
        %v1367 = vsel %vm1332, %v1364, %v1366
        %v1368 = vrot.slane %v365, 2
        %v1369 = vrot.slane %v366, 2
        %v1370 = vsel %vm1332, %v1368, %v1369
        %v1371 = vrot.slane %v367, 2
        %v1372 = vsel %vm1332, %v1369, %v1371
        %v1373 = vrot.slane %v368, 2
        %v1374 = vrot.slane %v369, 2
        %v1375 = vsel %vm1332, %v1373, %v1374
        %v1376 = vrot.slane %v370, 2
        %v1377 = vsel %vm1332, %v1374, %v1376
        %v1378 = vrot.slane %v371, 2
        %v1379 = vrot.slane %v372, 2
        %v1380 = vsel %vm1332, %v1378, %v1379
        %v1381 = vrot.slane %v373, 2
        %v1382 = vsel %vm1332, %v1379, %v1381
        %v1383 = vrot.slane %v374, 2
        %v1384 = vrot.slane %v375, 2
        %v1385 = vsel %vm1332, %v1383, %v1384
        %v1386 = vrot.slane %v376, 2
        %v1387 = vsel %vm1332, %v1384, %v1386
        %v1388 = vrot.slane %v377, 2
        %v1389 = vrot.slane %v378, 2
        %v1390 = vsel %vm1332, %v1388, %v1389
        %v1391 = vrot.slane %v379, 2
        %v1392 = vsel %vm1332, %v1389, %v1391
        %v1393 = vrot.slane %v380, 2
        %v1394 = vrot.slane %v381, 2
        %v1395 = vsel %vm1332, %v1393, %v1394
        %v1396 = vrot.slane %v382, 2
        %v1397 = vsel %vm1332, %v1394, %v1396
        %v1398 = vrot.slane %v383, 2
        %v1399 = vrot.slane %v384, 2
        %v1400 = vsel %vm1332, %v1398, %v1399
        %v1401 = vrot.slane %v385, 2
        %v1402 = vsel %vm1332, %v1399, %v1401
        %v1403 = vrot.slane %v386, 2
        %v1404 = vrot.slane %v387, 2
        %v1405 = vsel %vm1332, %v1403, %v1404
        %v1406 = vrot.slane %v388, 2
        %v1407 = vsel %vm1332, %v1404, %v1406
        %v1408 = vrot.slane %v389, 2
        %v1409 = vrot.slane %v390, 2
        %v1410 = vsel %vm1332, %v1408, %v1409
        %v1411 = vrot.slane %v391, 2
        %v1412 = vsel %vm1332, %v1409, %v1411
        %s1413 = scalar_lea.vmem [#allocation7], 64
        %v1414 = vld [vmem:[%s1413] sm:$0xff]
        %v1415 = vld [vmem:[%s1413 + $0x8] sm:$0xff]
        %v1416 = vld [vmem:[%s1413 + $0x10] sm:$0xff]
        %v1417 = vld [vmem:[%s1413 + $0x18] sm:$0xff]
        %v1418 = vsel %vm204, %v1335, 0
        %v1420 = vsel %vm204, %v1337, 0
        %v1422 = vsel %vm204, %v1340, 0
        %v1424 = vsel %vm204, %v1342, 0
        %v1426 = vsel %vm204, %v1345, 0
        %v1428 = vsel %vm204, %v1347, 0
        %v1430 = vsel %vm204, %v1350, 0
        %v1432 = vsel %vm204, %v1352, 0
        %v1434 = vsel %vm204, %v1355, 0
        %v1436 = vsel %vm204, %v1357, 0
        %v1438 = vsel %vm204, %v1360, 0
        %v1440 = vsel %vm204, %v1362, 0
        %v1442 = vsel %vm204, %v1365, 0
        %v1444 = vsel %vm204, %v1367, 0
        %v1446 = vsel %vm204, %v1370, 0
        %v1448 = vsel %vm204, %v1372, 0
        %v1450 = vsel %vm204, %v1375, 0
        %v1452 = vsel %vm204, %v1377, 0
        %v1454 = vsel %vm204, %v1380, 0
        %v1456 = vsel %vm204, %v1382, 0
        %v1458 = vsel %vm204, %v1385, 0
        %v1460 = vsel %vm204, %v1387, 0
        %v1462 = vsel %vm204, %v1390, 0
        %v1464 = vsel %vm204, %v1392, 0
        %v1466 = vsel %vm204, %v1395, 0
        %v1468 = vsel %vm204, %v1397, 0
        %v1470 = vsel %vm204, %v1400, 0
        %v1472 = vsel %vm204, %v1402, 0
        %v1474 = vsel %vm204, %v1405, 0
        %v1476 = vsel %vm204, %v1407, 0
        %v1478 = vsel %vm204, %v1410, 0
        %v1480 = vsel %vm204, %v1412, 0
        %1482 = vmatprep.subr.mxu0 0.0
        %1483 = vmatpush1.msra.mxu0 0.0
        %1484 = vmatprep.subr.mxu0 0.0
        %1485 = vmatpush1.msra.mxu0 0.0
        %1486 = vmatprep.subr.mxu0 0.0
        %1487 = vmatpush1.msra.mxu0 0.0
        %1488 = vmatprep.subr.mxu0 0.0
        %1489 = vmatpush1.msra.mxu0 0.0
        %1490 = vmatprep.subr.mxu0 0.0
        %1491 = vmatpush1.msra.mxu0 0.0
        %1492 = vmatprep.subr.mxu0 0.0
        %1493 = vmatpush1.msra.mxu0 0.0
        %1494 = vmatprep.subr.mxu0 0.0
        %1495 = vmatpush1.msra.mxu0 0.0
        %1496 = vmatprep.subr.mxu0 0.0
        %1497 = vmatpush1.msra.mxu0 0.0
        %1498 = vmatprep.subr.mxu0 0.0
        %1499 = vmatpush1.msra.mxu0 0.0
        %1500 = vmatprep.subr.mxu0 0.0
        %1501 = vmatpush1.msra.mxu0 0.0
        %1502 = vmatprep.subr.mxu0 0.0
        %1503 = vmatpush1.msra.mxu0 0.0
        %1504 = vmatprep.subr.mxu0 0.0
        %1505 = vmatpush1.msra.mxu0 0.0
        %1506 = vmatprep.subr.mxu0 0.0
        %1507 = vmatpush1.msra.mxu0 %v1417
        %1508 = vmatprep.subr.mxu0 0.0
        %1509 = vmatpush1.msra.mxu0 %v1416
        %1510 = vmatprep.subr.mxu0 0.0
        %1511 = vmatpush1.msra.mxu0 %v1415
        %1512 = vmatprep.subr.mxu0 0.0
        %1513 = vmatpush1.msra.mxu0 %v1414
        %1514 = vmatprep.subr.mxu0 0.0
        %1515 = vmatpush2.msra.mxu0 0.0
        %1516 = vmatprep.subr.mxu0 0.0
        %1517 = vmatpush2.msra.mxu0 0.0
        %1518 = vmatprep.subr.mxu0 0.0
        %1519 = vmatpush2.msra.mxu0 0.0
        %1520 = vmatprep.subr.mxu0 0.0
        %1521 = vmatpush2.msra.mxu0 0.0
        %1522 = vmatprep.subr.mxu0 0.0
        %1523 = vmatpush2.msra.mxu0 0.0
        %1524 = vmatprep.subr.mxu0 0.0
        %1525 = vmatpush2.msra.mxu0 0.0
        %1526 = vmatprep.subr.mxu0 0.0
        %1527 = vmatpush2.msra.mxu0 0.0
        %1528 = vmatprep.subr.mxu0 0.0
        %1529 = vmatpush2.msra.mxu0 0.0
        %1530 = vmatprep.subr.mxu0 0.0
        %1531 = vmatpush2.msra.mxu0 0.0
        %1532 = vmatprep.subr.mxu0 0.0
        %1533 = vmatpush2.msra.mxu0 0.0
        %1534 = vmatprep.subr.mxu0 0.0
        %1535 = vmatpush2.msra.mxu0 0.0
        %1536 = vmatprep.subr.mxu0 0.0
        %1537 = vmatpush2.msra.mxu0 0.0
        %1538 = vmatprep.subr.mxu0 0.0
        %1539 = vmatpush2.msra.mxu0 0.0
        %1540 = vmatprep.subr.mxu0 0.0
        %1541 = vmatpush2.msra.mxu0 0.0
        %1542 = vmatprep.subr.mxu0 0.0
        %1543 = vmatpush2.msra.mxu0 0.0
        %1544 = vmatprep.subr.mxu0 0.0
        %1545 = vmatpush2.msra.mxu0 0.0
        %1546 = vmatprep.mubr.f32.mxu0 0.0
        %1547 = vmatmul.mubr.f32.gmra.mxu0 %v1418
        %v1548 = vpop.f32.mrf.mxu0
        %v1549 = vadd.f32 0.0, %v1548
        %v1550 = vpop.f32.mrf.mxu0
        %1551 = vmatprep.mubr.f32.mxu0 0.0
        %1552 = vmatmul.mubr.f32.gmra.mxu0 %v1420
        %v1553 = vpop.f32.mrf.mxu0
        %v1554 = vadd.f32 0.0, %v1553
        %v1555 = vpop.f32.mrf.mxu0
        %1556 = vmatprep.mubr.f32.mxu0 0.0
        %1557 = vmatmul.mubr.f32.gmra.mxu0 %v1422
        %v1558 = vpop.f32.mrf.mxu0
        %v1559 = vadd.f32 0.0, %v1558
        %v1560 = vpop.f32.mrf.mxu0
        %1561 = vmatprep.mubr.f32.mxu0 0.0
        %1562 = vmatmul.mubr.f32.gmra.mxu0 %v1424
        %v1563 = vpop.f32.mrf.mxu0
        %v1564 = vadd.f32 0.0, %v1563
        %v1565 = vpop.f32.mrf.mxu0
        %1566 = vmatprep.mubr.f32.mxu0 0.0
        %1567 = vmatmul.mubr.f32.gmra.mxu0 %v1426
        %v1568 = vpop.f32.mrf.mxu0
        %v1569 = vadd.f32 0.0, %v1568
        %v1570 = vpop.f32.mrf.mxu0
        %1571 = vmatprep.mubr.f32.mxu0 0.0
        %1572 = vmatmul.mubr.f32.gmra.mxu0 %v1428
        %v1573 = vpop.f32.mrf.mxu0
        %v1574 = vadd.f32 0.0, %v1573
        %v1575 = vpop.f32.mrf.mxu0
        %1576 = vmatprep.mubr.f32.mxu0 0.0
        %1577 = vmatmul.mubr.f32.gmra.mxu0 %v1430
        %v1578 = vpop.f32.mrf.mxu0
        %v1579 = vadd.f32 0.0, %v1578
        %v1580 = vpop.f32.mrf.mxu0
        %1581 = vmatprep.mubr.f32.mxu0 0.0
        %1582 = vmatmul.mubr.f32.gmra.mxu0 %v1432
        %v1583 = vpop.f32.mrf.mxu0
        %v1584 = vadd.f32 0.0, %v1583
        %v1585 = vpop.f32.mrf.mxu0
        %1586 = vmatprep.mubr.f32.mxu0 0.0
        %1587 = vmatmul.mubr.f32.gmra.mxu0 %v1434
        %v1588 = vpop.f32.mrf.mxu0
        %v1589 = vadd.f32 0.0, %v1588
        %v1590 = vpop.f32.mrf.mxu0
        %1591 = vmatprep.mubr.f32.mxu0 0.0
        %1592 = vmatmul.mubr.f32.gmra.mxu0 %v1436
        %v1593 = vpop.f32.mrf.mxu0
        %v1594 = vadd.f32 0.0, %v1593
        %v1595 = vpop.f32.mrf.mxu0
        %1596 = vmatprep.mubr.f32.mxu0 0.0
        %1597 = vmatmul.mubr.f32.gmra.mxu0 %v1438
        %v1598 = vpop.f32.mrf.mxu0
        %v1599 = vadd.f32 0.0, %v1598
        %v1600 = vpop.f32.mrf.mxu0
        %1601 = vmatprep.mubr.f32.mxu0 0.0
        %1602 = vmatmul.mubr.f32.gmra.mxu0 %v1440
        %v1603 = vpop.f32.mrf.mxu0
        %v1604 = vadd.f32 0.0, %v1603
        %v1605 = vpop.f32.mrf.mxu0
        %1606 = vmatprep.mubr.f32.mxu0 0.0
        %1607 = vmatmul.mubr.f32.gmra.mxu0 %v1442
        %v1608 = vpop.f32.mrf.mxu0
        %v1609 = vadd.f32 0.0, %v1608
        %v1610 = vpop.f32.mrf.mxu0
        %1611 = vmatprep.mubr.f32.mxu0 0.0
        %1612 = vmatmul.mubr.f32.gmra.mxu0 %v1444
        %v1613 = vpop.f32.mrf.mxu0
        %v1614 = vadd.f32 0.0, %v1613
        %v1615 = vpop.f32.mrf.mxu0
        %1616 = vmatprep.mubr.f32.mxu0 0.0
        %1617 = vmatmul.mubr.f32.gmra.mxu0 %v1446
        %v1618 = vpop.f32.mrf.mxu0
        %v1619 = vadd.f32 0.0, %v1618
        %v1620 = vpop.f32.mrf.mxu0
        %1621 = vmatprep.mubr.f32.mxu0 0.0
        %1622 = vmatmul.mubr.f32.gmra.mxu0 %v1448
        %v1623 = vpop.f32.mrf.mxu0
        %v1624 = vadd.f32 0.0, %v1623
        %v1625 = vpop.f32.mrf.mxu0
        %1626 = vmatprep.mubr.f32.mxu0 0.0
        %1627 = vmatmul.mubr.f32.gmra.mxu0 %v1450
        %v1628 = vpop.f32.mrf.mxu0
        %v1629 = vadd.f32 0.0, %v1628
        %v1630 = vpop.f32.mrf.mxu0
        %1631 = vmatprep.mubr.f32.mxu0 0.0
        %1632 = vmatmul.mubr.f32.gmra.mxu0 %v1452
        %v1633 = vpop.f32.mrf.mxu0
        %v1634 = vadd.f32 0.0, %v1633
        %v1635 = vpop.f32.mrf.mxu0
        %1636 = vmatprep.mubr.f32.mxu0 0.0
        %1637 = vmatmul.mubr.f32.gmra.mxu0 %v1454
        %v1638 = vpop.f32.mrf.mxu0
        %v1639 = vadd.f32 0.0, %v1638
        %v1640 = vpop.f32.mrf.mxu0
        %1641 = vmatprep.mubr.f32.mxu0 0.0
        %1642 = vmatmul.mubr.f32.gmra.mxu0 %v1456
        %v1643 = vpop.f32.mrf.mxu0
        %v1644 = vadd.f32 0.0, %v1643
        %v1645 = vpop.f32.mrf.mxu0
        %1646 = vmatprep.mubr.f32.mxu0 0.0
        %1647 = vmatmul.mubr.f32.gmra.mxu0 %v1458
        %v1648 = vpop.f32.mrf.mxu0
        %v1649 = vadd.f32 0.0, %v1648
        %v1650 = vpop.f32.mrf.mxu0
        %1651 = vmatprep.mubr.f32.mxu0 0.0
        %1652 = vmatmul.mubr.f32.gmra.mxu0 %v1460
        %v1653 = vpop.f32.mrf.mxu0
        %v1654 = vadd.f32 0.0, %v1653
        %v1655 = vpop.f32.mrf.mxu0
        %1656 = vmatprep.mubr.f32.mxu0 0.0
        %1657 = vmatmul.mubr.f32.gmra.mxu0 %v1462
        %v1658 = vpop.f32.mrf.mxu0
        %v1659 = vadd.f32 0.0, %v1658
        %v1660 = vpop.f32.mrf.mxu0
        %1661 = vmatprep.mubr.f32.mxu0 0.0
        %1662 = vmatmul.mubr.f32.gmra.mxu0 %v1464
        %v1663 = vpop.f32.mrf.mxu0
        %v1664 = vadd.f32 0.0, %v1663
        %v1665 = vpop.f32.mrf.mxu0
        %1666 = vmatprep.mubr.f32.mxu0 0.0
        %1667 = vmatmul.mubr.f32.gmra.mxu0 %v1466
        %v1668 = vpop.f32.mrf.mxu0
        %v1669 = vadd.f32 0.0, %v1668
        %v1670 = vpop.f32.mrf.mxu0
        %1671 = vmatprep.mubr.f32.mxu0 0.0
        %1672 = vmatmul.mubr.f32.gmra.mxu0 %v1468
        %v1673 = vpop.f32.mrf.mxu0
        %v1674 = vadd.f32 0.0, %v1673
        %v1675 = vpop.f32.mrf.mxu0
        %1676 = vmatprep.mubr.f32.mxu0 0.0
        %1677 = vmatmul.mubr.f32.gmra.mxu0 %v1470
        %v1678 = vpop.f32.mrf.mxu0
        %v1679 = vadd.f32 0.0, %v1678
        %v1680 = vpop.f32.mrf.mxu0
        %1681 = vmatprep.mubr.f32.mxu0 0.0
        %1682 = vmatmul.mubr.f32.gmra.mxu0 %v1472
        %v1683 = vpop.f32.mrf.mxu0
        %v1684 = vadd.f32 0.0, %v1683
        %v1685 = vpop.f32.mrf.mxu0
        %1686 = vmatprep.mubr.f32.mxu0 0.0
        %1687 = vmatmul.mubr.f32.gmra.mxu0 %v1474
        %v1688 = vpop.f32.mrf.mxu0
        %v1689 = vadd.f32 0.0, %v1688
        %v1690 = vpop.f32.mrf.mxu0
        %1691 = vmatprep.mubr.f32.mxu0 0.0
        %1692 = vmatmul.mubr.f32.gmra.mxu0 %v1476
        %v1693 = vpop.f32.mrf.mxu0
        %v1694 = vadd.f32 0.0, %v1693
        %v1695 = vpop.f32.mrf.mxu0
        %1696 = vmatprep.mubr.f32.mxu0 0.0
        %1697 = vmatmul.mubr.f32.gmra.mxu0 %v1478
        %v1698 = vpop.f32.mrf.mxu0
        %v1699 = vadd.f32 0.0, %v1698
        %v1700 = vpop.f32.mrf.mxu0
        %1701 = vmatprep.mubr.f32.mxu0 0.0
        %1702 = vmatmul.mubr.f32.gmra.mxu0 %v1480
        %v1703 = vpop.f32.mrf.mxu0
        %v1704 = vadd.f32 0.0, %v1703
        %v1705 = vpop.f32.mrf.mxu0
        %1706 = vdwg.mxu0
        %v1707 = vadd.f32 %v1300, %v1549
        %v1708 = vadd.f32 %v1301, %v1554
        %v1709 = vadd.f32 %v1302, %v1559
        %v1710 = vadd.f32 %v1303, %v1564
        %v1711 = vadd.f32 %v1304, %v1569
        %v1712 = vadd.f32 %v1305, %v1574
        %v1713 = vadd.f32 %v1306, %v1579
        %v1714 = vadd.f32 %v1307, %v1584
        %v1715 = vadd.f32 %v1308, %v1589
        %v1716 = vadd.f32 %v1309, %v1594
        %v1717 = vadd.f32 %v1310, %v1599
        %v1718 = vadd.f32 %v1311, %v1604
        %v1719 = vadd.f32 %v1312, %v1609
        %v1720 = vadd.f32 %v1313, %v1614
        %v1721 = vadd.f32 %v1314, %v1619
        %v1722 = vadd.f32 %v1315, %v1624
        %v1723 = vadd.f32 %v1316, %v1629
        %v1724 = vadd.f32 %v1317, %v1634
        %v1725 = vadd.f32 %v1318, %v1639
        %v1726 = vadd.f32 %v1319, %v1644
        %v1727 = vadd.f32 %v1320, %v1649
        %v1728 = vadd.f32 %v1321, %v1654
        %v1729 = vadd.f32 %v1322, %v1659
        %v1730 = vadd.f32 %v1323, %v1664
        %v1731 = vadd.f32 %v1324, %v1669
        %v1732 = vadd.f32 %v1325, %v1674
        %v1733 = vadd.f32 %v1326, %v1679
        %v1734 = vadd.f32 %v1327, %v1684
        %v1735 = vadd.f32 %v1328, %v1689
        %v1736 = vadd.f32 %v1329, %v1694
        %v1737 = vadd.f32 %v1330, %v1699
        %v1738 = vadd.f32 %v1331, %v1704
        %1739 = vst.msk [vmem:[#allocation3] sm:$0xff] %vm311, %v1707
        %1740 = vst.msk [vmem:[#allocation3 + $0x8] sm:$0xff] %vm311, %v1708
        %1741 = vst.msk [vmem:[#allocation3 + $0x10] sm:$0xff] %vm311, %v1709
        %1742 = vst.msk [vmem:[#allocation3 + $0x18] sm:$0xff] %vm311, %v1710
        %1743 = vst.msk [vmem:[#allocation3 + $0x20] sm:$0xff] %vm311, %v1711
        %1744 = vst.msk [vmem:[#allocation3 + $0x28] sm:$0xff] %vm311, %v1712
        %1745 = vst.msk [vmem:[#allocation3 + $0x30] sm:$0xff] %vm311, %v1713
        %1746 = vst.msk [vmem:[#allocation3 + $0x38] sm:$0xff] %vm311, %v1714
        %1747 = vst.msk [vmem:[#allocation3 + $0x40] sm:$0xff] %vm311, %v1715
        %1748 = vst.msk [vmem:[#allocation3 + $0x48] sm:$0xff] %vm311, %v1716
        %1749 = vst.msk [vmem:[#allocation3 + $0x50] sm:$0xff] %vm311, %v1717
        %1750 = vst.msk [vmem:[#allocation3 + $0x58] sm:$0xff] %vm311, %v1718
        %1751 = vst.msk [vmem:[#allocation3 + $0x60] sm:$0xff] %vm311, %v1719
        %1752 = vst.msk [vmem:[#allocation3 + $0x68] sm:$0xff] %vm311, %v1720
        %1753 = vst.msk [vmem:[#allocation3 + $0x70] sm:$0xff] %vm311, %v1721
        %1754 = vst.msk [vmem:[#allocation3 + $0x78] sm:$0xff] %vm311, %v1722
        %1755 = vst.msk [vmem:[#allocation3 + $0x80] sm:$0xff] %vm311, %v1723
        %1756 = vst.msk [vmem:[#allocation3 + $0x88] sm:$0xff] %vm311, %v1724
        %1757 = vst.msk [vmem:[#allocation3 + $0x90] sm:$0xff] %vm311, %v1725
        %1758 = vst.msk [vmem:[#allocation3 + $0x98] sm:$0xff] %vm311, %v1726
        %1759 = vst.msk [vmem:[#allocation3 + $0xa0] sm:$0xff] %vm311, %v1727
        %1760 = vst.msk [vmem:[#allocation3 + $0xa8] sm:$0xff] %vm311, %v1728
        %1761 = vst.msk [vmem:[#allocation3 + $0xb0] sm:$0xff] %vm311, %v1729
        %1762 = vst.msk [vmem:[#allocation3 + $0xb8] sm:$0xff] %vm311, %v1730
        %1763 = vst.msk [vmem:[#allocation3 + $0xc0] sm:$0xff] %vm311, %v1731
        %1764 = vst.msk [vmem:[#allocation3 + $0xc8] sm:$0xff] %vm311, %v1732
        %1765 = vst.msk [vmem:[#allocation3 + $0xd0] sm:$0xff] %vm311, %v1733
        %1766 = vst.msk [vmem:[#allocation3 + $0xd8] sm:$0xff] %vm311, %v1734
        %1767 = vst.msk [vmem:[#allocation3 + $0xe0] sm:$0xff] %vm311, %v1735
        %1768 = vst.msk [vmem:[#allocation3 + $0xe8] sm:$0xff] %vm311, %v1736
        %1769 = vst.msk [vmem:[#allocation3 + $0xf0] sm:$0xff] %vm311, %v1737
        %1770 = vst.msk [vmem:[#allocation3 + $0xf8] sm:$0xff] %vm311, %v1738
        %v1771 = vld [vmem:[%s213] sm:$0xff]
        %v1772 = vld [vmem:[%s213 + $0x8] sm:$0xff]
        %v1773 = vld [vmem:[%s213 + $0x10] sm:$0x3]
        %v1774 = vld [vmem:[%s213 + $0x18] sm:$0xff]
        %v1775 = vld [vmem:[%s213 + $0x20] sm:$0xff]
        %v1776 = vld [vmem:[%s213 + $0x28] sm:$0x3]
        %v1777 = vld [vmem:[%s213 + $0x30] sm:$0xff]
        %v1778 = vld [vmem:[%s213 + $0x38] sm:$0xff]
        %v1779 = vld [vmem:[%s213 + $0x40] sm:$0x3]
        %v1780 = vld [vmem:[%s213 + $0x48] sm:$0xff]
        %v1781 = vld [vmem:[%s213 + $0x50] sm:$0xff]
        %v1782 = vld [vmem:[%s213 + $0x58] sm:$0x3]
        %v1783 = vld [vmem:[%s213 + $0x60] sm:$0xff]
        %v1784 = vld [vmem:[%s213 + $0x68] sm:$0xff]
        %v1785 = vld [vmem:[%s213 + $0x70] sm:$0x3]
        %v1786 = vld [vmem:[%s213 + $0x78] sm:$0xff]
        %v1787 = vld [vmem:[%s213 + $0x80] sm:$0xff]
        %v1788 = vld [vmem:[%s213 + $0x88] sm:$0x3]
        %v1789 = vld [vmem:[%s213 + $0x90] sm:$0xff]
        %v1790 = vld [vmem:[%s213 + $0x98] sm:$0xff]
        %v1791 = vld [vmem:[%s213 + $0xa0] sm:$0x3]
        %v1792 = vld [vmem:[%s213 + $0xa8] sm:$0xff]
        %v1793 = vld [vmem:[%s213 + $0xb0] sm:$0xff]
        %v1794 = vld [vmem:[%s213 + $0xb8] sm:$0x3]
        %v1795 = vld [vmem:[%s213 + $0xc0] sm:$0xff]
        %v1796 = vld [vmem:[%s213 + $0xc8] sm:$0xff]
        %v1797 = vld [vmem:[%s213 + $0xd0] sm:$0x3]
        %v1798 = vld [vmem:[%s213 + $0xd8] sm:$0xff]
        %v1799 = vld [vmem:[%s213 + $0xe0] sm:$0xff]
        %v1800 = vld [vmem:[%s213 + $0xe8] sm:$0x3]
        %v1801 = vld [vmem:[%s213 + $0xf0] sm:$0xff]
        %v1802 = vld [vmem:[%s213 + $0xf8] sm:$0xff]
        %v1803 = vld [vmem:[%s213 + $0x100] sm:$0x3]
        %v1804 = vld [vmem:[%s213 + $0x108] sm:$0xff]
        %v1805 = vld [vmem:[%s213 + $0x110] sm:$0xff]
        %v1806 = vld [vmem:[%s213 + $0x118] sm:$0x3]
        %v1807 = vld [vmem:[%s213 + $0x120] sm:$0xff]
        %v1808 = vld [vmem:[%s213 + $0x128] sm:$0xff]
        %v1809 = vld [vmem:[%s213 + $0x130] sm:$0x3]
        %v1810 = vld [vmem:[%s213 + $0x138] sm:$0xff]
        %v1811 = vld [vmem:[%s213 + $0x140] sm:$0xff]
        %v1812 = vld [vmem:[%s213 + $0x148] sm:$0x3]
        %v1813 = vld [vmem:[%s213 + $0x150] sm:$0xff]
        %v1814 = vld [vmem:[%s213 + $0x158] sm:$0xff]
        %v1815 = vld [vmem:[%s213 + $0x160] sm:$0x3]
        %v1816 = vld [vmem:[%s213 + $0x168] sm:$0xff]
        %v1817 = vld [vmem:[%s213 + $0x170] sm:$0xff]
        %v1818 = vld [vmem:[%s213 + $0x178] sm:$0x3]
        %v1819 = vld [vmem:[#allocation3] sm:$0xff]
        %v1820 = vld [vmem:[#allocation3 + $0x8] sm:$0xff]
        %v1821 = vld [vmem:[#allocation3 + $0x10] sm:$0xff]
        %v1822 = vld [vmem:[#allocation3 + $0x18] sm:$0xff]
        %v1823 = vld [vmem:[#allocation3 + $0x20] sm:$0xff]
        %v1824 = vld [vmem:[#allocation3 + $0x28] sm:$0xff]
        %v1825 = vld [vmem:[#allocation3 + $0x30] sm:$0xff]
        %v1826 = vld [vmem:[#allocation3 + $0x38] sm:$0xff]
        %v1827 = vld [vmem:[#allocation3 + $0x40] sm:$0xff]
        %v1828 = vld [vmem:[#allocation3 + $0x48] sm:$0xff]
        %v1829 = vld [vmem:[#allocation3 + $0x50] sm:$0xff]
        %v1830 = vld [vmem:[#allocation3 + $0x58] sm:$0xff]
        %v1831 = vld [vmem:[#allocation3 + $0x60] sm:$0xff]
        %v1832 = vld [vmem:[#allocation3 + $0x68] sm:$0xff]
        %v1833 = vld [vmem:[#allocation3 + $0x70] sm:$0xff]
        %v1834 = vld [vmem:[#allocation3 + $0x78] sm:$0xff]
        %v1835 = vld [vmem:[#allocation3 + $0x80] sm:$0xff]
        %v1836 = vld [vmem:[#allocation3 + $0x88] sm:$0xff]
        %v1837 = vld [vmem:[#allocation3 + $0x90] sm:$0xff]
        %v1838 = vld [vmem:[#allocation3 + $0x98] sm:$0xff]
        %v1839 = vld [vmem:[#allocation3 + $0xa0] sm:$0xff]
        %v1840 = vld [vmem:[#allocation3 + $0xa8] sm:$0xff]
        %v1841 = vld [vmem:[#allocation3 + $0xb0] sm:$0xff]
        %v1842 = vld [vmem:[#allocation3 + $0xb8] sm:$0xff]
        %v1843 = vld [vmem:[#allocation3 + $0xc0] sm:$0xff]
        %v1844 = vld [vmem:[#allocation3 + $0xc8] sm:$0xff]
        %v1845 = vld [vmem:[#allocation3 + $0xd0] sm:$0xff]
        %v1846 = vld [vmem:[#allocation3 + $0xd8] sm:$0xff]
        %v1847 = vld [vmem:[#allocation3 + $0xe0] sm:$0xff]
        %v1848 = vld [vmem:[#allocation3 + $0xe8] sm:$0xff]
        %v1849 = vld [vmem:[#allocation3 + $0xf0] sm:$0xff]
        %v1850 = vld [vmem:[#allocation3 + $0xf8] sm:$0xff]
        %s1851 = scalar_lea.vmem [#allocation7], 96
        %v1852 = vld [vmem:[%s1851] sm:$0xff]
        %v1853 = vld [vmem:[%s1851 + $0x8] sm:$0xff]
        %v1854 = vld [vmem:[%s1851 + $0x10] sm:$0xff]
        %v1855 = vld [vmem:[%s1851 + $0x18] sm:$0xff]
        %v1857 = vsel %vm204, %v1771, 0
        %v1860 = vsel %vm204, %v1772, 0
        %v1863 = vsel %vm204, %v1774, 0
        %v1866 = vsel %vm204, %v1775, 0
        %v1869 = vsel %vm204, %v1777, 0
        %v1872 = vsel %vm204, %v1778, 0
        %v1875 = vsel %vm204, %v1780, 0
        %v1878 = vsel %vm204, %v1781, 0
        %v1881 = vsel %vm204, %v1783, 0
        %v1884 = vsel %vm204, %v1784, 0
        %v1887 = vsel %vm204, %v1786, 0
        %v1890 = vsel %vm204, %v1787, 0
        %v1893 = vsel %vm204, %v1789, 0
        %v1896 = vsel %vm204, %v1790, 0
        %v1899 = vsel %vm204, %v1792, 0
        %v1902 = vsel %vm204, %v1793, 0
        %v1905 = vsel %vm204, %v1795, 0
        %v1908 = vsel %vm204, %v1796, 0
        %v1911 = vsel %vm204, %v1798, 0
        %v1914 = vsel %vm204, %v1799, 0
        %v1917 = vsel %vm204, %v1801, 0
        %v1920 = vsel %vm204, %v1802, 0
        %v1923 = vsel %vm204, %v1804, 0
        %v1926 = vsel %vm204, %v1805, 0
        %v1929 = vsel %vm204, %v1807, 0
        %v1932 = vsel %vm204, %v1808, 0
        %v1935 = vsel %vm204, %v1810, 0
        %v1938 = vsel %vm204, %v1811, 0
        %v1941 = vsel %vm204, %v1813, 0
        %v1944 = vsel %vm204, %v1814, 0
        %v1947 = vsel %vm204, %v1816, 0
        %v1950 = vsel %vm204, %v1817, 0
        %1952 = vmatprep.subr.mxu0 0.0
        %1953 = vmatpush1.msra.mxu0 0.0
        %1954 = vmatprep.subr.mxu0 0.0
        %1955 = vmatpush1.msra.mxu0 0.0
        %1956 = vmatprep.subr.mxu0 0.0
        %1957 = vmatpush1.msra.mxu0 0.0
        %1958 = vmatprep.subr.mxu0 0.0
        %1959 = vmatpush1.msra.mxu0 0.0
        %1960 = vmatprep.subr.mxu0 0.0
        %1961 = vmatpush1.msra.mxu0 0.0
        %1962 = vmatprep.subr.mxu0 0.0
        %1963 = vmatpush1.msra.mxu0 0.0
        %1964 = vmatprep.subr.mxu0 0.0
        %1965 = vmatpush1.msra.mxu0 0.0
        %1966 = vmatprep.subr.mxu0 0.0
        %1967 = vmatpush1.msra.mxu0 0.0
        %1968 = vmatprep.subr.mxu0 0.0
        %1969 = vmatpush1.msra.mxu0 0.0
        %1970 = vmatprep.subr.mxu0 0.0
        %1971 = vmatpush1.msra.mxu0 0.0
        %1972 = vmatprep.subr.mxu0 0.0
        %1973 = vmatpush1.msra.mxu0 0.0
        %1974 = vmatprep.subr.mxu0 0.0
        %1975 = vmatpush1.msra.mxu0 0.0
        %1976 = vmatprep.subr.mxu0 0.0
        %1977 = vmatpush1.msra.mxu0 %v1855
        %1978 = vmatprep.subr.mxu0 0.0
        %1979 = vmatpush1.msra.mxu0 %v1854
        %1980 = vmatprep.subr.mxu0 0.0
        %1981 = vmatpush1.msra.mxu0 %v1853
        %1982 = vmatprep.subr.mxu0 0.0
        %1983 = vmatpush1.msra.mxu0 %v1852
        %1984 = vmatprep.subr.mxu0 0.0
        %1985 = vmatpush2.msra.mxu0 0.0
        %1986 = vmatprep.subr.mxu0 0.0
        %1987 = vmatpush2.msra.mxu0 0.0
        %1988 = vmatprep.subr.mxu0 0.0
        %1989 = vmatpush2.msra.mxu0 0.0
        %1990 = vmatprep.subr.mxu0 0.0
        %1991 = vmatpush2.msra.mxu0 0.0
        %1992 = vmatprep.subr.mxu0 0.0
        %1993 = vmatpush2.msra.mxu0 0.0
        %1994 = vmatprep.subr.mxu0 0.0
        %1995 = vmatpush2.msra.mxu0 0.0
        %1996 = vmatprep.subr.mxu0 0.0
        %1997 = vmatpush2.msra.mxu0 0.0
        %1998 = vmatprep.subr.mxu0 0.0
        %1999 = vmatpush2.msra.mxu0 0.0
        %2000 = vmatprep.subr.mxu0 0.0
        %2001 = vmatpush2.msra.mxu0 0.0
        %2002 = vmatprep.subr.mxu0 0.0
        %2003 = vmatpush2.msra.mxu0 0.0
        %2004 = vmatprep.subr.mxu0 0.0
        %2005 = vmatpush2.msra.mxu0 0.0
        %2006 = vmatprep.subr.mxu0 0.0
        %2007 = vmatpush2.msra.mxu0 0.0
        %2008 = vmatprep.subr.mxu0 0.0
        %2009 = vmatpush2.msra.mxu0 0.0
        %2010 = vmatprep.subr.mxu0 0.0
        %2011 = vmatpush2.msra.mxu0 0.0
        %2012 = vmatprep.subr.mxu0 0.0
        %2013 = vmatpush2.msra.mxu0 0.0
        %2014 = vmatprep.subr.mxu0 0.0
        %2015 = vmatpush2.msra.mxu0 0.0
        %2016 = vmatprep.mubr.f32.mxu0 0.0
        %2017 = vmatmul.mubr.f32.gmra.mxu0 %v1857
        %v2018 = vpop.f32.mrf.mxu0
        %v2019 = vadd.f32 0.0, %v2018
        %v2020 = vpop.f32.mrf.mxu0
        %2021 = vmatprep.mubr.f32.mxu0 0.0
        %2022 = vmatmul.mubr.f32.gmra.mxu0 %v1860
        %v2023 = vpop.f32.mrf.mxu0
        %v2024 = vadd.f32 0.0, %v2023
        %v2025 = vpop.f32.mrf.mxu0
        %2026 = vmatprep.mubr.f32.mxu0 0.0
        %2027 = vmatmul.mubr.f32.gmra.mxu0 %v1863
        %v2028 = vpop.f32.mrf.mxu0
        %v2029 = vadd.f32 0.0, %v2028
        %v2030 = vpop.f32.mrf.mxu0
        %2031 = vmatprep.mubr.f32.mxu0 0.0
        %2032 = vmatmul.mubr.f32.gmra.mxu0 %v1866
        %v2033 = vpop.f32.mrf.mxu0
        %v2034 = vadd.f32 0.0, %v2033
        %v2035 = vpop.f32.mrf.mxu0
        %2036 = vmatprep.mubr.f32.mxu0 0.0
        %2037 = vmatmul.mubr.f32.gmra.mxu0 %v1869
        %v2038 = vpop.f32.mrf.mxu0
        %v2039 = vadd.f32 0.0, %v2038
        %v2040 = vpop.f32.mrf.mxu0
        %2041 = vmatprep.mubr.f32.mxu0 0.0
        %2042 = vmatmul.mubr.f32.gmra.mxu0 %v1872
        %v2043 = vpop.f32.mrf.mxu0
        %v2044 = vadd.f32 0.0, %v2043
        %v2045 = vpop.f32.mrf.mxu0
        %2046 = vmatprep.mubr.f32.mxu0 0.0
        %2047 = vmatmul.mubr.f32.gmra.mxu0 %v1875
        %v2048 = vpop.f32.mrf.mxu0
        %v2049 = vadd.f32 0.0, %v2048
        %v2050 = vpop.f32.mrf.mxu0
        %2051 = vmatprep.mubr.f32.mxu0 0.0
        %2052 = vmatmul.mubr.f32.gmra.mxu0 %v1878
        %v2053 = vpop.f32.mrf.mxu0
        %v2054 = vadd.f32 0.0, %v2053
        %v2055 = vpop.f32.mrf.mxu0
        %2056 = vmatprep.mubr.f32.mxu0 0.0
        %2057 = vmatmul.mubr.f32.gmra.mxu0 %v1881
        %v2058 = vpop.f32.mrf.mxu0
        %v2059 = vadd.f32 0.0, %v2058
        %v2060 = vpop.f32.mrf.mxu0
        %2061 = vmatprep.mubr.f32.mxu0 0.0
        %2062 = vmatmul.mubr.f32.gmra.mxu0 %v1884
        %v2063 = vpop.f32.mrf.mxu0
        %v2064 = vadd.f32 0.0, %v2063
        %v2065 = vpop.f32.mrf.mxu0
        %2066 = vmatprep.mubr.f32.mxu0 0.0
        %2067 = vmatmul.mubr.f32.gmra.mxu0 %v1887
        %v2068 = vpop.f32.mrf.mxu0
        %v2069 = vadd.f32 0.0, %v2068
        %v2070 = vpop.f32.mrf.mxu0
        %2071 = vmatprep.mubr.f32.mxu0 0.0
        %2072 = vmatmul.mubr.f32.gmra.mxu0 %v1890
        %v2073 = vpop.f32.mrf.mxu0
        %v2074 = vadd.f32 0.0, %v2073
        %v2075 = vpop.f32.mrf.mxu0
        %2076 = vmatprep.mubr.f32.mxu0 0.0
        %2077 = vmatmul.mubr.f32.gmra.mxu0 %v1893
        %v2078 = vpop.f32.mrf.mxu0
        %v2079 = vadd.f32 0.0, %v2078
        %v2080 = vpop.f32.mrf.mxu0
        %2081 = vmatprep.mubr.f32.mxu0 0.0
        %2082 = vmatmul.mubr.f32.gmra.mxu0 %v1896
        %v2083 = vpop.f32.mrf.mxu0
        %v2084 = vadd.f32 0.0, %v2083
        %v2085 = vpop.f32.mrf.mxu0
        %2086 = vmatprep.mubr.f32.mxu0 0.0
        %2087 = vmatmul.mubr.f32.gmra.mxu0 %v1899
        %v2088 = vpop.f32.mrf.mxu0
        %v2089 = vadd.f32 0.0, %v2088
        %v2090 = vpop.f32.mrf.mxu0
        %2091 = vmatprep.mubr.f32.mxu0 0.0
        %2092 = vmatmul.mubr.f32.gmra.mxu0 %v1902
        %v2093 = vpop.f32.mrf.mxu0
        %v2094 = vadd.f32 0.0, %v2093
        %v2095 = vpop.f32.mrf.mxu0
        %2096 = vmatprep.mubr.f32.mxu0 0.0
        %2097 = vmatmul.mubr.f32.gmra.mxu0 %v1905
        %v2098 = vpop.f32.mrf.mxu0
        %v2099 = vadd.f32 0.0, %v2098
        %v2100 = vpop.f32.mrf.mxu0
        %2101 = vmatprep.mubr.f32.mxu0 0.0
        %2102 = vmatmul.mubr.f32.gmra.mxu0 %v1908
        %v2103 = vpop.f32.mrf.mxu0
        %v2104 = vadd.f32 0.0, %v2103
        %v2105 = vpop.f32.mrf.mxu0
        %2106 = vmatprep.mubr.f32.mxu0 0.0
        %2107 = vmatmul.mubr.f32.gmra.mxu0 %v1911
        %v2108 = vpop.f32.mrf.mxu0
        %v2109 = vadd.f32 0.0, %v2108
        %v2110 = vpop.f32.mrf.mxu0
        %2111 = vmatprep.mubr.f32.mxu0 0.0
        %2112 = vmatmul.mubr.f32.gmra.mxu0 %v1914
        %v2113 = vpop.f32.mrf.mxu0
        %v2114 = vadd.f32 0.0, %v2113
        %v2115 = vpop.f32.mrf.mxu0
        %2116 = vmatprep.mubr.f32.mxu0 0.0
        %2117 = vmatmul.mubr.f32.gmra.mxu0 %v1917
        %v2118 = vpop.f32.mrf.mxu0
        %v2119 = vadd.f32 0.0, %v2118
        %v2120 = vpop.f32.mrf.mxu0
        %2121 = vmatprep.mubr.f32.mxu0 0.0
        %2122 = vmatmul.mubr.f32.gmra.mxu0 %v1920
        %v2123 = vpop.f32.mrf.mxu0
        %v2124 = vadd.f32 0.0, %v2123
        %v2125 = vpop.f32.mrf.mxu0
        %2126 = vmatprep.mubr.f32.mxu0 0.0
        %2127 = vmatmul.mubr.f32.gmra.mxu0 %v1923
        %v2128 = vpop.f32.mrf.mxu0
        %v2129 = vadd.f32 0.0, %v2128
        %v2130 = vpop.f32.mrf.mxu0
        %2131 = vmatprep.mubr.f32.mxu0 0.0
        %2132 = vmatmul.mubr.f32.gmra.mxu0 %v1926
        %v2133 = vpop.f32.mrf.mxu0
        %v2134 = vadd.f32 0.0, %v2133
        %v2135 = vpop.f32.mrf.mxu0
        %2136 = vmatprep.mubr.f32.mxu0 0.0
        %2137 = vmatmul.mubr.f32.gmra.mxu0 %v1929
        %v2138 = vpop.f32.mrf.mxu0
        %v2139 = vadd.f32 0.0, %v2138
        %v2140 = vpop.f32.mrf.mxu0
        %2141 = vmatprep.mubr.f32.mxu0 0.0
        %2142 = vmatmul.mubr.f32.gmra.mxu0 %v1932
        %v2143 = vpop.f32.mrf.mxu0
        %v2144 = vadd.f32 0.0, %v2143
        %v2145 = vpop.f32.mrf.mxu0
        %2146 = vmatprep.mubr.f32.mxu0 0.0
        %2147 = vmatmul.mubr.f32.gmra.mxu0 %v1935
        %v2148 = vpop.f32.mrf.mxu0
        %v2149 = vadd.f32 0.0, %v2148
        %v2150 = vpop.f32.mrf.mxu0
        %2151 = vmatprep.mubr.f32.mxu0 0.0
        %2152 = vmatmul.mubr.f32.gmra.mxu0 %v1938
        %v2153 = vpop.f32.mrf.mxu0
        %v2154 = vadd.f32 0.0, %v2153
        %v2155 = vpop.f32.mrf.mxu0
        %2156 = vmatprep.mubr.f32.mxu0 0.0
        %2157 = vmatmul.mubr.f32.gmra.mxu0 %v1941
        %v2158 = vpop.f32.mrf.mxu0
        %v2159 = vadd.f32 0.0, %v2158
        %v2160 = vpop.f32.mrf.mxu0
        %2161 = vmatprep.mubr.f32.mxu0 0.0
        %2162 = vmatmul.mubr.f32.gmra.mxu0 %v1944
        %v2163 = vpop.f32.mrf.mxu0
        %v2164 = vadd.f32 0.0, %v2163
        %v2165 = vpop.f32.mrf.mxu0
        %2166 = vmatprep.mubr.f32.mxu0 0.0
        %2167 = vmatmul.mubr.f32.gmra.mxu0 %v1947
        %v2168 = vpop.f32.mrf.mxu0
        %v2169 = vadd.f32 0.0, %v2168
        %v2170 = vpop.f32.mrf.mxu0
        %2171 = vmatprep.mubr.f32.mxu0 0.0
        %2172 = vmatmul.mubr.f32.gmra.mxu0 %v1950
        %v2173 = vpop.f32.mrf.mxu0
        %v2174 = vadd.f32 0.0, %v2173
        %v2175 = vpop.f32.mrf.mxu0
        %2176 = vdwg.mxu0
        %v2177 = vadd.f32 %v1819, %v2019
        %v2178 = vadd.f32 %v1820, %v2024
        %v2179 = vadd.f32 %v1821, %v2029
        %v2180 = vadd.f32 %v1822, %v2034
        %v2181 = vadd.f32 %v1823, %v2039
        %v2182 = vadd.f32 %v1824, %v2044
        %v2183 = vadd.f32 %v1825, %v2049
        %v2184 = vadd.f32 %v1826, %v2054
        %v2185 = vadd.f32 %v1827, %v2059
        %v2186 = vadd.f32 %v1828, %v2064
        %v2187 = vadd.f32 %v1829, %v2069
        %v2188 = vadd.f32 %v1830, %v2074
        %v2189 = vadd.f32 %v1831, %v2079
        %v2190 = vadd.f32 %v1832, %v2084
        %v2191 = vadd.f32 %v1833, %v2089
        %v2192 = vadd.f32 %v1834, %v2094
        %v2193 = vadd.f32 %v1835, %v2099
        %v2194 = vadd.f32 %v1836, %v2104
        %v2195 = vadd.f32 %v1837, %v2109
        %v2196 = vadd.f32 %v1838, %v2114
        %v2197 = vadd.f32 %v1839, %v2119
        %v2198 = vadd.f32 %v1840, %v2124
        %v2199 = vadd.f32 %v1841, %v2129
        %v2200 = vadd.f32 %v1842, %v2134
        %v2201 = vadd.f32 %v1843, %v2139
        %v2202 = vadd.f32 %v1844, %v2144
        %v2203 = vadd.f32 %v1845, %v2149
        %v2204 = vadd.f32 %v1846, %v2154
        %v2205 = vadd.f32 %v1847, %v2159
        %v2206 = vadd.f32 %v1848, %v2164
        %v2207 = vadd.f32 %v1849, %v2169
        %v2208 = vadd.f32 %v1850, %v2174
        %2209 = vst.msk [vmem:[#allocation3] sm:$0xff] %vm311, %v2177
        %2210 = vst.msk [vmem:[#allocation3 + $0x8] sm:$0xff] %vm311, %v2178
        %2211 = vst.msk [vmem:[#allocation3 + $0x10] sm:$0xff] %vm311, %v2179
        %2212 = vst.msk [vmem:[#allocation3 + $0x18] sm:$0xff] %vm311, %v2180
        %2213 = vst.msk [vmem:[#allocation3 + $0x20] sm:$0xff] %vm311, %v2181
        %2214 = vst.msk [vmem:[#allocation3 + $0x28] sm:$0xff] %vm311, %v2182
        %2215 = vst.msk [vmem:[#allocation3 + $0x30] sm:$0xff] %vm311, %v2183
        %2216 = vst.msk [vmem:[#allocation3 + $0x38] sm:$0xff] %vm311, %v2184
        %2217 = vst.msk [vmem:[#allocation3 + $0x40] sm:$0xff] %vm311, %v2185
        %2218 = vst.msk [vmem:[#allocation3 + $0x48] sm:$0xff] %vm311, %v2186
        %2219 = vst.msk [vmem:[#allocation3 + $0x50] sm:$0xff] %vm311, %v2187
        %2220 = vst.msk [vmem:[#allocation3 + $0x58] sm:$0xff] %vm311, %v2188
        %2221 = vst.msk [vmem:[#allocation3 + $0x60] sm:$0xff] %vm311, %v2189
        %2222 = vst.msk [vmem:[#allocation3 + $0x68] sm:$0xff] %vm311, %v2190
        %2223 = vst.msk [vmem:[#allocation3 + $0x70] sm:$0xff] %vm311, %v2191
        %2224 = vst.msk [vmem:[#allocation3 + $0x78] sm:$0xff] %vm311, %v2192
        %2225 = vst.msk [vmem:[#allocation3 + $0x80] sm:$0xff] %vm311, %v2193
        %2226 = vst.msk [vmem:[#allocation3 + $0x88] sm:$0xff] %vm311, %v2194
        %2227 = vst.msk [vmem:[#allocation3 + $0x90] sm:$0xff] %vm311, %v2195
        %2228 = vst.msk [vmem:[#allocation3 + $0x98] sm:$0xff] %vm311, %v2196
        %2229 = vst.msk [vmem:[#allocation3 + $0xa0] sm:$0xff] %vm311, %v2197
        %2230 = vst.msk [vmem:[#allocation3 + $0xa8] sm:$0xff] %vm311, %v2198
        %2231 = vst.msk [vmem:[#allocation3 + $0xb0] sm:$0xff] %vm311, %v2199
        %2232 = vst.msk [vmem:[#allocation3 + $0xb8] sm:$0xff] %vm311, %v2200
        %2233 = vst.msk [vmem:[#allocation3 + $0xc0] sm:$0xff] %vm311, %v2201
        %2234 = vst.msk [vmem:[#allocation3 + $0xc8] sm:$0xff] %vm311, %v2202
        %2235 = vst.msk [vmem:[#allocation3 + $0xd0] sm:$0xff] %vm311, %v2203
        %2236 = vst.msk [vmem:[#allocation3 + $0xd8] sm:$0xff] %vm311, %v2204
        %2237 = vst.msk [vmem:[#allocation3 + $0xe0] sm:$0xff] %vm311, %v2205
        %2238 = vst.msk [vmem:[#allocation3 + $0xe8] sm:$0xff] %vm311, %v2206
        %2239 = vst.msk [vmem:[#allocation3 + $0xf0] sm:$0xff] %vm311, %v2207
        %2240 = vst.msk [vmem:[#allocation3 + $0xf8] sm:$0xff] %vm311, %v2208
        %v2241 = vld [vmem:[#allocation3] sm:$0xff]
        %v2242 = vld [vmem:[#allocation3 + $0x8] sm:$0xff]
        %v2243 = vld [vmem:[#allocation3 + $0x10] sm:$0xff]
        %v2244 = vld [vmem:[#allocation3 + $0x18] sm:$0xff]
        %v2245 = vld [vmem:[#allocation3 + $0x20] sm:$0xff]
        %v2246 = vld [vmem:[#allocation3 + $0x28] sm:$0xff]
        %v2247 = vld [vmem:[#allocation3 + $0x30] sm:$0xff]
        %v2248 = vld [vmem:[#allocation3 + $0x38] sm:$0xff]
        %v2249 = vld [vmem:[#allocation3 + $0x40] sm:$0xff]
        %v2250 = vld [vmem:[#allocation3 + $0x48] sm:$0xff]
        %v2251 = vld [vmem:[#allocation3 + $0x50] sm:$0xff]
        %v2252 = vld [vmem:[#allocation3 + $0x58] sm:$0xff]
        %v2253 = vld [vmem:[#allocation3 + $0x60] sm:$0xff]
        %v2254 = vld [vmem:[#allocation3 + $0x68] sm:$0xff]
        %v2255 = vld [vmem:[#allocation3 + $0x70] sm:$0xff]
        %v2256 = vld [vmem:[#allocation3 + $0x78] sm:$0xff]
        %v2257 = vld [vmem:[#allocation3 + $0x80] sm:$0xff]
        %v2258 = vld [vmem:[#allocation3 + $0x88] sm:$0xff]
        %v2259 = vld [vmem:[#allocation3 + $0x90] sm:$0xff]
        %v2260 = vld [vmem:[#allocation3 + $0x98] sm:$0xff]
        %v2261 = vld [vmem:[#allocation3 + $0xa0] sm:$0xff]
        %v2262 = vld [vmem:[#allocation3 + $0xa8] sm:$0xff]
        %v2263 = vld [vmem:[#allocation3 + $0xb0] sm:$0xff]
        %v2264 = vld [vmem:[#allocation3 + $0xb8] sm:$0xff]
        %v2265 = vld [vmem:[#allocation3 + $0xc0] sm:$0xff]
        %v2266 = vld [vmem:[#allocation3 + $0xc8] sm:$0xff]
        %v2267 = vld [vmem:[#allocation3 + $0xd0] sm:$0xff]
        %v2268 = vld [vmem:[#allocation3 + $0xd8] sm:$0xff]
        %v2269 = vld [vmem:[#allocation3 + $0xe0] sm:$0xff]
        %v2270 = vld [vmem:[#allocation3 + $0xe8] sm:$0xff]
        %v2271 = vld [vmem:[#allocation3 + $0xf0] sm:$0xff]
        %v2272 = vld [vmem:[#allocation3 + $0xf8] sm:$0xff]
        %v2289 = vrot.slane %v1771, 1
        %v2290 = vrot.slane %v1772, 1
        %v2291 = vsel %vm861, %v2289, %v2290
        %v2292 = vrot.slane %v1773, 1
        %v2293 = vsel %vm861, %v2290, %v2292
        %v2294 = vrot.slane %v1774, 1
        %v2295 = vrot.slane %v1775, 1
        %v2296 = vsel %vm861, %v2294, %v2295
        %v2297 = vrot.slane %v1776, 1
        %v2298 = vsel %vm861, %v2295, %v2297
        %v2299 = vrot.slane %v1777, 1
        %v2300 = vrot.slane %v1778, 1
        %v2301 = vsel %vm861, %v2299, %v2300
        %v2302 = vrot.slane %v1779, 1
        %v2303 = vsel %vm861, %v2300, %v2302
        %v2304 = vrot.slane %v1780, 1
        %v2305 = vrot.slane %v1781, 1
        %v2306 = vsel %vm861, %v2304, %v2305
        %v2307 = vrot.slane %v1782, 1
        %v2308 = vsel %vm861, %v2305, %v2307
        %v2309 = vrot.slane %v1783, 1
        %v2310 = vrot.slane %v1784, 1
        %v2311 = vsel %vm861, %v2309, %v2310
        %v2312 = vrot.slane %v1785, 1
        %v2313 = vsel %vm861, %v2310, %v2312
        %v2314 = vrot.slane %v1786, 1
        %v2315 = vrot.slane %v1787, 1
        %v2316 = vsel %vm861, %v2314, %v2315
        %v2317 = vrot.slane %v1788, 1
        %v2318 = vsel %vm861, %v2315, %v2317
        %v2319 = vrot.slane %v1789, 1
        %v2320 = vrot.slane %v1790, 1
        %v2321 = vsel %vm861, %v2319, %v2320
        %v2322 = vrot.slane %v1791, 1
        %v2323 = vsel %vm861, %v2320, %v2322
        %v2324 = vrot.slane %v1792, 1
        %v2325 = vrot.slane %v1793, 1
        %v2326 = vsel %vm861, %v2324, %v2325
        %v2327 = vrot.slane %v1794, 1
        %v2328 = vsel %vm861, %v2325, %v2327
        %v2329 = vrot.slane %v1795, 1
        %v2330 = vrot.slane %v1796, 1
        %v2331 = vsel %vm861, %v2329, %v2330
        %v2332 = vrot.slane %v1797, 1
        %v2333 = vsel %vm861, %v2330, %v2332
        %v2334 = vrot.slane %v1798, 1
        %v2335 = vrot.slane %v1799, 1
        %v2336 = vsel %vm861, %v2334, %v2335
        %v2337 = vrot.slane %v1800, 1
        %v2338 = vsel %vm861, %v2335, %v2337
        %v2339 = vrot.slane %v1801, 1
        %v2340 = vrot.slane %v1802, 1
        %v2341 = vsel %vm861, %v2339, %v2340
        %v2342 = vrot.slane %v1803, 1
        %v2343 = vsel %vm861, %v2340, %v2342
        %v2344 = vrot.slane %v1804, 1
        %v2345 = vrot.slane %v1805, 1
        %v2346 = vsel %vm861, %v2344, %v2345
        %v2347 = vrot.slane %v1806, 1
        %v2348 = vsel %vm861, %v2345, %v2347
        %v2349 = vrot.slane %v1807, 1
        %v2350 = vrot.slane %v1808, 1
        %v2351 = vsel %vm861, %v2349, %v2350
        %v2352 = vrot.slane %v1809, 1
        %v2353 = vsel %vm861, %v2350, %v2352
        %v2354 = vrot.slane %v1810, 1
        %v2355 = vrot.slane %v1811, 1
        %v2356 = vsel %vm861, %v2354, %v2355
        %v2357 = vrot.slane %v1812, 1
        %v2358 = vsel %vm861, %v2355, %v2357
        %v2359 = vrot.slane %v1813, 1
        %v2360 = vrot.slane %v1814, 1
        %v2361 = vsel %vm861, %v2359, %v2360
        %v2362 = vrot.slane %v1815, 1
        %v2363 = vsel %vm861, %v2360, %v2362
        %v2364 = vrot.slane %v1816, 1
        %v2365 = vrot.slane %v1817, 1
        %v2366 = vsel %vm861, %v2364, %v2365
        %v2367 = vrot.slane %v1818, 1
        %v2368 = vsel %vm861, %v2365, %v2367
        %s2369 = scalar_lea.vmem [#allocation7], 128
        %v2370 = vld [vmem:[%s2369] sm:$0xff]
        %v2371 = vld [vmem:[%s2369 + $0x8] sm:$0xff]
        %v2372 = vld [vmem:[%s2369 + $0x10] sm:$0xff]
        %v2373 = vld [vmem:[%s2369 + $0x18] sm:$0xff]
        %v2374 = vsel %vm204, %v2291, 0
        %v2376 = vsel %vm204, %v2293, 0
        %v2378 = vsel %vm204, %v2296, 0
        %v2380 = vsel %vm204, %v2298, 0
        %v2382 = vsel %vm204, %v2301, 0
        %v2384 = vsel %vm204, %v2303, 0
        %v2386 = vsel %vm204, %v2306, 0
        %v2388 = vsel %vm204, %v2308, 0
        %v2390 = vsel %vm204, %v2311, 0
        %v2392 = vsel %vm204, %v2313, 0
        %v2394 = vsel %vm204, %v2316, 0
        %v2396 = vsel %vm204, %v2318, 0
        %v2398 = vsel %vm204, %v2321, 0
        %v2400 = vsel %vm204, %v2323, 0
        %v2402 = vsel %vm204, %v2326, 0
        %v2404 = vsel %vm204, %v2328, 0
        %v2406 = vsel %vm204, %v2331, 0
        %v2408 = vsel %vm204, %v2333, 0
        %v2410 = vsel %vm204, %v2336, 0
        %v2412 = vsel %vm204, %v2338, 0
        %v2414 = vsel %vm204, %v2341, 0
        %v2416 = vsel %vm204, %v2343, 0
        %v2418 = vsel %vm204, %v2346, 0
        %v2420 = vsel %vm204, %v2348, 0
        %v2422 = vsel %vm204, %v2351, 0
        %v2424 = vsel %vm204, %v2353, 0
        %v2426 = vsel %vm204, %v2356, 0
        %v2428 = vsel %vm204, %v2358, 0
        %v2430 = vsel %vm204, %v2361, 0
        %v2432 = vsel %vm204, %v2363, 0
        %v2434 = vsel %vm204, %v2366, 0
        %v2436 = vsel %vm204, %v2368, 0
        %2438 = vmatprep.subr.mxu0 0.0
        %2439 = vmatpush1.msra.mxu0 0.0
        %2440 = vmatprep.subr.mxu0 0.0
        %2441 = vmatpush1.msra.mxu0 0.0
        %2442 = vmatprep.subr.mxu0 0.0
        %2443 = vmatpush1.msra.mxu0 0.0
        %2444 = vmatprep.subr.mxu0 0.0
        %2445 = vmatpush1.msra.mxu0 0.0
        %2446 = vmatprep.subr.mxu0 0.0
        %2447 = vmatpush1.msra.mxu0 0.0
        %2448 = vmatprep.subr.mxu0 0.0
        %2449 = vmatpush1.msra.mxu0 0.0
        %2450 = vmatprep.subr.mxu0 0.0
        %2451 = vmatpush1.msra.mxu0 0.0
        %2452 = vmatprep.subr.mxu0 0.0
        %2453 = vmatpush1.msra.mxu0 0.0
        %2454 = vmatprep.subr.mxu0 0.0
        %2455 = vmatpush1.msra.mxu0 0.0
        %2456 = vmatprep.subr.mxu0 0.0
        %2457 = vmatpush1.msra.mxu0 0.0
        %2458 = vmatprep.subr.mxu0 0.0
        %2459 = vmatpush1.msra.mxu0 0.0
        %2460 = vmatprep.subr.mxu0 0.0
        %2461 = vmatpush1.msra.mxu0 0.0
        %2462 = vmatprep.subr.mxu0 0.0
        %2463 = vmatpush1.msra.mxu0 %v2373
        %2464 = vmatprep.subr.mxu0 0.0
        %2465 = vmatpush1.msra.mxu0 %v2372
        %2466 = vmatprep.subr.mxu0 0.0
        %2467 = vmatpush1.msra.mxu0 %v2371
        %2468 = vmatprep.subr.mxu0 0.0
        %2469 = vmatpush1.msra.mxu0 %v2370
        %2470 = vmatprep.subr.mxu0 0.0
        %2471 = vmatpush2.msra.mxu0 0.0
        %2472 = vmatprep.subr.mxu0 0.0
        %2473 = vmatpush2.msra.mxu0 0.0
        %2474 = vmatprep.subr.mxu0 0.0
        %2475 = vmatpush2.msra.mxu0 0.0
        %2476 = vmatprep.subr.mxu0 0.0
        %2477 = vmatpush2.msra.mxu0 0.0
        %2478 = vmatprep.subr.mxu0 0.0
        %2479 = vmatpush2.msra.mxu0 0.0
        %2480 = vmatprep.subr.mxu0 0.0
        %2481 = vmatpush2.msra.mxu0 0.0
        %2482 = vmatprep.subr.mxu0 0.0
        %2483 = vmatpush2.msra.mxu0 0.0
        %2484 = vmatprep.subr.mxu0 0.0
        %2485 = vmatpush2.msra.mxu0 0.0
        %2486 = vmatprep.subr.mxu0 0.0
        %2487 = vmatpush2.msra.mxu0 0.0
        %2488 = vmatprep.subr.mxu0 0.0
        %2489 = vmatpush2.msra.mxu0 0.0
        %2490 = vmatprep.subr.mxu0 0.0
        %2491 = vmatpush2.msra.mxu0 0.0
        %2492 = vmatprep.subr.mxu0 0.0
        %2493 = vmatpush2.msra.mxu0 0.0
        %2494 = vmatprep.subr.mxu0 0.0
        %2495 = vmatpush2.msra.mxu0 0.0
        %2496 = vmatprep.subr.mxu0 0.0
        %2497 = vmatpush2.msra.mxu0 0.0
        %2498 = vmatprep.subr.mxu0 0.0
        %2499 = vmatpush2.msra.mxu0 0.0
        %2500 = vmatprep.subr.mxu0 0.0
        %2501 = vmatpush2.msra.mxu0 0.0
        %2502 = vmatprep.mubr.f32.mxu0 0.0
        %2503 = vmatmul.mubr.f32.gmra.mxu0 %v2374
        %v2504 = vpop.f32.mrf.mxu0
        %v2505 = vadd.f32 0.0, %v2504
        %v2506 = vpop.f32.mrf.mxu0
        %2507 = vmatprep.mubr.f32.mxu0 0.0
        %2508 = vmatmul.mubr.f32.gmra.mxu0 %v2376
        %v2509 = vpop.f32.mrf.mxu0
        %v2510 = vadd.f32 0.0, %v2509
        %v2511 = vpop.f32.mrf.mxu0
        %2512 = vmatprep.mubr.f32.mxu0 0.0
        %2513 = vmatmul.mubr.f32.gmra.mxu0 %v2378
        %v2514 = vpop.f32.mrf.mxu0
        %v2515 = vadd.f32 0.0, %v2514
        %v2516 = vpop.f32.mrf.mxu0
        %2517 = vmatprep.mubr.f32.mxu0 0.0
        %2518 = vmatmul.mubr.f32.gmra.mxu0 %v2380
        %v2519 = vpop.f32.mrf.mxu0
        %v2520 = vadd.f32 0.0, %v2519
        %v2521 = vpop.f32.mrf.mxu0
        %2522 = vmatprep.mubr.f32.mxu0 0.0
        %2523 = vmatmul.mubr.f32.gmra.mxu0 %v2382
        %v2524 = vpop.f32.mrf.mxu0
        %v2525 = vadd.f32 0.0, %v2524
        %v2526 = vpop.f32.mrf.mxu0
        %2527 = vmatprep.mubr.f32.mxu0 0.0
        %2528 = vmatmul.mubr.f32.gmra.mxu0 %v2384
        %v2529 = vpop.f32.mrf.mxu0
        %v2530 = vadd.f32 0.0, %v2529
        %v2531 = vpop.f32.mrf.mxu0
        %2532 = vmatprep.mubr.f32.mxu0 0.0
        %2533 = vmatmul.mubr.f32.gmra.mxu0 %v2386
        %v2534 = vpop.f32.mrf.mxu0
        %v2535 = vadd.f32 0.0, %v2534
        %v2536 = vpop.f32.mrf.mxu0
        %2537 = vmatprep.mubr.f32.mxu0 0.0
        %2538 = vmatmul.mubr.f32.gmra.mxu0 %v2388
        %v2539 = vpop.f32.mrf.mxu0
        %v2540 = vadd.f32 0.0, %v2539
        %v2541 = vpop.f32.mrf.mxu0
        %2542 = vmatprep.mubr.f32.mxu0 0.0
        %2543 = vmatmul.mubr.f32.gmra.mxu0 %v2390
        %v2544 = vpop.f32.mrf.mxu0
        %v2545 = vadd.f32 0.0, %v2544
        %v2546 = vpop.f32.mrf.mxu0
        %2547 = vmatprep.mubr.f32.mxu0 0.0
        %2548 = vmatmul.mubr.f32.gmra.mxu0 %v2392
        %v2549 = vpop.f32.mrf.mxu0
        %v2550 = vadd.f32 0.0, %v2549
        %v2551 = vpop.f32.mrf.mxu0
        %2552 = vmatprep.mubr.f32.mxu0 0.0
        %2553 = vmatmul.mubr.f32.gmra.mxu0 %v2394
        %v2554 = vpop.f32.mrf.mxu0
        %v2555 = vadd.f32 0.0, %v2554
        %v2556 = vpop.f32.mrf.mxu0
        %2557 = vmatprep.mubr.f32.mxu0 0.0
        %2558 = vmatmul.mubr.f32.gmra.mxu0 %v2396
        %v2559 = vpop.f32.mrf.mxu0
        %v2560 = vadd.f32 0.0, %v2559
        %v2561 = vpop.f32.mrf.mxu0
        %2562 = vmatprep.mubr.f32.mxu0 0.0
        %2563 = vmatmul.mubr.f32.gmra.mxu0 %v2398
        %v2564 = vpop.f32.mrf.mxu0
        %v2565 = vadd.f32 0.0, %v2564
        %v2566 = vpop.f32.mrf.mxu0
        %2567 = vmatprep.mubr.f32.mxu0 0.0
        %2568 = vmatmul.mubr.f32.gmra.mxu0 %v2400
        %v2569 = vpop.f32.mrf.mxu0
        %v2570 = vadd.f32 0.0, %v2569
        %v2571 = vpop.f32.mrf.mxu0
        %2572 = vmatprep.mubr.f32.mxu0 0.0
        %2573 = vmatmul.mubr.f32.gmra.mxu0 %v2402
        %v2574 = vpop.f32.mrf.mxu0
        %v2575 = vadd.f32 0.0, %v2574
        %v2576 = vpop.f32.mrf.mxu0
        %2577 = vmatprep.mubr.f32.mxu0 0.0
        %2578 = vmatmul.mubr.f32.gmra.mxu0 %v2404
        %v2579 = vpop.f32.mrf.mxu0
        %v2580 = vadd.f32 0.0, %v2579
        %v2581 = vpop.f32.mrf.mxu0
        %2582 = vmatprep.mubr.f32.mxu0 0.0
        %2583 = vmatmul.mubr.f32.gmra.mxu0 %v2406
        %v2584 = vpop.f32.mrf.mxu0
        %v2585 = vadd.f32 0.0, %v2584
        %v2586 = vpop.f32.mrf.mxu0
        %2587 = vmatprep.mubr.f32.mxu0 0.0
        %2588 = vmatmul.mubr.f32.gmra.mxu0 %v2408
        %v2589 = vpop.f32.mrf.mxu0
        %v2590 = vadd.f32 0.0, %v2589
        %v2591 = vpop.f32.mrf.mxu0
        %2592 = vmatprep.mubr.f32.mxu0 0.0
        %2593 = vmatmul.mubr.f32.gmra.mxu0 %v2410
        %v2594 = vpop.f32.mrf.mxu0
        %v2595 = vadd.f32 0.0, %v2594
        %v2596 = vpop.f32.mrf.mxu0
        %2597 = vmatprep.mubr.f32.mxu0 0.0
        %2598 = vmatmul.mubr.f32.gmra.mxu0 %v2412
        %v2599 = vpop.f32.mrf.mxu0
        %v2600 = vadd.f32 0.0, %v2599
        %v2601 = vpop.f32.mrf.mxu0
        %2602 = vmatprep.mubr.f32.mxu0 0.0
        %2603 = vmatmul.mubr.f32.gmra.mxu0 %v2414
        %v2604 = vpop.f32.mrf.mxu0
        %v2605 = vadd.f32 0.0, %v2604
        %v2606 = vpop.f32.mrf.mxu0
        %2607 = vmatprep.mubr.f32.mxu0 0.0
        %2608 = vmatmul.mubr.f32.gmra.mxu0 %v2416
        %v2609 = vpop.f32.mrf.mxu0
        %v2610 = vadd.f32 0.0, %v2609
        %v2611 = vpop.f32.mrf.mxu0
        %2612 = vmatprep.mubr.f32.mxu0 0.0
        %2613 = vmatmul.mubr.f32.gmra.mxu0 %v2418
        %v2614 = vpop.f32.mrf.mxu0
        %v2615 = vadd.f32 0.0, %v2614
        %v2616 = vpop.f32.mrf.mxu0
        %2617 = vmatprep.mubr.f32.mxu0 0.0
        %2618 = vmatmul.mubr.f32.gmra.mxu0 %v2420
        %v2619 = vpop.f32.mrf.mxu0
        %v2620 = vadd.f32 0.0, %v2619
        %v2621 = vpop.f32.mrf.mxu0
        %2622 = vmatprep.mubr.f32.mxu0 0.0
        %2623 = vmatmul.mubr.f32.gmra.mxu0 %v2422
        %v2624 = vpop.f32.mrf.mxu0
        %v2625 = vadd.f32 0.0, %v2624
        %v2626 = vpop.f32.mrf.mxu0
        %2627 = vmatprep.mubr.f32.mxu0 0.0
        %2628 = vmatmul.mubr.f32.gmra.mxu0 %v2424
        %v2629 = vpop.f32.mrf.mxu0
        %v2630 = vadd.f32 0.0, %v2629
        %v2631 = vpop.f32.mrf.mxu0
        %2632 = vmatprep.mubr.f32.mxu0 0.0
        %2633 = vmatmul.mubr.f32.gmra.mxu0 %v2426
        %v2634 = vpop.f32.mrf.mxu0
        %v2635 = vadd.f32 0.0, %v2634
        %v2636 = vpop.f32.mrf.mxu0
        %2637 = vmatprep.mubr.f32.mxu0 0.0
        %2638 = vmatmul.mubr.f32.gmra.mxu0 %v2428
        %v2639 = vpop.f32.mrf.mxu0
        %v2640 = vadd.f32 0.0, %v2639
        %v2641 = vpop.f32.mrf.mxu0
        %2642 = vmatprep.mubr.f32.mxu0 0.0
        %2643 = vmatmul.mubr.f32.gmra.mxu0 %v2430
        %v2644 = vpop.f32.mrf.mxu0
        %v2645 = vadd.f32 0.0, %v2644
        %v2646 = vpop.f32.mrf.mxu0
        %2647 = vmatprep.mubr.f32.mxu0 0.0
        %2648 = vmatmul.mubr.f32.gmra.mxu0 %v2432
        %v2649 = vpop.f32.mrf.mxu0
        %v2650 = vadd.f32 0.0, %v2649
        %v2651 = vpop.f32.mrf.mxu0
        %2652 = vmatprep.mubr.f32.mxu0 0.0
        %2653 = vmatmul.mubr.f32.gmra.mxu0 %v2434
        %v2654 = vpop.f32.mrf.mxu0
        %v2655 = vadd.f32 0.0, %v2654
        %v2656 = vpop.f32.mrf.mxu0
        %2657 = vmatprep.mubr.f32.mxu0 0.0
        %2658 = vmatmul.mubr.f32.gmra.mxu0 %v2436
        %v2659 = vpop.f32.mrf.mxu0
        %v2660 = vadd.f32 0.0, %v2659
        %v2661 = vpop.f32.mrf.mxu0
        %2662 = vdwg.mxu0
        %v2663 = vadd.f32 %v2241, %v2505
        %v2664 = vadd.f32 %v2242, %v2510
        %v2665 = vadd.f32 %v2243, %v2515
        %v2666 = vadd.f32 %v2244, %v2520
        %v2667 = vadd.f32 %v2245, %v2525
        %v2668 = vadd.f32 %v2246, %v2530
        %v2669 = vadd.f32 %v2247, %v2535
        %v2670 = vadd.f32 %v2248, %v2540
        %v2671 = vadd.f32 %v2249, %v2545
        %v2672 = vadd.f32 %v2250, %v2550
        %v2673 = vadd.f32 %v2251, %v2555
        %v2674 = vadd.f32 %v2252, %v2560
        %v2675 = vadd.f32 %v2253, %v2565
        %v2676 = vadd.f32 %v2254, %v2570
        %v2677 = vadd.f32 %v2255, %v2575
        %v2678 = vadd.f32 %v2256, %v2580
        %v2679 = vadd.f32 %v2257, %v2585
        %v2680 = vadd.f32 %v2258, %v2590
        %v2681 = vadd.f32 %v2259, %v2595
        %v2682 = vadd.f32 %v2260, %v2600
        %v2683 = vadd.f32 %v2261, %v2605
        %v2684 = vadd.f32 %v2262, %v2610
        %v2685 = vadd.f32 %v2263, %v2615
        %v2686 = vadd.f32 %v2264, %v2620
        %v2687 = vadd.f32 %v2265, %v2625
        %v2688 = vadd.f32 %v2266, %v2630
        %v2689 = vadd.f32 %v2267, %v2635
        %v2690 = vadd.f32 %v2268, %v2640
        %v2691 = vadd.f32 %v2269, %v2645
        %v2692 = vadd.f32 %v2270, %v2650
        %v2693 = vadd.f32 %v2271, %v2655
        %v2694 = vadd.f32 %v2272, %v2660
        %2695 = vst.msk [vmem:[#allocation3] sm:$0xff] %vm311, %v2663
        %2696 = vst.msk [vmem:[#allocation3 + $0x8] sm:$0xff] %vm311, %v2664
        %2697 = vst.msk [vmem:[#allocation3 + $0x10] sm:$0xff] %vm311, %v2665
        %2698 = vst.msk [vmem:[#allocation3 + $0x18] sm:$0xff] %vm311, %v2666
        %2699 = vst.msk [vmem:[#allocation3 + $0x20] sm:$0xff] %vm311, %v2667
        %2700 = vst.msk [vmem:[#allocation3 + $0x28] sm:$0xff] %vm311, %v2668
        %2701 = vst.msk [vmem:[#allocation3 + $0x30] sm:$0xff] %vm311, %v2669
        %2702 = vst.msk [vmem:[#allocation3 + $0x38] sm:$0xff] %vm311, %v2670
        %2703 = vst.msk [vmem:[#allocation3 + $0x40] sm:$0xff] %vm311, %v2671
        %2704 = vst.msk [vmem:[#allocation3 + $0x48] sm:$0xff] %vm311, %v2672
        %2705 = vst.msk [vmem:[#allocation3 + $0x50] sm:$0xff] %vm311, %v2673
        %2706 = vst.msk [vmem:[#allocation3 + $0x58] sm:$0xff] %vm311, %v2674
        %2707 = vst.msk [vmem:[#allocation3 + $0x60] sm:$0xff] %vm311, %v2675
        %2708 = vst.msk [vmem:[#allocation3 + $0x68] sm:$0xff] %vm311, %v2676
        %2709 = vst.msk [vmem:[#allocation3 + $0x70] sm:$0xff] %vm311, %v2677
        %2710 = vst.msk [vmem:[#allocation3 + $0x78] sm:$0xff] %vm311, %v2678
        %2711 = vst.msk [vmem:[#allocation3 + $0x80] sm:$0xff] %vm311, %v2679
        %2712 = vst.msk [vmem:[#allocation3 + $0x88] sm:$0xff] %vm311, %v2680
        %2713 = vst.msk [vmem:[#allocation3 + $0x90] sm:$0xff] %vm311, %v2681
        %2714 = vst.msk [vmem:[#allocation3 + $0x98] sm:$0xff] %vm311, %v2682
        %2715 = vst.msk [vmem:[#allocation3 + $0xa0] sm:$0xff] %vm311, %v2683
        %2716 = vst.msk [vmem:[#allocation3 + $0xa8] sm:$0xff] %vm311, %v2684
        %2717 = vst.msk [vmem:[#allocation3 + $0xb0] sm:$0xff] %vm311, %v2685
        %2718 = vst.msk [vmem:[#allocation3 + $0xb8] sm:$0xff] %vm311, %v2686
        %2719 = vst.msk [vmem:[#allocation3 + $0xc0] sm:$0xff] %vm311, %v2687
        %2720 = vst.msk [vmem:[#allocation3 + $0xc8] sm:$0xff] %vm311, %v2688
        %2721 = vst.msk [vmem:[#allocation3 + $0xd0] sm:$0xff] %vm311, %v2689
        %2722 = vst.msk [vmem:[#allocation3 + $0xd8] sm:$0xff] %vm311, %v2690
        %2723 = vst.msk [vmem:[#allocation3 + $0xe0] sm:$0xff] %vm311, %v2691
        %2724 = vst.msk [vmem:[#allocation3 + $0xe8] sm:$0xff] %vm311, %v2692
        %2725 = vst.msk [vmem:[#allocation3 + $0xf0] sm:$0xff] %vm311, %v2693
        %2726 = vst.msk [vmem:[#allocation3 + $0xf8] sm:$0xff] %vm311, %v2694
        %v2727 = vld [vmem:[#allocation3] sm:$0xff]
        %v2728 = vld [vmem:[#allocation3 + $0x8] sm:$0xff]
        %v2729 = vld [vmem:[#allocation3 + $0x10] sm:$0xff]
        %v2730 = vld [vmem:[#allocation3 + $0x18] sm:$0xff]
        %v2731 = vld [vmem:[#allocation3 + $0x20] sm:$0xff]
        %v2732 = vld [vmem:[#allocation3 + $0x28] sm:$0xff]
        %v2733 = vld [vmem:[#allocation3 + $0x30] sm:$0xff]
        %v2734 = vld [vmem:[#allocation3 + $0x38] sm:$0xff]
        %v2735 = vld [vmem:[#allocation3 + $0x40] sm:$0xff]
        %v2736 = vld [vmem:[#allocation3 + $0x48] sm:$0xff]
        %v2737 = vld [vmem:[#allocation3 + $0x50] sm:$0xff]
        %v2738 = vld [vmem:[#allocation3 + $0x58] sm:$0xff]
        %v2739 = vld [vmem:[#allocation3 + $0x60] sm:$0xff]
        %v2740 = vld [vmem:[#allocation3 + $0x68] sm:$0xff]
        %v2741 = vld [vmem:[#allocation3 + $0x70] sm:$0xff]
        %v2742 = vld [vmem:[#allocation3 + $0x78] sm:$0xff]
        %v2743 = vld [vmem:[#allocation3 + $0x80] sm:$0xff]
        %v2744 = vld [vmem:[#allocation3 + $0x88] sm:$0xff]
        %v2745 = vld [vmem:[#allocation3 + $0x90] sm:$0xff]
        %v2746 = vld [vmem:[#allocation3 + $0x98] sm:$0xff]
        %v2747 = vld [vmem:[#allocation3 + $0xa0] sm:$0xff]
        %v2748 = vld [vmem:[#allocation3 + $0xa8] sm:$0xff]
        %v2749 = vld [vmem:[#allocation3 + $0xb0] sm:$0xff]
        %v2750 = vld [vmem:[#allocation3 + $0xb8] sm:$0xff]
        %v2751 = vld [vmem:[#allocation3 + $0xc0] sm:$0xff]
        %v2752 = vld [vmem:[#allocation3 + $0xc8] sm:$0xff]
        %v2753 = vld [vmem:[#allocation3 + $0xd0] sm:$0xff]
        %v2754 = vld [vmem:[#allocation3 + $0xd8] sm:$0xff]
        %v2755 = vld [vmem:[#allocation3 + $0xe0] sm:$0xff]
        %v2756 = vld [vmem:[#allocation3 + $0xe8] sm:$0xff]
        %v2757 = vld [vmem:[#allocation3 + $0xf0] sm:$0xff]
        %v2758 = vld [vmem:[#allocation3 + $0xf8] sm:$0xff]
        %v2759 = vrot.slane %v1771, 2
        %v2760 = vrot.slane %v1772, 2
        %v2761 = vsel %vm1332, %v2759, %v2760
        %v2762 = vrot.slane %v1773, 2
        %v2763 = vsel %vm1332, %v2760, %v2762
        %v2764 = vrot.slane %v1774, 2
        %v2765 = vrot.slane %v1775, 2
        %v2766 = vsel %vm1332, %v2764, %v2765
        %v2767 = vrot.slane %v1776, 2
        %v2768 = vsel %vm1332, %v2765, %v2767
        %v2769 = vrot.slane %v1777, 2
        %v2770 = vrot.slane %v1778, 2
        %v2771 = vsel %vm1332, %v2769, %v2770
        %v2772 = vrot.slane %v1779, 2
        %v2773 = vsel %vm1332, %v2770, %v2772
        %v2774 = vrot.slane %v1780, 2
        %v2775 = vrot.slane %v1781, 2
        %v2776 = vsel %vm1332, %v2774, %v2775
        %v2777 = vrot.slane %v1782, 2
        %v2778 = vsel %vm1332, %v2775, %v2777
        %v2779 = vrot.slane %v1783, 2
        %v2780 = vrot.slane %v1784, 2
        %v2781 = vsel %vm1332, %v2779, %v2780
        %v2782 = vrot.slane %v1785, 2
        %v2783 = vsel %vm1332, %v2780, %v2782
        %v2784 = vrot.slane %v1786, 2
        %v2785 = vrot.slane %v1787, 2
        %v2786 = vsel %vm1332, %v2784, %v2785
        %v2787 = vrot.slane %v1788, 2
        %v2788 = vsel %vm1332, %v2785, %v2787
        %v2789 = vrot.slane %v1789, 2
        %v2790 = vrot.slane %v1790, 2
        %v2791 = vsel %vm1332, %v2789, %v2790
        %v2792 = vrot.slane %v1791, 2
        %v2793 = vsel %vm1332, %v2790, %v2792
        %v2794 = vrot.slane %v1792, 2
        %v2795 = vrot.slane %v1793, 2
        %v2796 = vsel %vm1332, %v2794, %v2795
        %v2797 = vrot.slane %v1794, 2
        %v2798 = vsel %vm1332, %v2795, %v2797
        %v2799 = vrot.slane %v1795, 2
        %v2800 = vrot.slane %v1796, 2
        %v2801 = vsel %vm1332, %v2799, %v2800
        %v2802 = vrot.slane %v1797, 2
        %v2803 = vsel %vm1332, %v2800, %v2802
        %v2804 = vrot.slane %v1798, 2
        %v2805 = vrot.slane %v1799, 2
        %v2806 = vsel %vm1332, %v2804, %v2805
        %v2807 = vrot.slane %v1800, 2
        %v2808 = vsel %vm1332, %v2805, %v2807
        %v2809 = vrot.slane %v1801, 2
        %v2810 = vrot.slane %v1802, 2
        %v2811 = vsel %vm1332, %v2809, %v2810
        %v2812 = vrot.slane %v1803, 2
        %v2813 = vsel %vm1332, %v2810, %v2812
        %v2814 = vrot.slane %v1804, 2
        %v2815 = vrot.slane %v1805, 2
        %v2816 = vsel %vm1332, %v2814, %v2815
        %v2817 = vrot.slane %v1806, 2
        %v2818 = vsel %vm1332, %v2815, %v2817
        %v2819 = vrot.slane %v1807, 2
        %v2820 = vrot.slane %v1808, 2
        %v2821 = vsel %vm1332, %v2819, %v2820
        %v2822 = vrot.slane %v1809, 2
        %v2823 = vsel %vm1332, %v2820, %v2822
        %v2824 = vrot.slane %v1810, 2
        %v2825 = vrot.slane %v1811, 2
        %v2826 = vsel %vm1332, %v2824, %v2825
        %v2827 = vrot.slane %v1812, 2
        %v2828 = vsel %vm1332, %v2825, %v2827
        %v2829 = vrot.slane %v1813, 2
        %v2830 = vrot.slane %v1814, 2
        %v2831 = vsel %vm1332, %v2829, %v2830
        %v2832 = vrot.slane %v1815, 2
        %v2833 = vsel %vm1332, %v2830, %v2832
        %v2834 = vrot.slane %v1816, 2
        %v2835 = vrot.slane %v1817, 2
        %v2836 = vsel %vm1332, %v2834, %v2835
        %v2837 = vrot.slane %v1818, 2
        %v2838 = vsel %vm1332, %v2835, %v2837
        %s2839 = scalar_lea.vmem [#allocation7], 160
        %v2840 = vld [vmem:[%s2839] sm:$0xff]
        %v2841 = vld [vmem:[%s2839 + $0x8] sm:$0xff]
        %v2842 = vld [vmem:[%s2839 + $0x10] sm:$0xff]
        %v2843 = vld [vmem:[%s2839 + $0x18] sm:$0xff]
        %v2844 = vsel %vm204, %v2761, 0
        %v2846 = vsel %vm204, %v2763, 0
        %v2848 = vsel %vm204, %v2766, 0
        %v2850 = vsel %vm204, %v2768, 0
        %v2852 = vsel %vm204, %v2771, 0
        %v2854 = vsel %vm204, %v2773, 0
        %v2856 = vsel %vm204, %v2776, 0
        %v2858 = vsel %vm204, %v2778, 0
        %v2860 = vsel %vm204, %v2781, 0
        %v2862 = vsel %vm204, %v2783, 0
        %v2864 = vsel %vm204, %v2786, 0
        %v2866 = vsel %vm204, %v2788, 0
        %v2868 = vsel %vm204, %v2791, 0
        %v2870 = vsel %vm204, %v2793, 0
        %v2872 = vsel %vm204, %v2796, 0
        %v2874 = vsel %vm204, %v2798, 0
        %v2876 = vsel %vm204, %v2801, 0
        %v2878 = vsel %vm204, %v2803, 0
        %v2880 = vsel %vm204, %v2806, 0
        %v2882 = vsel %vm204, %v2808, 0
        %v2884 = vsel %vm204, %v2811, 0
        %v2886 = vsel %vm204, %v2813, 0
        %v2888 = vsel %vm204, %v2816, 0
        %v2890 = vsel %vm204, %v2818, 0
        %v2892 = vsel %vm204, %v2821, 0
        %v2894 = vsel %vm204, %v2823, 0
        %v2896 = vsel %vm204, %v2826, 0
        %v2898 = vsel %vm204, %v2828, 0
        %v2900 = vsel %vm204, %v2831, 0
        %v2902 = vsel %vm204, %v2833, 0
        %v2904 = vsel %vm204, %v2836, 0
        %v2906 = vsel %vm204, %v2838, 0
        %2908 = vmatprep.subr.mxu0 0.0
        %2909 = vmatpush1.msra.mxu0 0.0
        %2910 = vmatprep.subr.mxu0 0.0
        %2911 = vmatpush1.msra.mxu0 0.0
        %2912 = vmatprep.subr.mxu0 0.0
        %2913 = vmatpush1.msra.mxu0 0.0
        %2914 = vmatprep.subr.mxu0 0.0
        %2915 = vmatpush1.msra.mxu0 0.0
        %2916 = vmatprep.subr.mxu0 0.0
        %2917 = vmatpush1.msra.mxu0 0.0
        %2918 = vmatprep.subr.mxu0 0.0
        %2919 = vmatpush1.msra.mxu0 0.0
        %2920 = vmatprep.subr.mxu0 0.0
        %2921 = vmatpush1.msra.mxu0 0.0
        %2922 = vmatprep.subr.mxu0 0.0
        %2923 = vmatpush1.msra.mxu0 0.0
        %2924 = vmatprep.subr.mxu0 0.0
        %2925 = vmatpush1.msra.mxu0 0.0
        %2926 = vmatprep.subr.mxu0 0.0
        %2927 = vmatpush1.msra.mxu0 0.0
        %2928 = vmatprep.subr.mxu0 0.0
        %2929 = vmatpush1.msra.mxu0 0.0
        %2930 = vmatprep.subr.mxu0 0.0
        %2931 = vmatpush1.msra.mxu0 0.0
        %2932 = vmatprep.subr.mxu0 0.0
        %2933 = vmatpush1.msra.mxu0 %v2843
        %2934 = vmatprep.subr.mxu0 0.0
        %2935 = vmatpush1.msra.mxu0 %v2842
        %2936 = vmatprep.subr.mxu0 0.0
        %2937 = vmatpush1.msra.mxu0 %v2841
        %2938 = vmatprep.subr.mxu0 0.0
        %2939 = vmatpush1.msra.mxu0 %v2840
        %2940 = vmatprep.subr.mxu0 0.0
        %2941 = vmatpush2.msra.mxu0 0.0
        %2942 = vmatprep.subr.mxu0 0.0
        %2943 = vmatpush2.msra.mxu0 0.0
        %2944 = vmatprep.subr.mxu0 0.0
        %2945 = vmatpush2.msra.mxu0 0.0
        %2946 = vmatprep.subr.mxu0 0.0
        %2947 = vmatpush2.msra.mxu0 0.0
        %2948 = vmatprep.subr.mxu0 0.0
        %2949 = vmatpush2.msra.mxu0 0.0
        %2950 = vmatprep.subr.mxu0 0.0
        %2951 = vmatpush2.msra.mxu0 0.0
        %2952 = vmatprep.subr.mxu0 0.0
        %2953 = vmatpush2.msra.mxu0 0.0
        %2954 = vmatprep.subr.mxu0 0.0
        %2955 = vmatpush2.msra.mxu0 0.0
        %2956 = vmatprep.subr.mxu0 0.0
        %2957 = vmatpush2.msra.mxu0 0.0
        %2958 = vmatprep.subr.mxu0 0.0
        %2959 = vmatpush2.msra.mxu0 0.0
        %2960 = vmatprep.subr.mxu0 0.0
        %2961 = vmatpush2.msra.mxu0 0.0
        %2962 = vmatprep.subr.mxu0 0.0
        %2963 = vmatpush2.msra.mxu0 0.0
        %2964 = vmatprep.subr.mxu0 0.0
        %2965 = vmatpush2.msra.mxu0 0.0
        %2966 = vmatprep.subr.mxu0 0.0
        %2967 = vmatpush2.msra.mxu0 0.0
        %2968 = vmatprep.subr.mxu0 0.0
        %2969 = vmatpush2.msra.mxu0 0.0
        %2970 = vmatprep.subr.mxu0 0.0
        %2971 = vmatpush2.msra.mxu0 0.0
        %2972 = vmatprep.mubr.f32.mxu0 0.0
        %2973 = vmatmul.mubr.f32.gmra.mxu0 %v2844
        %v2974 = vpop.f32.mrf.mxu0
        %v2975 = vadd.f32 0.0, %v2974
        %v2976 = vpop.f32.mrf.mxu0
        %2977 = vmatprep.mubr.f32.mxu0 0.0
        %2978 = vmatmul.mubr.f32.gmra.mxu0 %v2846
        %v2979 = vpop.f32.mrf.mxu0
        %v2980 = vadd.f32 0.0, %v2979
        %v2981 = vpop.f32.mrf.mxu0
        %2982 = vmatprep.mubr.f32.mxu0 0.0
        %2983 = vmatmul.mubr.f32.gmra.mxu0 %v2848
        %v2984 = vpop.f32.mrf.mxu0
        %v2985 = vadd.f32 0.0, %v2984
        %v2986 = vpop.f32.mrf.mxu0
        %2987 = vmatprep.mubr.f32.mxu0 0.0
        %2988 = vmatmul.mubr.f32.gmra.mxu0 %v2850
        %v2989 = vpop.f32.mrf.mxu0
        %v2990 = vadd.f32 0.0, %v2989
        %v2991 = vpop.f32.mrf.mxu0
        %2992 = vmatprep.mubr.f32.mxu0 0.0
        %2993 = vmatmul.mubr.f32.gmra.mxu0 %v2852
        %v2994 = vpop.f32.mrf.mxu0
        %v2995 = vadd.f32 0.0, %v2994
        %v2996 = vpop.f32.mrf.mxu0
        %2997 = vmatprep.mubr.f32.mxu0 0.0
        %2998 = vmatmul.mubr.f32.gmra.mxu0 %v2854
        %v2999 = vpop.f32.mrf.mxu0
        %v3000 = vadd.f32 0.0, %v2999
        %v3001 = vpop.f32.mrf.mxu0
        %3002 = vmatprep.mubr.f32.mxu0 0.0
        %3003 = vmatmul.mubr.f32.gmra.mxu0 %v2856
        %v3004 = vpop.f32.mrf.mxu0
        %v3005 = vadd.f32 0.0, %v3004
        %v3006 = vpop.f32.mrf.mxu0
        %3007 = vmatprep.mubr.f32.mxu0 0.0
        %3008 = vmatmul.mubr.f32.gmra.mxu0 %v2858
        %v3009 = vpop.f32.mrf.mxu0
        %v3010 = vadd.f32 0.0, %v3009
        %v3011 = vpop.f32.mrf.mxu0
        %3012 = vmatprep.mubr.f32.mxu0 0.0
        %3013 = vmatmul.mubr.f32.gmra.mxu0 %v2860
        %v3014 = vpop.f32.mrf.mxu0
        %v3015 = vadd.f32 0.0, %v3014
        %v3016 = vpop.f32.mrf.mxu0
        %3017 = vmatprep.mubr.f32.mxu0 0.0
        %3018 = vmatmul.mubr.f32.gmra.mxu0 %v2862
        %v3019 = vpop.f32.mrf.mxu0
        %v3020 = vadd.f32 0.0, %v3019
        %v3021 = vpop.f32.mrf.mxu0
        %3022 = vmatprep.mubr.f32.mxu0 0.0
        %3023 = vmatmul.mubr.f32.gmra.mxu0 %v2864
        %v3024 = vpop.f32.mrf.mxu0
        %v3025 = vadd.f32 0.0, %v3024
        %v3026 = vpop.f32.mrf.mxu0
        %3027 = vmatprep.mubr.f32.mxu0 0.0
        %3028 = vmatmul.mubr.f32.gmra.mxu0 %v2866
        %v3029 = vpop.f32.mrf.mxu0
        %v3030 = vadd.f32 0.0, %v3029
        %v3031 = vpop.f32.mrf.mxu0
        %3032 = vmatprep.mubr.f32.mxu0 0.0
        %3033 = vmatmul.mubr.f32.gmra.mxu0 %v2868
        %v3034 = vpop.f32.mrf.mxu0
        %v3035 = vadd.f32 0.0, %v3034
        %v3036 = vpop.f32.mrf.mxu0
        %3037 = vmatprep.mubr.f32.mxu0 0.0
        %3038 = vmatmul.mubr.f32.gmra.mxu0 %v2870
        %v3039 = vpop.f32.mrf.mxu0
        %v3040 = vadd.f32 0.0, %v3039
        %v3041 = vpop.f32.mrf.mxu0
        %3042 = vmatprep.mubr.f32.mxu0 0.0
        %3043 = vmatmul.mubr.f32.gmra.mxu0 %v2872
        %v3044 = vpop.f32.mrf.mxu0
        %v3045 = vadd.f32 0.0, %v3044
        %v3046 = vpop.f32.mrf.mxu0
        %3047 = vmatprep.mubr.f32.mxu0 0.0
        %3048 = vmatmul.mubr.f32.gmra.mxu0 %v2874
        %v3049 = vpop.f32.mrf.mxu0
        %v3050 = vadd.f32 0.0, %v3049
        %v3051 = vpop.f32.mrf.mxu0
        %3052 = vmatprep.mubr.f32.mxu0 0.0
        %3053 = vmatmul.mubr.f32.gmra.mxu0 %v2876
        %v3054 = vpop.f32.mrf.mxu0
        %v3055 = vadd.f32 0.0, %v3054
        %v3056 = vpop.f32.mrf.mxu0
        %3057 = vmatprep.mubr.f32.mxu0 0.0
        %3058 = vmatmul.mubr.f32.gmra.mxu0 %v2878
        %v3059 = vpop.f32.mrf.mxu0
        %v3060 = vadd.f32 0.0, %v3059
        %v3061 = vpop.f32.mrf.mxu0
        %3062 = vmatprep.mubr.f32.mxu0 0.0
        %3063 = vmatmul.mubr.f32.gmra.mxu0 %v2880
        %v3064 = vpop.f32.mrf.mxu0
        %v3065 = vadd.f32 0.0, %v3064
        %v3066 = vpop.f32.mrf.mxu0
        %3067 = vmatprep.mubr.f32.mxu0 0.0
        %3068 = vmatmul.mubr.f32.gmra.mxu0 %v2882
        %v3069 = vpop.f32.mrf.mxu0
        %v3070 = vadd.f32 0.0, %v3069
        %v3071 = vpop.f32.mrf.mxu0
        %3072 = vmatprep.mubr.f32.mxu0 0.0
        %3073 = vmatmul.mubr.f32.gmra.mxu0 %v2884
        %v3074 = vpop.f32.mrf.mxu0
        %v3075 = vadd.f32 0.0, %v3074
        %v3076 = vpop.f32.mrf.mxu0
        %3077 = vmatprep.mubr.f32.mxu0 0.0
        %3078 = vmatmul.mubr.f32.gmra.mxu0 %v2886
        %v3079 = vpop.f32.mrf.mxu0
        %v3080 = vadd.f32 0.0, %v3079
        %v3081 = vpop.f32.mrf.mxu0
        %3082 = vmatprep.mubr.f32.mxu0 0.0
        %3083 = vmatmul.mubr.f32.gmra.mxu0 %v2888
        %v3084 = vpop.f32.mrf.mxu0
        %v3085 = vadd.f32 0.0, %v3084
        %v3086 = vpop.f32.mrf.mxu0
        %3087 = vmatprep.mubr.f32.mxu0 0.0
        %3088 = vmatmul.mubr.f32.gmra.mxu0 %v2890
        %v3089 = vpop.f32.mrf.mxu0
        %v3090 = vadd.f32 0.0, %v3089
        %v3091 = vpop.f32.mrf.mxu0
        %3092 = vmatprep.mubr.f32.mxu0 0.0
        %3093 = vmatmul.mubr.f32.gmra.mxu0 %v2892
        %v3094 = vpop.f32.mrf.mxu0
        %v3095 = vadd.f32 0.0, %v3094
        %v3096 = vpop.f32.mrf.mxu0
        %3097 = vmatprep.mubr.f32.mxu0 0.0
        %3098 = vmatmul.mubr.f32.gmra.mxu0 %v2894
        %v3099 = vpop.f32.mrf.mxu0
        %v3100 = vadd.f32 0.0, %v3099
        %v3101 = vpop.f32.mrf.mxu0
        %3102 = vmatprep.mubr.f32.mxu0 0.0
        %3103 = vmatmul.mubr.f32.gmra.mxu0 %v2896
        %v3104 = vpop.f32.mrf.mxu0
        %v3105 = vadd.f32 0.0, %v3104
        %v3106 = vpop.f32.mrf.mxu0
        %3107 = vmatprep.mubr.f32.mxu0 0.0
        %3108 = vmatmul.mubr.f32.gmra.mxu0 %v2898
        %v3109 = vpop.f32.mrf.mxu0
        %v3110 = vadd.f32 0.0, %v3109
        %v3111 = vpop.f32.mrf.mxu0
        %3112 = vmatprep.mubr.f32.mxu0 0.0
        %3113 = vmatmul.mubr.f32.gmra.mxu0 %v2900
        %v3114 = vpop.f32.mrf.mxu0
        %v3115 = vadd.f32 0.0, %v3114
        %v3116 = vpop.f32.mrf.mxu0
        %3117 = vmatprep.mubr.f32.mxu0 0.0
        %3118 = vmatmul.mubr.f32.gmra.mxu0 %v2902
        %v3119 = vpop.f32.mrf.mxu0
        %v3120 = vadd.f32 0.0, %v3119
        %v3121 = vpop.f32.mrf.mxu0
        %3122 = vmatprep.mubr.f32.mxu0 0.0
        %3123 = vmatmul.mubr.f32.gmra.mxu0 %v2904
        %v3124 = vpop.f32.mrf.mxu0
        %v3125 = vadd.f32 0.0, %v3124
        %v3126 = vpop.f32.mrf.mxu0
        %3127 = vmatprep.mubr.f32.mxu0 0.0
        %3128 = vmatmul.mubr.f32.gmra.mxu0 %v2906
        %v3129 = vpop.f32.mrf.mxu0
        %v3130 = vadd.f32 0.0, %v3129
        %v3131 = vpop.f32.mrf.mxu0
        %3132 = vdwg.mxu0
        %v3133 = vadd.f32 %v2727, %v2975
        %v3134 = vadd.f32 %v2728, %v2980
        %v3135 = vadd.f32 %v2729, %v2985
        %v3136 = vadd.f32 %v2730, %v2990
        %v3137 = vadd.f32 %v2731, %v2995
        %v3138 = vadd.f32 %v2732, %v3000
        %v3139 = vadd.f32 %v2733, %v3005
        %v3140 = vadd.f32 %v2734, %v3010
        %v3141 = vadd.f32 %v2735, %v3015
        %v3142 = vadd.f32 %v2736, %v3020
        %v3143 = vadd.f32 %v2737, %v3025
        %v3144 = vadd.f32 %v2738, %v3030
        %v3145 = vadd.f32 %v2739, %v3035
        %v3146 = vadd.f32 %v2740, %v3040
        %v3147 = vadd.f32 %v2741, %v3045
        %v3148 = vadd.f32 %v2742, %v3050
        %v3149 = vadd.f32 %v2743, %v3055
        %v3150 = vadd.f32 %v2744, %v3060
        %v3151 = vadd.f32 %v2745, %v3065
        %v3152 = vadd.f32 %v2746, %v3070
        %v3153 = vadd.f32 %v2747, %v3075
        %v3154 = vadd.f32 %v2748, %v3080
        %v3155 = vadd.f32 %v2749, %v3085
        %v3156 = vadd.f32 %v2750, %v3090
        %v3157 = vadd.f32 %v2751, %v3095
        %v3158 = vadd.f32 %v2752, %v3100
        %v3159 = vadd.f32 %v2753, %v3105
        %v3160 = vadd.f32 %v2754, %v3110
        %v3161 = vadd.f32 %v2755, %v3115
        %v3162 = vadd.f32 %v2756, %v3120
        %v3163 = vadd.f32 %v2757, %v3125
        %v3164 = vadd.f32 %v2758, %v3130
        %3165 = vst.msk [vmem:[#allocation3] sm:$0xff] %vm311, %v3133
        %3166 = vst.msk [vmem:[#allocation3 + $0x8] sm:$0xff] %vm311, %v3134
        %3167 = vst.msk [vmem:[#allocation3 + $0x10] sm:$0xff] %vm311, %v3135
        %3168 = vst.msk [vmem:[#allocation3 + $0x18] sm:$0xff] %vm311, %v3136
        %3169 = vst.msk [vmem:[#allocation3 + $0x20] sm:$0xff] %vm311, %v3137
        %3170 = vst.msk [vmem:[#allocation3 + $0x28] sm:$0xff] %vm311, %v3138
        %3171 = vst.msk [vmem:[#allocation3 + $0x30] sm:$0xff] %vm311, %v3139
        %3172 = vst.msk [vmem:[#allocation3 + $0x38] sm:$0xff] %vm311, %v3140
        %3173 = vst.msk [vmem:[#allocation3 + $0x40] sm:$0xff] %vm311, %v3141
        %3174 = vst.msk [vmem:[#allocation3 + $0x48] sm:$0xff] %vm311, %v3142
        %3175 = vst.msk [vmem:[#allocation3 + $0x50] sm:$0xff] %vm311, %v3143
        %3176 = vst.msk [vmem:[#allocation3 + $0x58] sm:$0xff] %vm311, %v3144
        %3177 = vst.msk [vmem:[#allocation3 + $0x60] sm:$0xff] %vm311, %v3145
        %3178 = vst.msk [vmem:[#allocation3 + $0x68] sm:$0xff] %vm311, %v3146
        %3179 = vst.msk [vmem:[#allocation3 + $0x70] sm:$0xff] %vm311, %v3147
        %3180 = vst.msk [vmem:[#allocation3 + $0x78] sm:$0xff] %vm311, %v3148
        %3181 = vst.msk [vmem:[#allocation3 + $0x80] sm:$0xff] %vm311, %v3149
        %3182 = vst.msk [vmem:[#allocation3 + $0x88] sm:$0xff] %vm311, %v3150
        %3183 = vst.msk [vmem:[#allocation3 + $0x90] sm:$0xff] %vm311, %v3151
        %3184 = vst.msk [vmem:[#allocation3 + $0x98] sm:$0xff] %vm311, %v3152
        %3185 = vst.msk [vmem:[#allocation3 + $0xa0] sm:$0xff] %vm311, %v3153
        %3186 = vst.msk [vmem:[#allocation3 + $0xa8] sm:$0xff] %vm311, %v3154
        %3187 = vst.msk [vmem:[#allocation3 + $0xb0] sm:$0xff] %vm311, %v3155
        %3188 = vst.msk [vmem:[#allocation3 + $0xb8] sm:$0xff] %vm311, %v3156
        %3189 = vst.msk [vmem:[#allocation3 + $0xc0] sm:$0xff] %vm311, %v3157
        %3190 = vst.msk [vmem:[#allocation3 + $0xc8] sm:$0xff] %vm311, %v3158
        %3191 = vst.msk [vmem:[#allocation3 + $0xd0] sm:$0xff] %vm311, %v3159
        %3192 = vst.msk [vmem:[#allocation3 + $0xd8] sm:$0xff] %vm311, %v3160
        %3193 = vst.msk [vmem:[#allocation3 + $0xe0] sm:$0xff] %vm311, %v3161
        %3194 = vst.msk [vmem:[#allocation3 + $0xe8] sm:$0xff] %vm311, %v3162
        %3195 = vst.msk [vmem:[#allocation3 + $0xf0] sm:$0xff] %vm311, %v3163
        %3196 = vst.msk [vmem:[#allocation3 + $0xf8] sm:$0xff] %vm311, %v3164
        %s3197 = scalar_lea.vmem [#allocation2], 48
        %v3198 = vld [vmem:[%s3197] sm:$0xff]
        %v3199 = vld [vmem:[%s3197 + $0x8] sm:$0xff]
        %v3200 = vld [vmem:[%s3197 + $0x10] sm:$0x3]
        %v3201 = vld [vmem:[%s3197 + $0x18] sm:$0xff]
        %v3202 = vld [vmem:[%s3197 + $0x20] sm:$0xff]
        %v3203 = vld [vmem:[%s3197 + $0x28] sm:$0x3]
        %v3204 = vld [vmem:[%s3197 + $0x30] sm:$0xff]
        %v3205 = vld [vmem:[%s3197 + $0x38] sm:$0xff]
        %v3206 = vld [vmem:[%s3197 + $0x40] sm:$0x3]
        %v3207 = vld [vmem:[%s3197 + $0x48] sm:$0xff]
        %v3208 = vld [vmem:[%s3197 + $0x50] sm:$0xff]
        %v3209 = vld [vmem:[%s3197 + $0x58] sm:$0x3]
        %v3210 = vld [vmem:[%s3197 + $0x60] sm:$0xff]
        %v3211 = vld [vmem:[%s3197 + $0x68] sm:$0xff]
        %v3212 = vld [vmem:[%s3197 + $0x70] sm:$0x3]
        %v3213 = vld [vmem:[%s3197 + $0x78] sm:$0xff]
        %v3214 = vld [vmem:[%s3197 + $0x80] sm:$0xff]
        %v3215 = vld [vmem:[%s3197 + $0x88] sm:$0x3]
        %v3216 = vld [vmem:[%s3197 + $0x90] sm:$0xff]
        %v3217 = vld [vmem:[%s3197 + $0x98] sm:$0xff]
        %v3218 = vld [vmem:[%s3197 + $0xa0] sm:$0x3]
        %v3219 = vld [vmem:[%s3197 + $0xa8] sm:$0xff]
        %v3220 = vld [vmem:[%s3197 + $0xb0] sm:$0xff]
        %v3221 = vld [vmem:[%s3197 + $0xb8] sm:$0x3]
        %v3222 = vld [vmem:[%s3197 + $0xc0] sm:$0xff]
        %v3223 = vld [vmem:[%s3197 + $0xc8] sm:$0xff]
        %v3224 = vld [vmem:[%s3197 + $0xd0] sm:$0x3]
        %v3225 = vld [vmem:[%s3197 + $0xd8] sm:$0xff]
        %v3226 = vld [vmem:[%s3197 + $0xe0] sm:$0xff]
        %v3227 = vld [vmem:[%s3197 + $0xe8] sm:$0x3]
        %v3228 = vld [vmem:[%s3197 + $0xf0] sm:$0xff]
        %v3229 = vld [vmem:[%s3197 + $0xf8] sm:$0xff]
        %v3230 = vld [vmem:[%s3197 + $0x100] sm:$0x3]
        %v3231 = vld [vmem:[%s3197 + $0x108] sm:$0xff]
        %v3232 = vld [vmem:[%s3197 + $0x110] sm:$0xff]
        %v3233 = vld [vmem:[%s3197 + $0x118] sm:$0x3]
        %v3234 = vld [vmem:[%s3197 + $0x120] sm:$0xff]
        %v3235 = vld [vmem:[%s3197 + $0x128] sm:$0xff]
        %v3236 = vld [vmem:[%s3197 + $0x130] sm:$0x3]
        %v3237 = vld [vmem:[%s3197 + $0x138] sm:$0xff]
        %v3238 = vld [vmem:[%s3197 + $0x140] sm:$0xff]
        %v3239 = vld [vmem:[%s3197 + $0x148] sm:$0x3]
        %v3240 = vld [vmem:[%s3197 + $0x150] sm:$0xff]
        %v3241 = vld [vmem:[%s3197 + $0x158] sm:$0xff]
        %v3242 = vld [vmem:[%s3197 + $0x160] sm:$0x3]
        %v3243 = vld [vmem:[%s3197 + $0x168] sm:$0xff]
        %v3244 = vld [vmem:[%s3197 + $0x170] sm:$0xff]
        %v3245 = vld [vmem:[%s3197 + $0x178] sm:$0x3]
        %v3246 = vld [vmem:[#allocation3] sm:$0xff]
        %v3247 = vld [vmem:[#allocation3 + $0x8] sm:$0xff]
        %v3248 = vld [vmem:[#allocation3 + $0x10] sm:$0xff]
        %v3249 = vld [vmem:[#allocation3 + $0x18] sm:$0xff]
        %v3250 = vld [vmem:[#allocation3 + $0x20] sm:$0xff]
        %v3251 = vld [vmem:[#allocation3 + $0x28] sm:$0xff]
        %v3252 = vld [vmem:[#allocation3 + $0x30] sm:$0xff]
        %v3253 = vld [vmem:[#allocation3 + $0x38] sm:$0xff]
        %v3254 = vld [vmem:[#allocation3 + $0x40] sm:$0xff]
        %v3255 = vld [vmem:[#allocation3 + $0x48] sm:$0xff]
        %v3256 = vld [vmem:[#allocation3 + $0x50] sm:$0xff]
        %v3257 = vld [vmem:[#allocation3 + $0x58] sm:$0xff]
        %v3258 = vld [vmem:[#allocation3 + $0x60] sm:$0xff]
        %v3259 = vld [vmem:[#allocation3 + $0x68] sm:$0xff]
        %v3260 = vld [vmem:[#allocation3 + $0x70] sm:$0xff]
        %v3261 = vld [vmem:[#allocation3 + $0x78] sm:$0xff]
        %v3262 = vld [vmem:[#allocation3 + $0x80] sm:$0xff]
        %v3263 = vld [vmem:[#allocation3 + $0x88] sm:$0xff]
        %v3264 = vld [vmem:[#allocation3 + $0x90] sm:$0xff]
        %v3265 = vld [vmem:[#allocation3 + $0x98] sm:$0xff]
        %v3266 = vld [vmem:[#allocation3 + $0xa0] sm:$0xff]
        %v3267 = vld [vmem:[#allocation3 + $0xa8] sm:$0xff]
        %v3268 = vld [vmem:[#allocation3 + $0xb0] sm:$0xff]
        %v3269 = vld [vmem:[#allocation3 + $0xb8] sm:$0xff]
        %v3270 = vld [vmem:[#allocation3 + $0xc0] sm:$0xff]
        %v3271 = vld [vmem:[#allocation3 + $0xc8] sm:$0xff]
        %v3272 = vld [vmem:[#allocation3 + $0xd0] sm:$0xff]
        %v3273 = vld [vmem:[#allocation3 + $0xd8] sm:$0xff]
        %v3274 = vld [vmem:[#allocation3 + $0xe0] sm:$0xff]
        %v3275 = vld [vmem:[#allocation3 + $0xe8] sm:$0xff]
        %v3276 = vld [vmem:[#allocation3 + $0xf0] sm:$0xff]
        %v3277 = vld [vmem:[#allocation3 + $0xf8] sm:$0xff]
        %s3278 = scalar_lea.vmem [#allocation7], 192
        %v3279 = vld [vmem:[%s3278] sm:$0xff]
        %v3280 = vld [vmem:[%s3278 + $0x8] sm:$0xff]
        %v3281 = vld [vmem:[%s3278 + $0x10] sm:$0xff]
        %v3282 = vld [vmem:[%s3278 + $0x18] sm:$0xff]
        %v3284 = vsel %vm204, %v3198, 0
        %v3287 = vsel %vm204, %v3199, 0
        %v3290 = vsel %vm204, %v3201, 0
        %v3293 = vsel %vm204, %v3202, 0
        %v3296 = vsel %vm204, %v3204, 0
        %v3299 = vsel %vm204, %v3205, 0
        %v3302 = vsel %vm204, %v3207, 0
        %v3305 = vsel %vm204, %v3208, 0
        %v3308 = vsel %vm204, %v3210, 0
        %v3311 = vsel %vm204, %v3211, 0
        %v3314 = vsel %vm204, %v3213, 0
        %v3317 = vsel %vm204, %v3214, 0
        %v3320 = vsel %vm204, %v3216, 0
        %v3323 = vsel %vm204, %v3217, 0
        %v3326 = vsel %vm204, %v3219, 0
        %v3329 = vsel %vm204, %v3220, 0
        %v3332 = vsel %vm204, %v3222, 0
        %v3335 = vsel %vm204, %v3223, 0
        %v3338 = vsel %vm204, %v3225, 0
        %v3341 = vsel %vm204, %v3226, 0
        %v3344 = vsel %vm204, %v3228, 0
        %v3347 = vsel %vm204, %v3229, 0
        %v3350 = vsel %vm204, %v3231, 0
        %v3353 = vsel %vm204, %v3232, 0
        %v3356 = vsel %vm204, %v3234, 0
        %v3359 = vsel %vm204, %v3235, 0
        %v3362 = vsel %vm204, %v3237, 0
        %v3365 = vsel %vm204, %v3238, 0
        %v3368 = vsel %vm204, %v3240, 0
        %v3371 = vsel %vm204, %v3241, 0
        %v3374 = vsel %vm204, %v3243, 0
        %v3377 = vsel %vm204, %v3244, 0
        %3379 = vmatprep.subr.mxu0 0.0
        %3380 = vmatpush1.msra.mxu0 0.0
        %3381 = vmatprep.subr.mxu0 0.0
        %3382 = vmatpush1.msra.mxu0 0.0
        %3383 = vmatprep.subr.mxu0 0.0
        %3384 = vmatpush1.msra.mxu0 0.0
        %3385 = vmatprep.subr.mxu0 0.0
        %3386 = vmatpush1.msra.mxu0 0.0
        %3387 = vmatprep.subr.mxu0 0.0
        %3388 = vmatpush1.msra.mxu0 0.0
        %3389 = vmatprep.subr.mxu0 0.0
        %3390 = vmatpush1.msra.mxu0 0.0
        %3391 = vmatprep.subr.mxu0 0.0
        %3392 = vmatpush1.msra.mxu0 0.0
        %3393 = vmatprep.subr.mxu0 0.0
        %3394 = vmatpush1.msra.mxu0 0.0
        %3395 = vmatprep.subr.mxu0 0.0
        %3396 = vmatpush1.msra.mxu0 0.0
        %3397 = vmatprep.subr.mxu0 0.0
        %3398 = vmatpush1.msra.mxu0 0.0
        %3399 = vmatprep.subr.mxu0 0.0
        %3400 = vmatpush1.msra.mxu0 0.0
        %3401 = vmatprep.subr.mxu0 0.0
        %3402 = vmatpush1.msra.mxu0 0.0
        %3403 = vmatprep.subr.mxu0 0.0
        %3404 = vmatpush1.msra.mxu0 %v3282
        %3405 = vmatprep.subr.mxu0 0.0
        %3406 = vmatpush1.msra.mxu0 %v3281
        %3407 = vmatprep.subr.mxu0 0.0
        %3408 = vmatpush1.msra.mxu0 %v3280
        %3409 = vmatprep.subr.mxu0 0.0
        %3410 = vmatpush1.msra.mxu0 %v3279
        %3411 = vmatprep.subr.mxu0 0.0
        %3412 = vmatpush2.msra.mxu0 0.0
        %3413 = vmatprep.subr.mxu0 0.0
        %3414 = vmatpush2.msra.mxu0 0.0
        %3415 = vmatprep.subr.mxu0 0.0
        %3416 = vmatpush2.msra.mxu0 0.0
        %3417 = vmatprep.subr.mxu0 0.0
        %3418 = vmatpush2.msra.mxu0 0.0
        %3419 = vmatprep.subr.mxu0 0.0
        %3420 = vmatpush2.msra.mxu0 0.0
        %3421 = vmatprep.subr.mxu0 0.0
        %3422 = vmatpush2.msra.mxu0 0.0
        %3423 = vmatprep.subr.mxu0 0.0
        %3424 = vmatpush2.msra.mxu0 0.0
        %3425 = vmatprep.subr.mxu0 0.0
        %3426 = vmatpush2.msra.mxu0 0.0
        %3427 = vmatprep.subr.mxu0 0.0
        %3428 = vmatpush2.msra.mxu0 0.0
        %3429 = vmatprep.subr.mxu0 0.0
        %3430 = vmatpush2.msra.mxu0 0.0
        %3431 = vmatprep.subr.mxu0 0.0
        %3432 = vmatpush2.msra.mxu0 0.0
        %3433 = vmatprep.subr.mxu0 0.0
        %3434 = vmatpush2.msra.mxu0 0.0
        %3435 = vmatprep.subr.mxu0 0.0
        %3436 = vmatpush2.msra.mxu0 0.0
        %3437 = vmatprep.subr.mxu0 0.0
        %3438 = vmatpush2.msra.mxu0 0.0
        %3439 = vmatprep.subr.mxu0 0.0
        %3440 = vmatpush2.msra.mxu0 0.0
        %3441 = vmatprep.subr.mxu0 0.0
        %3442 = vmatpush2.msra.mxu0 0.0
        %3443 = vmatprep.mubr.f32.mxu0 0.0
        %3444 = vmatmul.mubr.f32.gmra.mxu0 %v3284
        %v3445 = vpop.f32.mrf.mxu0
        %v3446 = vadd.f32 0.0, %v3445
        %v3447 = vpop.f32.mrf.mxu0
        %3448 = vmatprep.mubr.f32.mxu0 0.0
        %3449 = vmatmul.mubr.f32.gmra.mxu0 %v3287
        %v3450 = vpop.f32.mrf.mxu0
        %v3451 = vadd.f32 0.0, %v3450
        %v3452 = vpop.f32.mrf.mxu0
        %3453 = vmatprep.mubr.f32.mxu0 0.0
        %3454 = vmatmul.mubr.f32.gmra.mxu0 %v3290
        %v3455 = vpop.f32.mrf.mxu0
        %v3456 = vadd.f32 0.0, %v3455
        %v3457 = vpop.f32.mrf.mxu0
        %3458 = vmatprep.mubr.f32.mxu0 0.0
        %3459 = vmatmul.mubr.f32.gmra.mxu0 %v3293
        %v3460 = vpop.f32.mrf.mxu0
        %v3461 = vadd.f32 0.0, %v3460
        %v3462 = vpop.f32.mrf.mxu0
        %3463 = vmatprep.mubr.f32.mxu0 0.0
        %3464 = vmatmul.mubr.f32.gmra.mxu0 %v3296
        %v3465 = vpop.f32.mrf.mxu0
        %v3466 = vadd.f32 0.0, %v3465
        %v3467 = vpop.f32.mrf.mxu0
        %3468 = vmatprep.mubr.f32.mxu0 0.0
        %3469 = vmatmul.mubr.f32.gmra.mxu0 %v3299
        %v3470 = vpop.f32.mrf.mxu0
        %v3471 = vadd.f32 0.0, %v3470
        %v3472 = vpop.f32.mrf.mxu0
        %3473 = vmatprep.mubr.f32.mxu0 0.0
        %3474 = vmatmul.mubr.f32.gmra.mxu0 %v3302
        %v3475 = vpop.f32.mrf.mxu0
        %v3476 = vadd.f32 0.0, %v3475
        %v3477 = vpop.f32.mrf.mxu0
        %3478 = vmatprep.mubr.f32.mxu0 0.0
        %3479 = vmatmul.mubr.f32.gmra.mxu0 %v3305
        %v3480 = vpop.f32.mrf.mxu0
        %v3481 = vadd.f32 0.0, %v3480
        %v3482 = vpop.f32.mrf.mxu0
        %3483 = vmatprep.mubr.f32.mxu0 0.0
        %3484 = vmatmul.mubr.f32.gmra.mxu0 %v3308
        %v3485 = vpop.f32.mrf.mxu0
        %v3486 = vadd.f32 0.0, %v3485
        %v3487 = vpop.f32.mrf.mxu0
        %3488 = vmatprep.mubr.f32.mxu0 0.0
        %3489 = vmatmul.mubr.f32.gmra.mxu0 %v3311
        %v3490 = vpop.f32.mrf.mxu0
        %v3491 = vadd.f32 0.0, %v3490
        %v3492 = vpop.f32.mrf.mxu0
        %3493 = vmatprep.mubr.f32.mxu0 0.0
        %3494 = vmatmul.mubr.f32.gmra.mxu0 %v3314
        %v3495 = vpop.f32.mrf.mxu0
        %v3496 = vadd.f32 0.0, %v3495
        %v3497 = vpop.f32.mrf.mxu0
        %3498 = vmatprep.mubr.f32.mxu0 0.0
        %3499 = vmatmul.mubr.f32.gmra.mxu0 %v3317
        %v3500 = vpop.f32.mrf.mxu0
        %v3501 = vadd.f32 0.0, %v3500
        %v3502 = vpop.f32.mrf.mxu0
        %3503 = vmatprep.mubr.f32.mxu0 0.0
        %3504 = vmatmul.mubr.f32.gmra.mxu0 %v3320
        %v3505 = vpop.f32.mrf.mxu0
        %v3506 = vadd.f32 0.0, %v3505
        %v3507 = vpop.f32.mrf.mxu0
        %3508 = vmatprep.mubr.f32.mxu0 0.0
        %3509 = vmatmul.mubr.f32.gmra.mxu0 %v3323
        %v3510 = vpop.f32.mrf.mxu0
        %v3511 = vadd.f32 0.0, %v3510
        %v3512 = vpop.f32.mrf.mxu0
        %3513 = vmatprep.mubr.f32.mxu0 0.0
        %3514 = vmatmul.mubr.f32.gmra.mxu0 %v3326
        %v3515 = vpop.f32.mrf.mxu0
        %v3516 = vadd.f32 0.0, %v3515
        %v3517 = vpop.f32.mrf.mxu0
        %3518 = vmatprep.mubr.f32.mxu0 0.0
        %3519 = vmatmul.mubr.f32.gmra.mxu0 %v3329
        %v3520 = vpop.f32.mrf.mxu0
        %v3521 = vadd.f32 0.0, %v3520
        %v3522 = vpop.f32.mrf.mxu0
        %3523 = vmatprep.mubr.f32.mxu0 0.0
        %3524 = vmatmul.mubr.f32.gmra.mxu0 %v3332
        %v3525 = vpop.f32.mrf.mxu0
        %v3526 = vadd.f32 0.0, %v3525
        %v3527 = vpop.f32.mrf.mxu0
        %3528 = vmatprep.mubr.f32.mxu0 0.0
        %3529 = vmatmul.mubr.f32.gmra.mxu0 %v3335
        %v3530 = vpop.f32.mrf.mxu0
        %v3531 = vadd.f32 0.0, %v3530
        %v3532 = vpop.f32.mrf.mxu0
        %3533 = vmatprep.mubr.f32.mxu0 0.0
        %3534 = vmatmul.mubr.f32.gmra.mxu0 %v3338
        %v3535 = vpop.f32.mrf.mxu0
        %v3536 = vadd.f32 0.0, %v3535
        %v3537 = vpop.f32.mrf.mxu0
        %3538 = vmatprep.mubr.f32.mxu0 0.0
        %3539 = vmatmul.mubr.f32.gmra.mxu0 %v3341
        %v3540 = vpop.f32.mrf.mxu0
        %v3541 = vadd.f32 0.0, %v3540
        %v3542 = vpop.f32.mrf.mxu0
        %3543 = vmatprep.mubr.f32.mxu0 0.0
        %3544 = vmatmul.mubr.f32.gmra.mxu0 %v3344
        %v3545 = vpop.f32.mrf.mxu0
        %v3546 = vadd.f32 0.0, %v3545
        %v3547 = vpop.f32.mrf.mxu0
        %3548 = vmatprep.mubr.f32.mxu0 0.0
        %3549 = vmatmul.mubr.f32.gmra.mxu0 %v3347
        %v3550 = vpop.f32.mrf.mxu0
        %v3551 = vadd.f32 0.0, %v3550
        %v3552 = vpop.f32.mrf.mxu0
        %3553 = vmatprep.mubr.f32.mxu0 0.0
        %3554 = vmatmul.mubr.f32.gmra.mxu0 %v3350
        %v3555 = vpop.f32.mrf.mxu0
        %v3556 = vadd.f32 0.0, %v3555
        %v3557 = vpop.f32.mrf.mxu0
        %3558 = vmatprep.mubr.f32.mxu0 0.0
        %3559 = vmatmul.mubr.f32.gmra.mxu0 %v3353
        %v3560 = vpop.f32.mrf.mxu0
        %v3561 = vadd.f32 0.0, %v3560
        %v3562 = vpop.f32.mrf.mxu0
        %3563 = vmatprep.mubr.f32.mxu0 0.0
        %3564 = vmatmul.mubr.f32.gmra.mxu0 %v3356
        %v3565 = vpop.f32.mrf.mxu0
        %v3566 = vadd.f32 0.0, %v3565
        %v3567 = vpop.f32.mrf.mxu0
        %3568 = vmatprep.mubr.f32.mxu0 0.0
        %3569 = vmatmul.mubr.f32.gmra.mxu0 %v3359
        %v3570 = vpop.f32.mrf.mxu0
        %v3571 = vadd.f32 0.0, %v3570
        %v3572 = vpop.f32.mrf.mxu0
        %3573 = vmatprep.mubr.f32.mxu0 0.0
        %3574 = vmatmul.mubr.f32.gmra.mxu0 %v3362
        %v3575 = vpop.f32.mrf.mxu0
        %v3576 = vadd.f32 0.0, %v3575
        %v3577 = vpop.f32.mrf.mxu0
        %3578 = vmatprep.mubr.f32.mxu0 0.0
        %3579 = vmatmul.mubr.f32.gmra.mxu0 %v3365
        %v3580 = vpop.f32.mrf.mxu0
        %v3581 = vadd.f32 0.0, %v3580
        %v3582 = vpop.f32.mrf.mxu0
        %3583 = vmatprep.mubr.f32.mxu0 0.0
        %3584 = vmatmul.mubr.f32.gmra.mxu0 %v3368
        %v3585 = vpop.f32.mrf.mxu0
        %v3586 = vadd.f32 0.0, %v3585
        %v3587 = vpop.f32.mrf.mxu0
        %3588 = vmatprep.mubr.f32.mxu0 0.0
        %3589 = vmatmul.mubr.f32.gmra.mxu0 %v3371
        %v3590 = vpop.f32.mrf.mxu0
        %v3591 = vadd.f32 0.0, %v3590
        %v3592 = vpop.f32.mrf.mxu0
        %3593 = vmatprep.mubr.f32.mxu0 0.0
        %3594 = vmatmul.mubr.f32.gmra.mxu0 %v3374
        %v3595 = vpop.f32.mrf.mxu0
        %v3596 = vadd.f32 0.0, %v3595
        %v3597 = vpop.f32.mrf.mxu0
        %3598 = vmatprep.mubr.f32.mxu0 0.0
        %3599 = vmatmul.mubr.f32.gmra.mxu0 %v3377
        %v3600 = vpop.f32.mrf.mxu0
        %v3601 = vadd.f32 0.0, %v3600
        %v3602 = vpop.f32.mrf.mxu0
        %3603 = vdwg.mxu0
        %v3604 = vadd.f32 %v3246, %v3446
        %v3605 = vadd.f32 %v3247, %v3451
        %v3606 = vadd.f32 %v3248, %v3456
        %v3607 = vadd.f32 %v3249, %v3461
        %v3608 = vadd.f32 %v3250, %v3466
        %v3609 = vadd.f32 %v3251, %v3471
        %v3610 = vadd.f32 %v3252, %v3476
        %v3611 = vadd.f32 %v3253, %v3481
        %v3612 = vadd.f32 %v3254, %v3486
        %v3613 = vadd.f32 %v3255, %v3491
        %v3614 = vadd.f32 %v3256, %v3496
        %v3615 = vadd.f32 %v3257, %v3501
        %v3616 = vadd.f32 %v3258, %v3506
        %v3617 = vadd.f32 %v3259, %v3511
        %v3618 = vadd.f32 %v3260, %v3516
        %v3619 = vadd.f32 %v3261, %v3521
        %v3620 = vadd.f32 %v3262, %v3526
        %v3621 = vadd.f32 %v3263, %v3531
        %v3622 = vadd.f32 %v3264, %v3536
        %v3623 = vadd.f32 %v3265, %v3541
        %v3624 = vadd.f32 %v3266, %v3546
        %v3625 = vadd.f32 %v3267, %v3551
        %v3626 = vadd.f32 %v3268, %v3556
        %v3627 = vadd.f32 %v3269, %v3561
        %v3628 = vadd.f32 %v3270, %v3566
        %v3629 = vadd.f32 %v3271, %v3571
        %v3630 = vadd.f32 %v3272, %v3576
        %v3631 = vadd.f32 %v3273, %v3581
        %v3632 = vadd.f32 %v3274, %v3586
        %v3633 = vadd.f32 %v3275, %v3591
        %v3634 = vadd.f32 %v3276, %v3596
        %v3635 = vadd.f32 %v3277, %v3601
        %3636 = vst.msk [vmem:[#allocation3] sm:$0xff] %vm311, %v3604
        %3637 = vst.msk [vmem:[#allocation3 + $0x8] sm:$0xff] %vm311, %v3605
        %3638 = vst.msk [vmem:[#allocation3 + $0x10] sm:$0xff] %vm311, %v3606
        %3639 = vst.msk [vmem:[#allocation3 + $0x18] sm:$0xff] %vm311, %v3607
        %3640 = vst.msk [vmem:[#allocation3 + $0x20] sm:$0xff] %vm311, %v3608
        %3641 = vst.msk [vmem:[#allocation3 + $0x28] sm:$0xff] %vm311, %v3609
        %3642 = vst.msk [vmem:[#allocation3 + $0x30] sm:$0xff] %vm311, %v3610
        %3643 = vst.msk [vmem:[#allocation3 + $0x38] sm:$0xff] %vm311, %v3611
        %3644 = vst.msk [vmem:[#allocation3 + $0x40] sm:$0xff] %vm311, %v3612
        %3645 = vst.msk [vmem:[#allocation3 + $0x48] sm:$0xff] %vm311, %v3613
        %3646 = vst.msk [vmem:[#allocation3 + $0x50] sm:$0xff] %vm311, %v3614
        %3647 = vst.msk [vmem:[#allocation3 + $0x58] sm:$0xff] %vm311, %v3615
        %3648 = vst.msk [vmem:[#allocation3 + $0x60] sm:$0xff] %vm311, %v3616
        %3649 = vst.msk [vmem:[#allocation3 + $0x68] sm:$0xff] %vm311, %v3617
        %3650 = vst.msk [vmem:[#allocation3 + $0x70] sm:$0xff] %vm311, %v3618
        %3651 = vst.msk [vmem:[#allocation3 + $0x78] sm:$0xff] %vm311, %v3619
        %3652 = vst.msk [vmem:[#allocation3 + $0x80] sm:$0xff] %vm311, %v3620
        %3653 = vst.msk [vmem:[#allocation3 + $0x88] sm:$0xff] %vm311, %v3621
        %3654 = vst.msk [vmem:[#allocation3 + $0x90] sm:$0xff] %vm311, %v3622
        %3655 = vst.msk [vmem:[#allocation3 + $0x98] sm:$0xff] %vm311, %v3623
        %3656 = vst.msk [vmem:[#allocation3 + $0xa0] sm:$0xff] %vm311, %v3624
        %3657 = vst.msk [vmem:[#allocation3 + $0xa8] sm:$0xff] %vm311, %v3625
        %3658 = vst.msk [vmem:[#allocation3 + $0xb0] sm:$0xff] %vm311, %v3626
        %3659 = vst.msk [vmem:[#allocation3 + $0xb8] sm:$0xff] %vm311, %v3627
        %3660 = vst.msk [vmem:[#allocation3 + $0xc0] sm:$0xff] %vm311, %v3628
        %3661 = vst.msk [vmem:[#allocation3 + $0xc8] sm:$0xff] %vm311, %v3629
        %3662 = vst.msk [vmem:[#allocation3 + $0xd0] sm:$0xff] %vm311, %v3630
        %3663 = vst.msk [vmem:[#allocation3 + $0xd8] sm:$0xff] %vm311, %v3631
        %3664 = vst.msk [vmem:[#allocation3 + $0xe0] sm:$0xff] %vm311, %v3632
        %3665 = vst.msk [vmem:[#allocation3 + $0xe8] sm:$0xff] %vm311, %v3633
        %3666 = vst.msk [vmem:[#allocation3 + $0xf0] sm:$0xff] %vm311, %v3634
        %3667 = vst.msk [vmem:[#allocation3 + $0xf8] sm:$0xff] %vm311, %v3635
        %v3668 = vld [vmem:[#allocation3] sm:$0xff]
        %v3669 = vld [vmem:[#allocation3 + $0x8] sm:$0xff]
        %v3670 = vld [vmem:[#allocation3 + $0x10] sm:$0xff]
        %v3671 = vld [vmem:[#allocation3 + $0x18] sm:$0xff]
        %v3672 = vld [vmem:[#allocation3 + $0x20] sm:$0xff]
        %v3673 = vld [vmem:[#allocation3 + $0x28] sm:$0xff]
        %v3674 = vld [vmem:[#allocation3 + $0x30] sm:$0xff]
        %v3675 = vld [vmem:[#allocation3 + $0x38] sm:$0xff]
        %v3676 = vld [vmem:[#allocation3 + $0x40] sm:$0xff]
        %v3677 = vld [vmem:[#allocation3 + $0x48] sm:$0xff]
        %v3678 = vld [vmem:[#allocation3 + $0x50] sm:$0xff]
        %v3679 = vld [vmem:[#allocation3 + $0x58] sm:$0xff]
        %v3680 = vld [vmem:[#allocation3 + $0x60] sm:$0xff]
        %v3681 = vld [vmem:[#allocation3 + $0x68] sm:$0xff]
        %v3682 = vld [vmem:[#allocation3 + $0x70] sm:$0xff]
        %v3683 = vld [vmem:[#allocation3 + $0x78] sm:$0xff]
        %v3684 = vld [vmem:[#allocation3 + $0x80] sm:$0xff]
        %v3685 = vld [vmem:[#allocation3 + $0x88] sm:$0xff]
        %v3686 = vld [vmem:[#allocation3 + $0x90] sm:$0xff]
        %v3687 = vld [vmem:[#allocation3 + $0x98] sm:$0xff]
        %v3688 = vld [vmem:[#allocation3 + $0xa0] sm:$0xff]
        %v3689 = vld [vmem:[#allocation3 + $0xa8] sm:$0xff]
        %v3690 = vld [vmem:[#allocation3 + $0xb0] sm:$0xff]
        %v3691 = vld [vmem:[#allocation3 + $0xb8] sm:$0xff]
        %v3692 = vld [vmem:[#allocation3 + $0xc0] sm:$0xff]
        %v3693 = vld [vmem:[#allocation3 + $0xc8] sm:$0xff]
        %v3694 = vld [vmem:[#allocation3 + $0xd0] sm:$0xff]
        %v3695 = vld [vmem:[#allocation3 + $0xd8] sm:$0xff]
        %v3696 = vld [vmem:[#allocation3 + $0xe0] sm:$0xff]
        %v3697 = vld [vmem:[#allocation3 + $0xe8] sm:$0xff]
        %v3698 = vld [vmem:[#allocation3 + $0xf0] sm:$0xff]
        %v3699 = vld [vmem:[#allocation3 + $0xf8] sm:$0xff]
        %v3716 = vrot.slane %v3198, 1
        %v3717 = vrot.slane %v3199, 1
        %v3718 = vsel %vm861, %v3716, %v3717
        %v3719 = vrot.slane %v3200, 1
        %v3720 = vsel %vm861, %v3717, %v3719
        %v3721 = vrot.slane %v3201, 1
        %v3722 = vrot.slane %v3202, 1
        %v3723 = vsel %vm861, %v3721, %v3722
        %v3724 = vrot.slane %v3203, 1
        %v3725 = vsel %vm861, %v3722, %v3724
        %v3726 = vrot.slane %v3204, 1
        %v3727 = vrot.slane %v3205, 1
        %v3728 = vsel %vm861, %v3726, %v3727
        %v3729 = vrot.slane %v3206, 1
        %v3730 = vsel %vm861, %v3727, %v3729
        %v3731 = vrot.slane %v3207, 1
        %v3732 = vrot.slane %v3208, 1
        %v3733 = vsel %vm861, %v3731, %v3732
        %v3734 = vrot.slane %v3209, 1
        %v3735 = vsel %vm861, %v3732, %v3734
        %v3736 = vrot.slane %v3210, 1
        %v3737 = vrot.slane %v3211, 1
        %v3738 = vsel %vm861, %v3736, %v3737
        %v3739 = vrot.slane %v3212, 1
        %v3740 = vsel %vm861, %v3737, %v3739
        %v3741 = vrot.slane %v3213, 1
        %v3742 = vrot.slane %v3214, 1
        %v3743 = vsel %vm861, %v3741, %v3742
        %v3744 = vrot.slane %v3215, 1
        %v3745 = vsel %vm861, %v3742, %v3744
        %v3746 = vrot.slane %v3216, 1
        %v3747 = vrot.slane %v3217, 1
        %v3748 = vsel %vm861, %v3746, %v3747
        %v3749 = vrot.slane %v3218, 1
        %v3750 = vsel %vm861, %v3747, %v3749
        %v3751 = vrot.slane %v3219, 1
        %v3752 = vrot.slane %v3220, 1
        %v3753 = vsel %vm861, %v3751, %v3752
        %v3754 = vrot.slane %v3221, 1
        %v3755 = vsel %vm861, %v3752, %v3754
        %v3756 = vrot.slane %v3222, 1
        %v3757 = vrot.slane %v3223, 1
        %v3758 = vsel %vm861, %v3756, %v3757
        %v3759 = vrot.slane %v3224, 1
        %v3760 = vsel %vm861, %v3757, %v3759
        %v3761 = vrot.slane %v3225, 1
        %v3762 = vrot.slane %v3226, 1
        %v3763 = vsel %vm861, %v3761, %v3762
        %v3764 = vrot.slane %v3227, 1
        %v3765 = vsel %vm861, %v3762, %v3764
        %v3766 = vrot.slane %v3228, 1
        %v3767 = vrot.slane %v3229, 1
        %v3768 = vsel %vm861, %v3766, %v3767
        %v3769 = vrot.slane %v3230, 1
        %v3770 = vsel %vm861, %v3767, %v3769
        %v3771 = vrot.slane %v3231, 1
        %v3772 = vrot.slane %v3232, 1
        %v3773 = vsel %vm861, %v3771, %v3772
        %v3774 = vrot.slane %v3233, 1
        %v3775 = vsel %vm861, %v3772, %v3774
        %v3776 = vrot.slane %v3234, 1
        %v3777 = vrot.slane %v3235, 1
        %v3778 = vsel %vm861, %v3776, %v3777
        %v3779 = vrot.slane %v3236, 1
        %v3780 = vsel %vm861, %v3777, %v3779
        %v3781 = vrot.slane %v3237, 1
        %v3782 = vrot.slane %v3238, 1
        %v3783 = vsel %vm861, %v3781, %v3782
        %v3784 = vrot.slane %v3239, 1
        %v3785 = vsel %vm861, %v3782, %v3784
        %v3786 = vrot.slane %v3240, 1
        %v3787 = vrot.slane %v3241, 1
        %v3788 = vsel %vm861, %v3786, %v3787
        %v3789 = vrot.slane %v3242, 1
        %v3790 = vsel %vm861, %v3787, %v3789
        %v3791 = vrot.slane %v3243, 1
        %v3792 = vrot.slane %v3244, 1
        %v3793 = vsel %vm861, %v3791, %v3792
        %v3794 = vrot.slane %v3245, 1
        %v3795 = vsel %vm861, %v3792, %v3794
        %s3796 = scalar_lea.vmem [#allocation7], 224
        %v3797 = vld [vmem:[%s3796] sm:$0xff]
        %v3798 = vld [vmem:[%s3796 + $0x8] sm:$0xff]
        %v3799 = vld [vmem:[%s3796 + $0x10] sm:$0xff]
        %v3800 = vld [vmem:[%s3796 + $0x18] sm:$0xff]
        %v3801 = vsel %vm204, %v3718, 0
        %v3803 = vsel %vm204, %v3720, 0
        %v3805 = vsel %vm204, %v3723, 0
        %v3807 = vsel %vm204, %v3725, 0
        %v3809 = vsel %vm204, %v3728, 0
        %v3811 = vsel %vm204, %v3730, 0
        %v3813 = vsel %vm204, %v3733, 0
        %v3815 = vsel %vm204, %v3735, 0
        %v3817 = vsel %vm204, %v3738, 0
        %v3819 = vsel %vm204, %v3740, 0
        %v3821 = vsel %vm204, %v3743, 0
        %v3823 = vsel %vm204, %v3745, 0
        %v3825 = vsel %vm204, %v3748, 0
        %v3827 = vsel %vm204, %v3750, 0
        %v3829 = vsel %vm204, %v3753, 0
        %v3831 = vsel %vm204, %v3755, 0
        %v3833 = vsel %vm204, %v3758, 0
        %v3835 = vsel %vm204, %v3760, 0
        %v3837 = vsel %vm204, %v3763, 0
        %v3839 = vsel %vm204, %v3765, 0
        %v3841 = vsel %vm204, %v3768, 0
        %v3843 = vsel %vm204, %v3770, 0
        %v3845 = vsel %vm204, %v3773, 0
        %v3847 = vsel %vm204, %v3775, 0
        %v3849 = vsel %vm204, %v3778, 0
        %v3851 = vsel %vm204, %v3780, 0
        %v3853 = vsel %vm204, %v3783, 0
        %v3855 = vsel %vm204, %v3785, 0
        %v3857 = vsel %vm204, %v3788, 0
        %v3859 = vsel %vm204, %v3790, 0
        %v3861 = vsel %vm204, %v3793, 0
        %v3863 = vsel %vm204, %v3795, 0
        %3865 = vmatprep.subr.mxu0 0.0
        %3866 = vmatpush1.msra.mxu0 0.0
        %3867 = vmatprep.subr.mxu0 0.0
        %3868 = vmatpush1.msra.mxu0 0.0
        %3869 = vmatprep.subr.mxu0 0.0
        %3870 = vmatpush1.msra.mxu0 0.0
        %3871 = vmatprep.subr.mxu0 0.0
        %3872 = vmatpush1.msra.mxu0 0.0
        %3873 = vmatprep.subr.mxu0 0.0
        %3874 = vmatpush1.msra.mxu0 0.0
        %3875 = vmatprep.subr.mxu0 0.0
        %3876 = vmatpush1.msra.mxu0 0.0
        %3877 = vmatprep.subr.mxu0 0.0
        %3878 = vmatpush1.msra.mxu0 0.0
        %3879 = vmatprep.subr.mxu0 0.0
        %3880 = vmatpush1.msra.mxu0 0.0
        %3881 = vmatprep.subr.mxu0 0.0
        %3882 = vmatpush1.msra.mxu0 0.0
        %3883 = vmatprep.subr.mxu0 0.0
        %3884 = vmatpush1.msra.mxu0 0.0
        %3885 = vmatprep.subr.mxu0 0.0
        %3886 = vmatpush1.msra.mxu0 0.0
        %3887 = vmatprep.subr.mxu0 0.0
        %3888 = vmatpush1.msra.mxu0 0.0
        %3889 = vmatprep.subr.mxu0 0.0
        %3890 = vmatpush1.msra.mxu0 %v3800
        %3891 = vmatprep.subr.mxu0 0.0
        %3892 = vmatpush1.msra.mxu0 %v3799
        %3893 = vmatprep.subr.mxu0 0.0
        %3894 = vmatpush1.msra.mxu0 %v3798
        %3895 = vmatprep.subr.mxu0 0.0
        %3896 = vmatpush1.msra.mxu0 %v3797
        %3897 = vmatprep.subr.mxu0 0.0
        %3898 = vmatpush2.msra.mxu0 0.0
        %3899 = vmatprep.subr.mxu0 0.0
        %3900 = vmatpush2.msra.mxu0 0.0
        %3901 = vmatprep.subr.mxu0 0.0
        %3902 = vmatpush2.msra.mxu0 0.0
        %3903 = vmatprep.subr.mxu0 0.0
        %3904 = vmatpush2.msra.mxu0 0.0
        %3905 = vmatprep.subr.mxu0 0.0
        %3906 = vmatpush2.msra.mxu0 0.0
        %3907 = vmatprep.subr.mxu0 0.0
        %3908 = vmatpush2.msra.mxu0 0.0
        %3909 = vmatprep.subr.mxu0 0.0
        %3910 = vmatpush2.msra.mxu0 0.0
        %3911 = vmatprep.subr.mxu0 0.0
        %3912 = vmatpush2.msra.mxu0 0.0
        %3913 = vmatprep.subr.mxu0 0.0
        %3914 = vmatpush2.msra.mxu0 0.0
        %3915 = vmatprep.subr.mxu0 0.0
        %3916 = vmatpush2.msra.mxu0 0.0
        %3917 = vmatprep.subr.mxu0 0.0
        %3918 = vmatpush2.msra.mxu0 0.0
        %3919 = vmatprep.subr.mxu0 0.0
        %3920 = vmatpush2.msra.mxu0 0.0
        %3921 = vmatprep.subr.mxu0 0.0
        %3922 = vmatpush2.msra.mxu0 0.0
        %3923 = vmatprep.subr.mxu0 0.0
        %3924 = vmatpush2.msra.mxu0 0.0
        %3925 = vmatprep.subr.mxu0 0.0
        %3926 = vmatpush2.msra.mxu0 0.0
        %3927 = vmatprep.subr.mxu0 0.0
        %3928 = vmatpush2.msra.mxu0 0.0
        %3929 = vmatprep.mubr.f32.mxu0 0.0
        %3930 = vmatmul.mubr.f32.gmra.mxu0 %v3801
        %v3931 = vpop.f32.mrf.mxu0
        %v3932 = vadd.f32 0.0, %v3931
        %v3933 = vpop.f32.mrf.mxu0
        %3934 = vmatprep.mubr.f32.mxu0 0.0
        %3935 = vmatmul.mubr.f32.gmra.mxu0 %v3803
        %v3936 = vpop.f32.mrf.mxu0
        %v3937 = vadd.f32 0.0, %v3936
        %v3938 = vpop.f32.mrf.mxu0
        %3939 = vmatprep.mubr.f32.mxu0 0.0
        %3940 = vmatmul.mubr.f32.gmra.mxu0 %v3805
        %v3941 = vpop.f32.mrf.mxu0
        %v3942 = vadd.f32 0.0, %v3941
        %v3943 = vpop.f32.mrf.mxu0
        %3944 = vmatprep.mubr.f32.mxu0 0.0
        %3945 = vmatmul.mubr.f32.gmra.mxu0 %v3807
        %v3946 = vpop.f32.mrf.mxu0
        %v3947 = vadd.f32 0.0, %v3946
        %v3948 = vpop.f32.mrf.mxu0
        %3949 = vmatprep.mubr.f32.mxu0 0.0
        %3950 = vmatmul.mubr.f32.gmra.mxu0 %v3809
        %v3951 = vpop.f32.mrf.mxu0
        %v3952 = vadd.f32 0.0, %v3951
        %v3953 = vpop.f32.mrf.mxu0
        %3954 = vmatprep.mubr.f32.mxu0 0.0
        %3955 = vmatmul.mubr.f32.gmra.mxu0 %v3811
        %v3956 = vpop.f32.mrf.mxu0
        %v3957 = vadd.f32 0.0, %v3956
        %v3958 = vpop.f32.mrf.mxu0
        %3959 = vmatprep.mubr.f32.mxu0 0.0
        %3960 = vmatmul.mubr.f32.gmra.mxu0 %v3813
        %v3961 = vpop.f32.mrf.mxu0
        %v3962 = vadd.f32 0.0, %v3961
        %v3963 = vpop.f32.mrf.mxu0
        %3964 = vmatprep.mubr.f32.mxu0 0.0
        %3965 = vmatmul.mubr.f32.gmra.mxu0 %v3815
        %v3966 = vpop.f32.mrf.mxu0
        %v3967 = vadd.f32 0.0, %v3966
        %v3968 = vpop.f32.mrf.mxu0
        %3969 = vmatprep.mubr.f32.mxu0 0.0
        %3970 = vmatmul.mubr.f32.gmra.mxu0 %v3817
        %v3971 = vpop.f32.mrf.mxu0
        %v3972 = vadd.f32 0.0, %v3971
        %v3973 = vpop.f32.mrf.mxu0
        %3974 = vmatprep.mubr.f32.mxu0 0.0
        %3975 = vmatmul.mubr.f32.gmra.mxu0 %v3819
        %v3976 = vpop.f32.mrf.mxu0
        %v3977 = vadd.f32 0.0, %v3976
        %v3978 = vpop.f32.mrf.mxu0
        %3979 = vmatprep.mubr.f32.mxu0 0.0
        %3980 = vmatmul.mubr.f32.gmra.mxu0 %v3821
        %v3981 = vpop.f32.mrf.mxu0
        %v3982 = vadd.f32 0.0, %v3981
        %v3983 = vpop.f32.mrf.mxu0
        %3984 = vmatprep.mubr.f32.mxu0 0.0
        %3985 = vmatmul.mubr.f32.gmra.mxu0 %v3823
        %v3986 = vpop.f32.mrf.mxu0
        %v3987 = vadd.f32 0.0, %v3986
        %v3988 = vpop.f32.mrf.mxu0
        %3989 = vmatprep.mubr.f32.mxu0 0.0
        %3990 = vmatmul.mubr.f32.gmra.mxu0 %v3825
        %v3991 = vpop.f32.mrf.mxu0
        %v3992 = vadd.f32 0.0, %v3991
        %v3993 = vpop.f32.mrf.mxu0
        %3994 = vmatprep.mubr.f32.mxu0 0.0
        %3995 = vmatmul.mubr.f32.gmra.mxu0 %v3827
        %v3996 = vpop.f32.mrf.mxu0
        %v3997 = vadd.f32 0.0, %v3996
        %v3998 = vpop.f32.mrf.mxu0
        %3999 = vmatprep.mubr.f32.mxu0 0.0
        %4000 = vmatmul.mubr.f32.gmra.mxu0 %v3829
        %v4001 = vpop.f32.mrf.mxu0
        %v4002 = vadd.f32 0.0, %v4001
        %v4003 = vpop.f32.mrf.mxu0
        %4004 = vmatprep.mubr.f32.mxu0 0.0
        %4005 = vmatmul.mubr.f32.gmra.mxu0 %v3831
        %v4006 = vpop.f32.mrf.mxu0
        %v4007 = vadd.f32 0.0, %v4006
        %v4008 = vpop.f32.mrf.mxu0
        %4009 = vmatprep.mubr.f32.mxu0 0.0
        %4010 = vmatmul.mubr.f32.gmra.mxu0 %v3833
        %v4011 = vpop.f32.mrf.mxu0
        %v4012 = vadd.f32 0.0, %v4011
        %v4013 = vpop.f32.mrf.mxu0
        %4014 = vmatprep.mubr.f32.mxu0 0.0
        %4015 = vmatmul.mubr.f32.gmra.mxu0 %v3835
        %v4016 = vpop.f32.mrf.mxu0
        %v4017 = vadd.f32 0.0, %v4016
        %v4018 = vpop.f32.mrf.mxu0
        %4019 = vmatprep.mubr.f32.mxu0 0.0
        %4020 = vmatmul.mubr.f32.gmra.mxu0 %v3837
        %v4021 = vpop.f32.mrf.mxu0
        %v4022 = vadd.f32 0.0, %v4021
        %v4023 = vpop.f32.mrf.mxu0
        %4024 = vmatprep.mubr.f32.mxu0 0.0
        %4025 = vmatmul.mubr.f32.gmra.mxu0 %v3839
        %v4026 = vpop.f32.mrf.mxu0
        %v4027 = vadd.f32 0.0, %v4026
        %v4028 = vpop.f32.mrf.mxu0
        %4029 = vmatprep.mubr.f32.mxu0 0.0
        %4030 = vmatmul.mubr.f32.gmra.mxu0 %v3841
        %v4031 = vpop.f32.mrf.mxu0
        %v4032 = vadd.f32 0.0, %v4031
        %v4033 = vpop.f32.mrf.mxu0
        %4034 = vmatprep.mubr.f32.mxu0 0.0
        %4035 = vmatmul.mubr.f32.gmra.mxu0 %v3843
        %v4036 = vpop.f32.mrf.mxu0
        %v4037 = vadd.f32 0.0, %v4036
        %v4038 = vpop.f32.mrf.mxu0
        %4039 = vmatprep.mubr.f32.mxu0 0.0
        %4040 = vmatmul.mubr.f32.gmra.mxu0 %v3845
        %v4041 = vpop.f32.mrf.mxu0
        %v4042 = vadd.f32 0.0, %v4041
        %v4043 = vpop.f32.mrf.mxu0
        %4044 = vmatprep.mubr.f32.mxu0 0.0
        %4045 = vmatmul.mubr.f32.gmra.mxu0 %v3847
        %v4046 = vpop.f32.mrf.mxu0
        %v4047 = vadd.f32 0.0, %v4046
        %v4048 = vpop.f32.mrf.mxu0
        %4049 = vmatprep.mubr.f32.mxu0 0.0
        %4050 = vmatmul.mubr.f32.gmra.mxu0 %v3849
        %v4051 = vpop.f32.mrf.mxu0
        %v4052 = vadd.f32 0.0, %v4051
        %v4053 = vpop.f32.mrf.mxu0
        %4054 = vmatprep.mubr.f32.mxu0 0.0
        %4055 = vmatmul.mubr.f32.gmra.mxu0 %v3851
        %v4056 = vpop.f32.mrf.mxu0
        %v4057 = vadd.f32 0.0, %v4056
        %v4058 = vpop.f32.mrf.mxu0
        %4059 = vmatprep.mubr.f32.mxu0 0.0
        %4060 = vmatmul.mubr.f32.gmra.mxu0 %v3853
        %v4061 = vpop.f32.mrf.mxu0
        %v4062 = vadd.f32 0.0, %v4061
        %v4063 = vpop.f32.mrf.mxu0
        %4064 = vmatprep.mubr.f32.mxu0 0.0
        %4065 = vmatmul.mubr.f32.gmra.mxu0 %v3855
        %v4066 = vpop.f32.mrf.mxu0
        %v4067 = vadd.f32 0.0, %v4066
        %v4068 = vpop.f32.mrf.mxu0
        %4069 = vmatprep.mubr.f32.mxu0 0.0
        %4070 = vmatmul.mubr.f32.gmra.mxu0 %v3857
        %v4071 = vpop.f32.mrf.mxu0
        %v4072 = vadd.f32 0.0, %v4071
        %v4073 = vpop.f32.mrf.mxu0
        %4074 = vmatprep.mubr.f32.mxu0 0.0
        %4075 = vmatmul.mubr.f32.gmra.mxu0 %v3859
        %v4076 = vpop.f32.mrf.mxu0
        %v4077 = vadd.f32 0.0, %v4076
        %v4078 = vpop.f32.mrf.mxu0
        %4079 = vmatprep.mubr.f32.mxu0 0.0
        %4080 = vmatmul.mubr.f32.gmra.mxu0 %v3861
        %v4081 = vpop.f32.mrf.mxu0
        %v4082 = vadd.f32 0.0, %v4081
        %v4083 = vpop.f32.mrf.mxu0
        %4084 = vmatprep.mubr.f32.mxu0 0.0
        %4085 = vmatmul.mubr.f32.gmra.mxu0 %v3863
        %v4086 = vpop.f32.mrf.mxu0
        %v4087 = vadd.f32 0.0, %v4086
        %v4088 = vpop.f32.mrf.mxu0
        %4089 = vdwg.mxu0
        %v4090 = vadd.f32 %v3668, %v3932
        %v4091 = vadd.f32 %v3669, %v3937
        %v4092 = vadd.f32 %v3670, %v3942
        %v4093 = vadd.f32 %v3671, %v3947
        %v4094 = vadd.f32 %v3672, %v3952
        %v4095 = vadd.f32 %v3673, %v3957
        %v4096 = vadd.f32 %v3674, %v3962
        %v4097 = vadd.f32 %v3675, %v3967
        %v4098 = vadd.f32 %v3676, %v3972
        %v4099 = vadd.f32 %v3677, %v3977
        %v4100 = vadd.f32 %v3678, %v3982
        %v4101 = vadd.f32 %v3679, %v3987
        %v4102 = vadd.f32 %v3680, %v3992
        %v4103 = vadd.f32 %v3681, %v3997
        %v4104 = vadd.f32 %v3682, %v4002
        %v4105 = vadd.f32 %v3683, %v4007
        %v4106 = vadd.f32 %v3684, %v4012
        %v4107 = vadd.f32 %v3685, %v4017
        %v4108 = vadd.f32 %v3686, %v4022
        %v4109 = vadd.f32 %v3687, %v4027
        %v4110 = vadd.f32 %v3688, %v4032
        %v4111 = vadd.f32 %v3689, %v4037
        %v4112 = vadd.f32 %v3690, %v4042
        %v4113 = vadd.f32 %v3691, %v4047
        %v4114 = vadd.f32 %v3692, %v4052
        %v4115 = vadd.f32 %v3693, %v4057
        %v4116 = vadd.f32 %v3694, %v4062
        %v4117 = vadd.f32 %v3695, %v4067
        %v4118 = vadd.f32 %v3696, %v4072
        %v4119 = vadd.f32 %v3697, %v4077
        %v4120 = vadd.f32 %v3698, %v4082
        %v4121 = vadd.f32 %v3699, %v4087
        %4122 = vst.msk [vmem:[#allocation3] sm:$0xff] %vm311, %v4090
        %4123 = vst.msk [vmem:[#allocation3 + $0x8] sm:$0xff] %vm311, %v4091
        %4124 = vst.msk [vmem:[#allocation3 + $0x10] sm:$0xff] %vm311, %v4092
        %4125 = vst.msk [vmem:[#allocation3 + $0x18] sm:$0xff] %vm311, %v4093
        %4126 = vst.msk [vmem:[#allocation3 + $0x20] sm:$0xff] %vm311, %v4094
        %4127 = vst.msk [vmem:[#allocation3 + $0x28] sm:$0xff] %vm311, %v4095
        %4128 = vst.msk [vmem:[#allocation3 + $0x30] sm:$0xff] %vm311, %v4096
        %4129 = vst.msk [vmem:[#allocation3 + $0x38] sm:$0xff] %vm311, %v4097
        %4130 = vst.msk [vmem:[#allocation3 + $0x40] sm:$0xff] %vm311, %v4098
        %4131 = vst.msk [vmem:[#allocation3 + $0x48] sm:$0xff] %vm311, %v4099
        %4132 = vst.msk [vmem:[#allocation3 + $0x50] sm:$0xff] %vm311, %v4100
        %4133 = vst.msk [vmem:[#allocation3 + $0x58] sm:$0xff] %vm311, %v4101
        %4134 = vst.msk [vmem:[#allocation3 + $0x60] sm:$0xff] %vm311, %v4102
        %4135 = vst.msk [vmem:[#allocation3 + $0x68] sm:$0xff] %vm311, %v4103
        %4136 = vst.msk [vmem:[#allocation3 + $0x70] sm:$0xff] %vm311, %v4104
        %4137 = vst.msk [vmem:[#allocation3 + $0x78] sm:$0xff] %vm311, %v4105
        %4138 = vst.msk [vmem:[#allocation3 + $0x80] sm:$0xff] %vm311, %v4106
        %4139 = vst.msk [vmem:[#allocation3 + $0x88] sm:$0xff] %vm311, %v4107
        %4140 = vst.msk [vmem:[#allocation3 + $0x90] sm:$0xff] %vm311, %v4108
        %4141 = vst.msk [vmem:[#allocation3 + $0x98] sm:$0xff] %vm311, %v4109
        %4142 = vst.msk [vmem:[#allocation3 + $0xa0] sm:$0xff] %vm311, %v4110
        %4143 = vst.msk [vmem:[#allocation3 + $0xa8] sm:$0xff] %vm311, %v4111
        %4144 = vst.msk [vmem:[#allocation3 + $0xb0] sm:$0xff] %vm311, %v4112
        %4145 = vst.msk [vmem:[#allocation3 + $0xb8] sm:$0xff] %vm311, %v4113
        %4146 = vst.msk [vmem:[#allocation3 + $0xc0] sm:$0xff] %vm311, %v4114
        %4147 = vst.msk [vmem:[#allocation3 + $0xc8] sm:$0xff] %vm311, %v4115
        %4148 = vst.msk [vmem:[#allocation3 + $0xd0] sm:$0xff] %vm311, %v4116
        %4149 = vst.msk [vmem:[#allocation3 + $0xd8] sm:$0xff] %vm311, %v4117
        %4150 = vst.msk [vmem:[#allocation3 + $0xe0] sm:$0xff] %vm311, %v4118
        %4151 = vst.msk [vmem:[#allocation3 + $0xe8] sm:$0xff] %vm311, %v4119
        %4152 = vst.msk [vmem:[#allocation3 + $0xf0] sm:$0xff] %vm311, %v4120
        %4153 = vst.msk [vmem:[#allocation3 + $0xf8] sm:$0xff] %vm311, %v4121
        %v4154 = vld [vmem:[#allocation3] sm:$0xff]
        %v4155 = vld [vmem:[#allocation3 + $0x8] sm:$0xff]
        %v4156 = vld [vmem:[#allocation3 + $0x10] sm:$0xff]
        %v4157 = vld [vmem:[#allocation3 + $0x18] sm:$0xff]
        %v4158 = vld [vmem:[#allocation3 + $0x20] sm:$0xff]
        %v4159 = vld [vmem:[#allocation3 + $0x28] sm:$0xff]
        %v4160 = vld [vmem:[#allocation3 + $0x30] sm:$0xff]
        %v4161 = vld [vmem:[#allocation3 + $0x38] sm:$0xff]
        %v4162 = vld [vmem:[#allocation3 + $0x40] sm:$0xff]
        %v4163 = vld [vmem:[#allocation3 + $0x48] sm:$0xff]
        %v4164 = vld [vmem:[#allocation3 + $0x50] sm:$0xff]
        %v4165 = vld [vmem:[#allocation3 + $0x58] sm:$0xff]
        %v4166 = vld [vmem:[#allocation3 + $0x60] sm:$0xff]
        %v4167 = vld [vmem:[#allocation3 + $0x68] sm:$0xff]
        %v4168 = vld [vmem:[#allocation3 + $0x70] sm:$0xff]
        %v4169 = vld [vmem:[#allocation3 + $0x78] sm:$0xff]
        %v4170 = vld [vmem:[#allocation3 + $0x80] sm:$0xff]
        %v4171 = vld [vmem:[#allocation3 + $0x88] sm:$0xff]
        %v4172 = vld [vmem:[#allocation3 + $0x90] sm:$0xff]
        %v4173 = vld [vmem:[#allocation3 + $0x98] sm:$0xff]
        %v4174 = vld [vmem:[#allocation3 + $0xa0] sm:$0xff]
        %v4175 = vld [vmem:[#allocation3 + $0xa8] sm:$0xff]
        %v4176 = vld [vmem:[#allocation3 + $0xb0] sm:$0xff]
        %v4177 = vld [vmem:[#allocation3 + $0xb8] sm:$0xff]
        %v4178 = vld [vmem:[#allocation3 + $0xc0] sm:$0xff]
        %v4179 = vld [vmem:[#allocation3 + $0xc8] sm:$0xff]
        %v4180 = vld [vmem:[#allocation3 + $0xd0] sm:$0xff]
        %v4181 = vld [vmem:[#allocation3 + $0xd8] sm:$0xff]
        %v4182 = vld [vmem:[#allocation3 + $0xe0] sm:$0xff]
        %v4183 = vld [vmem:[#allocation3 + $0xe8] sm:$0xff]
        %v4184 = vld [vmem:[#allocation3 + $0xf0] sm:$0xff]
        %v4185 = vld [vmem:[#allocation3 + $0xf8] sm:$0xff]
        %v4186 = vrot.slane %v3198, 2
        %v4187 = vrot.slane %v3199, 2
        %v4188 = vsel %vm1332, %v4186, %v4187
        %v4189 = vrot.slane %v3200, 2
        %v4190 = vsel %vm1332, %v4187, %v4189
        %v4191 = vrot.slane %v3201, 2
        %v4192 = vrot.slane %v3202, 2
        %v4193 = vsel %vm1332, %v4191, %v4192
        %v4194 = vrot.slane %v3203, 2
        %v4195 = vsel %vm1332, %v4192, %v4194
        %v4196 = vrot.slane %v3204, 2
        %v4197 = vrot.slane %v3205, 2
        %v4198 = vsel %vm1332, %v4196, %v4197
        %v4199 = vrot.slane %v3206, 2
        %v4200 = vsel %vm1332, %v4197, %v4199
        %v4201 = vrot.slane %v3207, 2
        %v4202 = vrot.slane %v3208, 2
        %v4203 = vsel %vm1332, %v4201, %v4202
        %v4204 = vrot.slane %v3209, 2
        %v4205 = vsel %vm1332, %v4202, %v4204
        %v4206 = vrot.slane %v3210, 2
        %v4207 = vrot.slane %v3211, 2
        %v4208 = vsel %vm1332, %v4206, %v4207
        %v4209 = vrot.slane %v3212, 2
        %v4210 = vsel %vm1332, %v4207, %v4209
        %v4211 = vrot.slane %v3213, 2
        %v4212 = vrot.slane %v3214, 2
        %v4213 = vsel %vm1332, %v4211, %v4212
        %v4214 = vrot.slane %v3215, 2
        %v4215 = vsel %vm1332, %v4212, %v4214
        %v4216 = vrot.slane %v3216, 2
        %v4217 = vrot.slane %v3217, 2
        %v4218 = vsel %vm1332, %v4216, %v4217
        %v4219 = vrot.slane %v3218, 2
        %v4220 = vsel %vm1332, %v4217, %v4219
        %v4221 = vrot.slane %v3219, 2
        %v4222 = vrot.slane %v3220, 2
        %v4223 = vsel %vm1332, %v4221, %v4222
        %v4224 = vrot.slane %v3221, 2
        %v4225 = vsel %vm1332, %v4222, %v4224
        %v4226 = vrot.slane %v3222, 2
        %v4227 = vrot.slane %v3223, 2
        %v4228 = vsel %vm1332, %v4226, %v4227
        %v4229 = vrot.slane %v3224, 2
        %v4230 = vsel %vm1332, %v4227, %v4229
        %v4231 = vrot.slane %v3225, 2
        %v4232 = vrot.slane %v3226, 2
        %v4233 = vsel %vm1332, %v4231, %v4232
        %v4234 = vrot.slane %v3227, 2
        %v4235 = vsel %vm1332, %v4232, %v4234
        %v4236 = vrot.slane %v3228, 2
        %v4237 = vrot.slane %v3229, 2
        %v4238 = vsel %vm1332, %v4236, %v4237
        %v4239 = vrot.slane %v3230, 2
        %v4240 = vsel %vm1332, %v4237, %v4239
        %v4241 = vrot.slane %v3231, 2
        %v4242 = vrot.slane %v3232, 2
        %v4243 = vsel %vm1332, %v4241, %v4242
        %v4244 = vrot.slane %v3233, 2
        %v4245 = vsel %vm1332, %v4242, %v4244
        %v4246 = vrot.slane %v3234, 2
        %v4247 = vrot.slane %v3235, 2
        %v4248 = vsel %vm1332, %v4246, %v4247
        %v4249 = vrot.slane %v3236, 2
        %v4250 = vsel %vm1332, %v4247, %v4249
        %v4251 = vrot.slane %v3237, 2
        %v4252 = vrot.slane %v3238, 2
        %v4253 = vsel %vm1332, %v4251, %v4252
        %v4254 = vrot.slane %v3239, 2
        %v4255 = vsel %vm1332, %v4252, %v4254
        %v4256 = vrot.slane %v3240, 2
        %v4257 = vrot.slane %v3241, 2
        %v4258 = vsel %vm1332, %v4256, %v4257
        %v4259 = vrot.slane %v3242, 2
        %v4260 = vsel %vm1332, %v4257, %v4259
        %v4261 = vrot.slane %v3243, 2
        %v4262 = vrot.slane %v3244, 2
        %v4263 = vsel %vm1332, %v4261, %v4262
        %v4264 = vrot.slane %v3245, 2
        %v4265 = vsel %vm1332, %v4262, %v4264
        %s4266 = scalar_lea.vmem [#allocation7], 256
        %v4267 = vld [vmem:[%s4266] sm:$0xff]
        %v4268 = vld [vmem:[%s4266 + $0x8] sm:$0xff]
        %v4269 = vld [vmem:[%s4266 + $0x10] sm:$0xff]
        %v4270 = vld [vmem:[%s4266 + $0x18] sm:$0xff]
        %v4271 = vsel %vm204, %v4188, 0
        %v4273 = vsel %vm204, %v4190, 0
        %v4275 = vsel %vm204, %v4193, 0
        %v4277 = vsel %vm204, %v4195, 0
        %v4279 = vsel %vm204, %v4198, 0
        %v4281 = vsel %vm204, %v4200, 0
        %v4283 = vsel %vm204, %v4203, 0
        %v4285 = vsel %vm204, %v4205, 0
        %v4287 = vsel %vm204, %v4208, 0
        %v4289 = vsel %vm204, %v4210, 0
        %v4291 = vsel %vm204, %v4213, 0
        %v4293 = vsel %vm204, %v4215, 0
        %v4295 = vsel %vm204, %v4218, 0
        %v4297 = vsel %vm204, %v4220, 0
        %v4299 = vsel %vm204, %v4223, 0
        %v4301 = vsel %vm204, %v4225, 0
        %v4303 = vsel %vm204, %v4228, 0
        %v4305 = vsel %vm204, %v4230, 0
        %v4307 = vsel %vm204, %v4233, 0
        %v4309 = vsel %vm204, %v4235, 0
        %v4311 = vsel %vm204, %v4238, 0
        %v4313 = vsel %vm204, %v4240, 0
        %v4315 = vsel %vm204, %v4243, 0
        %v4317 = vsel %vm204, %v4245, 0
        %v4319 = vsel %vm204, %v4248, 0
        %v4321 = vsel %vm204, %v4250, 0
        %v4323 = vsel %vm204, %v4253, 0
        %v4325 = vsel %vm204, %v4255, 0
        %v4327 = vsel %vm204, %v4258, 0
        %v4329 = vsel %vm204, %v4260, 0
        %v4331 = vsel %vm204, %v4263, 0
        %v4333 = vsel %vm204, %v4265, 0
        %4335 = vmatprep.subr.mxu0 0.0
        %4336 = vmatpush1.msra.mxu0 0.0
        %4337 = vmatprep.subr.mxu0 0.0
        %4338 = vmatpush1.msra.mxu0 0.0
        %4339 = vmatprep.subr.mxu0 0.0
        %4340 = vmatpush1.msra.mxu0 0.0
        %4341 = vmatprep.subr.mxu0 0.0
        %4342 = vmatpush1.msra.mxu0 0.0
        %4343 = vmatprep.subr.mxu0 0.0
        %4344 = vmatpush1.msra.mxu0 0.0
        %4345 = vmatprep.subr.mxu0 0.0
        %4346 = vmatpush1.msra.mxu0 0.0
        %4347 = vmatprep.subr.mxu0 0.0
        %4348 = vmatpush1.msra.mxu0 0.0
        %4349 = vmatprep.subr.mxu0 0.0
        %4350 = vmatpush1.msra.mxu0 0.0
        %4351 = vmatprep.subr.mxu0 0.0
        %4352 = vmatpush1.msra.mxu0 0.0
        %4353 = vmatprep.subr.mxu0 0.0
        %4354 = vmatpush1.msra.mxu0 0.0
        %4355 = vmatprep.subr.mxu0 0.0
        %4356 = vmatpush1.msra.mxu0 0.0
        %4357 = vmatprep.subr.mxu0 0.0
        %4358 = vmatpush1.msra.mxu0 0.0
        %4359 = vmatprep.subr.mxu0 0.0
        %4360 = vmatpush1.msra.mxu0 %v4270
        %4361 = vmatprep.subr.mxu0 0.0
        %4362 = vmatpush1.msra.mxu0 %v4269
        %4363 = vmatprep.subr.mxu0 0.0
        %4364 = vmatpush1.msra.mxu0 %v4268
        %4365 = vmatprep.subr.mxu0 0.0
        %4366 = vmatpush1.msra.mxu0 %v4267
        %4367 = vmatprep.subr.mxu0 0.0
        %4368 = vmatpush2.msra.mxu0 0.0
        %4369 = vmatprep.subr.mxu0 0.0
        %4370 = vmatpush2.msra.mxu0 0.0
        %4371 = vmatprep.subr.mxu0 0.0
        %4372 = vmatpush2.msra.mxu0 0.0
        %4373 = vmatprep.subr.mxu0 0.0
        %4374 = vmatpush2.msra.mxu0 0.0
        %4375 = vmatprep.subr.mxu0 0.0
        %4376 = vmatpush2.msra.mxu0 0.0
        %4377 = vmatprep.subr.mxu0 0.0
        %4378 = vmatpush2.msra.mxu0 0.0
        %4379 = vmatprep.subr.mxu0 0.0
        %4380 = vmatpush2.msra.mxu0 0.0
        %4381 = vmatprep.subr.mxu0 0.0
        %4382 = vmatpush2.msra.mxu0 0.0
        %4383 = vmatprep.subr.mxu0 0.0
        %4384 = vmatpush2.msra.mxu0 0.0
        %4385 = vmatprep.subr.mxu0 0.0
        %4386 = vmatpush2.msra.mxu0 0.0
        %4387 = vmatprep.subr.mxu0 0.0
        %4388 = vmatpush2.msra.mxu0 0.0
        %4389 = vmatprep.subr.mxu0 0.0
        %4390 = vmatpush2.msra.mxu0 0.0
        %4391 = vmatprep.subr.mxu0 0.0
        %4392 = vmatpush2.msra.mxu0 0.0
        %4393 = vmatprep.subr.mxu0 0.0
        %4394 = vmatpush2.msra.mxu0 0.0
        %4395 = vmatprep.subr.mxu0 0.0
        %4396 = vmatpush2.msra.mxu0 0.0
        %4397 = vmatprep.subr.mxu0 0.0
        %4398 = vmatpush2.msra.mxu0 0.0
        %4399 = vmatprep.mubr.f32.mxu0 0.0
        %4400 = vmatmul.mubr.f32.gmra.mxu0 %v4271
        %v4401 = vpop.f32.mrf.mxu0
        %v4402 = vadd.f32 0.0, %v4401
        %v4403 = vpop.f32.mrf.mxu0
        %4404 = vmatprep.mubr.f32.mxu0 0.0
        %4405 = vmatmul.mubr.f32.gmra.mxu0 %v4273
        %v4406 = vpop.f32.mrf.mxu0
        %v4407 = vadd.f32 0.0, %v4406
        %v4408 = vpop.f32.mrf.mxu0
        %4409 = vmatprep.mubr.f32.mxu0 0.0
        %4410 = vmatmul.mubr.f32.gmra.mxu0 %v4275
        %v4411 = vpop.f32.mrf.mxu0
        %v4412 = vadd.f32 0.0, %v4411
        %v4413 = vpop.f32.mrf.mxu0
        %4414 = vmatprep.mubr.f32.mxu0 0.0
        %4415 = vmatmul.mubr.f32.gmra.mxu0 %v4277
        %v4416 = vpop.f32.mrf.mxu0
        %v4417 = vadd.f32 0.0, %v4416
        %v4418 = vpop.f32.mrf.mxu0
        %4419 = vmatprep.mubr.f32.mxu0 0.0
        %4420 = vmatmul.mubr.f32.gmra.mxu0 %v4279
        %v4421 = vpop.f32.mrf.mxu0
        %v4422 = vadd.f32 0.0, %v4421
        %v4423 = vpop.f32.mrf.mxu0
        %4424 = vmatprep.mubr.f32.mxu0 0.0
        %4425 = vmatmul.mubr.f32.gmra.mxu0 %v4281
        %v4426 = vpop.f32.mrf.mxu0
        %v4427 = vadd.f32 0.0, %v4426
        %v4428 = vpop.f32.mrf.mxu0
        %4429 = vmatprep.mubr.f32.mxu0 0.0
        %4430 = vmatmul.mubr.f32.gmra.mxu0 %v4283
        %v4431 = vpop.f32.mrf.mxu0
        %v4432 = vadd.f32 0.0, %v4431
        %v4433 = vpop.f32.mrf.mxu0
        %4434 = vmatprep.mubr.f32.mxu0 0.0
        %4435 = vmatmul.mubr.f32.gmra.mxu0 %v4285
        %v4436 = vpop.f32.mrf.mxu0
        %v4437 = vadd.f32 0.0, %v4436
        %v4438 = vpop.f32.mrf.mxu0
        %4439 = vmatprep.mubr.f32.mxu0 0.0
        %4440 = vmatmul.mubr.f32.gmra.mxu0 %v4287
        %v4441 = vpop.f32.mrf.mxu0
        %v4442 = vadd.f32 0.0, %v4441
        %v4443 = vpop.f32.mrf.mxu0
        %4444 = vmatprep.mubr.f32.mxu0 0.0
        %4445 = vmatmul.mubr.f32.gmra.mxu0 %v4289
        %v4446 = vpop.f32.mrf.mxu0
        %v4447 = vadd.f32 0.0, %v4446
        %v4448 = vpop.f32.mrf.mxu0
        %4449 = vmatprep.mubr.f32.mxu0 0.0
        %4450 = vmatmul.mubr.f32.gmra.mxu0 %v4291
        %v4451 = vpop.f32.mrf.mxu0
        %v4452 = vadd.f32 0.0, %v4451
        %v4453 = vpop.f32.mrf.mxu0
        %4454 = vmatprep.mubr.f32.mxu0 0.0
        %4455 = vmatmul.mubr.f32.gmra.mxu0 %v4293
        %v4456 = vpop.f32.mrf.mxu0
        %v4457 = vadd.f32 0.0, %v4456
        %v4458 = vpop.f32.mrf.mxu0
        %4459 = vmatprep.mubr.f32.mxu0 0.0
        %4460 = vmatmul.mubr.f32.gmra.mxu0 %v4295
        %v4461 = vpop.f32.mrf.mxu0
        %v4462 = vadd.f32 0.0, %v4461
        %v4463 = vpop.f32.mrf.mxu0
        %4464 = vmatprep.mubr.f32.mxu0 0.0
        %4465 = vmatmul.mubr.f32.gmra.mxu0 %v4297
        %v4466 = vpop.f32.mrf.mxu0
        %v4467 = vadd.f32 0.0, %v4466
        %v4468 = vpop.f32.mrf.mxu0
        %4469 = vmatprep.mubr.f32.mxu0 0.0
        %4470 = vmatmul.mubr.f32.gmra.mxu0 %v4299
        %v4471 = vpop.f32.mrf.mxu0
        %v4472 = vadd.f32 0.0, %v4471
        %v4473 = vpop.f32.mrf.mxu0
        %4474 = vmatprep.mubr.f32.mxu0 0.0
        %4475 = vmatmul.mubr.f32.gmra.mxu0 %v4301
        %v4476 = vpop.f32.mrf.mxu0
        %v4477 = vadd.f32 0.0, %v4476
        %v4478 = vpop.f32.mrf.mxu0
        %4479 = vmatprep.mubr.f32.mxu0 0.0
        %4480 = vmatmul.mubr.f32.gmra.mxu0 %v4303
        %v4481 = vpop.f32.mrf.mxu0
        %v4482 = vadd.f32 0.0, %v4481
        %v4483 = vpop.f32.mrf.mxu0
        %4484 = vmatprep.mubr.f32.mxu0 0.0
        %4485 = vmatmul.mubr.f32.gmra.mxu0 %v4305
        %v4486 = vpop.f32.mrf.mxu0
        %v4487 = vadd.f32 0.0, %v4486
        %v4488 = vpop.f32.mrf.mxu0
        %4489 = vmatprep.mubr.f32.mxu0 0.0
        %4490 = vmatmul.mubr.f32.gmra.mxu0 %v4307
        %v4491 = vpop.f32.mrf.mxu0
        %v4492 = vadd.f32 0.0, %v4491
        %v4493 = vpop.f32.mrf.mxu0
        %4494 = vmatprep.mubr.f32.mxu0 0.0
        %4495 = vmatmul.mubr.f32.gmra.mxu0 %v4309
        %v4496 = vpop.f32.mrf.mxu0
        %v4497 = vadd.f32 0.0, %v4496
        %v4498 = vpop.f32.mrf.mxu0
        %4499 = vmatprep.mubr.f32.mxu0 0.0
        %4500 = vmatmul.mubr.f32.gmra.mxu0 %v4311
        %v4501 = vpop.f32.mrf.mxu0
        %v4502 = vadd.f32 0.0, %v4501
        %v4503 = vpop.f32.mrf.mxu0
        %4504 = vmatprep.mubr.f32.mxu0 0.0
        %4505 = vmatmul.mubr.f32.gmra.mxu0 %v4313
        %v4506 = vpop.f32.mrf.mxu0
        %v4507 = vadd.f32 0.0, %v4506
        %v4508 = vpop.f32.mrf.mxu0
        %4509 = vmatprep.mubr.f32.mxu0 0.0
        %4510 = vmatmul.mubr.f32.gmra.mxu0 %v4315
        %v4511 = vpop.f32.mrf.mxu0
        %v4512 = vadd.f32 0.0, %v4511
        %v4513 = vpop.f32.mrf.mxu0
        %4514 = vmatprep.mubr.f32.mxu0 0.0
        %4515 = vmatmul.mubr.f32.gmra.mxu0 %v4317
        %v4516 = vpop.f32.mrf.mxu0
        %v4517 = vadd.f32 0.0, %v4516
        %v4518 = vpop.f32.mrf.mxu0
        %4519 = vmatprep.mubr.f32.mxu0 0.0
        %4520 = vmatmul.mubr.f32.gmra.mxu0 %v4319
        %v4521 = vpop.f32.mrf.mxu0
        %v4522 = vadd.f32 0.0, %v4521
        %v4523 = vpop.f32.mrf.mxu0
        %4524 = vmatprep.mubr.f32.mxu0 0.0
        %4525 = vmatmul.mubr.f32.gmra.mxu0 %v4321
        %v4526 = vpop.f32.mrf.mxu0
        %v4527 = vadd.f32 0.0, %v4526
        %v4528 = vpop.f32.mrf.mxu0
        %4529 = vmatprep.mubr.f32.mxu0 0.0
        %4530 = vmatmul.mubr.f32.gmra.mxu0 %v4323
        %v4531 = vpop.f32.mrf.mxu0
        %v4532 = vadd.f32 0.0, %v4531
        %v4533 = vpop.f32.mrf.mxu0
        %4534 = vmatprep.mubr.f32.mxu0 0.0
        %4535 = vmatmul.mubr.f32.gmra.mxu0 %v4325
        %v4536 = vpop.f32.mrf.mxu0
        %v4537 = vadd.f32 0.0, %v4536
        %v4538 = vpop.f32.mrf.mxu0
        %4539 = vmatprep.mubr.f32.mxu0 0.0
        %4540 = vmatmul.mubr.f32.gmra.mxu0 %v4327
        %v4541 = vpop.f32.mrf.mxu0
        %v4542 = vadd.f32 0.0, %v4541
        %v4543 = vpop.f32.mrf.mxu0
        %4544 = vmatprep.mubr.f32.mxu0 0.0
        %4545 = vmatmul.mubr.f32.gmra.mxu0 %v4329
        %v4546 = vpop.f32.mrf.mxu0
        %v4547 = vadd.f32 0.0, %v4546
        %v4548 = vpop.f32.mrf.mxu0
        %4549 = vmatprep.mubr.f32.mxu0 0.0
        %4550 = vmatmul.mubr.f32.gmra.mxu0 %v4331
        %v4551 = vpop.f32.mrf.mxu0
        %v4552 = vadd.f32 0.0, %v4551
        %v4553 = vpop.f32.mrf.mxu0
        %4554 = vmatprep.mubr.f32.mxu0 0.0
        %4555 = vmatmul.mubr.f32.gmra.mxu0 %v4333
        %v4556 = vpop.f32.mrf.mxu0
        %v4557 = vadd.f32 0.0, %v4556
        %v4558 = vpop.f32.mrf.mxu0
        %4559 = vdwg.mxu0
        %v4560 = vadd.f32 %v4154, %v4402
        %v4561 = vadd.f32 %v4155, %v4407
        %v4562 = vadd.f32 %v4156, %v4412
        %v4563 = vadd.f32 %v4157, %v4417
        %v4564 = vadd.f32 %v4158, %v4422
        %v4565 = vadd.f32 %v4159, %v4427
        %v4566 = vadd.f32 %v4160, %v4432
        %v4567 = vadd.f32 %v4161, %v4437
        %v4568 = vadd.f32 %v4162, %v4442
        %v4569 = vadd.f32 %v4163, %v4447
        %v4570 = vadd.f32 %v4164, %v4452
        %v4571 = vadd.f32 %v4165, %v4457
        %v4572 = vadd.f32 %v4166, %v4462
        %v4573 = vadd.f32 %v4167, %v4467
        %v4574 = vadd.f32 %v4168, %v4472
        %v4575 = vadd.f32 %v4169, %v4477
        %v4576 = vadd.f32 %v4170, %v4482
        %v4577 = vadd.f32 %v4171, %v4487
        %v4578 = vadd.f32 %v4172, %v4492
        %v4579 = vadd.f32 %v4173, %v4497
        %v4580 = vadd.f32 %v4174, %v4502
        %v4581 = vadd.f32 %v4175, %v4507
        %v4582 = vadd.f32 %v4176, %v4512
        %v4583 = vadd.f32 %v4177, %v4517
        %v4584 = vadd.f32 %v4178, %v4522
        %v4585 = vadd.f32 %v4179, %v4527
        %v4586 = vadd.f32 %v4180, %v4532
        %v4587 = vadd.f32 %v4181, %v4537
        %v4588 = vadd.f32 %v4182, %v4542
        %v4589 = vadd.f32 %v4183, %v4547
        %v4590 = vadd.f32 %v4184, %v4552
        %v4591 = vadd.f32 %v4185, %v4557
        %4592 = vst.msk [vmem:[#allocation3] sm:$0xff] %vm311, %v4560
        %4593 = vst.msk [vmem:[#allocation3 + $0x8] sm:$0xff] %vm311, %v4561
        %4594 = vst.msk [vmem:[#allocation3 + $0x10] sm:$0xff] %vm311, %v4562
        %4595 = vst.msk [vmem:[#allocation3 + $0x18] sm:$0xff] %vm311, %v4563
        %4596 = vst.msk [vmem:[#allocation3 + $0x20] sm:$0xff] %vm311, %v4564
        %4597 = vst.msk [vmem:[#allocation3 + $0x28] sm:$0xff] %vm311, %v4565
        %4598 = vst.msk [vmem:[#allocation3 + $0x30] sm:$0xff] %vm311, %v4566
        %4599 = vst.msk [vmem:[#allocation3 + $0x38] sm:$0xff] %vm311, %v4567
        %4600 = vst.msk [vmem:[#allocation3 + $0x40] sm:$0xff] %vm311, %v4568
        %4601 = vst.msk [vmem:[#allocation3 + $0x48] sm:$0xff] %vm311, %v4569
        %4602 = vst.msk [vmem:[#allocation3 + $0x50] sm:$0xff] %vm311, %v4570
        %4603 = vst.msk [vmem:[#allocation3 + $0x58] sm:$0xff] %vm311, %v4571
        %4604 = vst.msk [vmem:[#allocation3 + $0x60] sm:$0xff] %vm311, %v4572
        %4605 = vst.msk [vmem:[#allocation3 + $0x68] sm:$0xff] %vm311, %v4573
        %4606 = vst.msk [vmem:[#allocation3 + $0x70] sm:$0xff] %vm311, %v4574
        %4607 = vst.msk [vmem:[#allocation3 + $0x78] sm:$0xff] %vm311, %v4575
        %4608 = vst.msk [vmem:[#allocation3 + $0x80] sm:$0xff] %vm311, %v4576
        %4609 = vst.msk [vmem:[#allocation3 + $0x88] sm:$0xff] %vm311, %v4577
        %4610 = vst.msk [vmem:[#allocation3 + $0x90] sm:$0xff] %vm311, %v4578
        %4611 = vst.msk [vmem:[#allocation3 + $0x98] sm:$0xff] %vm311, %v4579
        %4612 = vst.msk [vmem:[#allocation3 + $0xa0] sm:$0xff] %vm311, %v4580
        %4613 = vst.msk [vmem:[#allocation3 + $0xa8] sm:$0xff] %vm311, %v4581
        %4614 = vst.msk [vmem:[#allocation3 + $0xb0] sm:$0xff] %vm311, %v4582
        %4615 = vst.msk [vmem:[#allocation3 + $0xb8] sm:$0xff] %vm311, %v4583
        %4616 = vst.msk [vmem:[#allocation3 + $0xc0] sm:$0xff] %vm311, %v4584
        %4617 = vst.msk [vmem:[#allocation3 + $0xc8] sm:$0xff] %vm311, %v4585
        %4618 = vst.msk [vmem:[#allocation3 + $0xd0] sm:$0xff] %vm311, %v4586
        %4619 = vst.msk [vmem:[#allocation3 + $0xd8] sm:$0xff] %vm311, %v4587
        %4620 = vst.msk [vmem:[#allocation3 + $0xe0] sm:$0xff] %vm311, %v4588
        %4621 = vst.msk [vmem:[#allocation3 + $0xe8] sm:$0xff] %vm311, %v4589
        %4622 = vst.msk [vmem:[#allocation3 + $0xf0] sm:$0xff] %vm311, %v4590
        %4623 = vst.msk [vmem:[#allocation3 + $0xf8] sm:$0xff] %vm311, %v4591
        %v4624 = vld [vmem:[#allocation3] sm:$0xff]
        %v4625 = vld [vmem:[#allocation3 + $0x8] sm:$0xff]
        %v4626 = vld [vmem:[#allocation3 + $0x10] sm:$0xff]
        %v4627 = vld [vmem:[#allocation3 + $0x18] sm:$0xff]
        %v4628 = vld [vmem:[#allocation3 + $0x20] sm:$0xff]
        %v4629 = vld [vmem:[#allocation3 + $0x28] sm:$0xff]
        %v4630 = vld [vmem:[#allocation3 + $0x30] sm:$0xff]
        %v4631 = vld [vmem:[#allocation3 + $0x38] sm:$0xff]
        %v4632 = vld [vmem:[#allocation3 + $0x40] sm:$0xff]
        %v4633 = vld [vmem:[#allocation3 + $0x48] sm:$0xff]
        %v4634 = vld [vmem:[#allocation3 + $0x50] sm:$0xff]
        %v4635 = vld [vmem:[#allocation3 + $0x58] sm:$0xff]
        %v4636 = vld [vmem:[#allocation3 + $0x60] sm:$0xff]
        %v4637 = vld [vmem:[#allocation3 + $0x68] sm:$0xff]
        %v4638 = vld [vmem:[#allocation3 + $0x70] sm:$0xff]
        %v4639 = vld [vmem:[#allocation3 + $0x78] sm:$0xff]
        %v4640 = vld [vmem:[#allocation3 + $0x80] sm:$0xff]
        %v4641 = vld [vmem:[#allocation3 + $0x88] sm:$0xff]
        %v4642 = vld [vmem:[#allocation3 + $0x90] sm:$0xff]
        %v4643 = vld [vmem:[#allocation3 + $0x98] sm:$0xff]
        %v4644 = vld [vmem:[#allocation3 + $0xa0] sm:$0xff]
        %v4645 = vld [vmem:[#allocation3 + $0xa8] sm:$0xff]
        %v4646 = vld [vmem:[#allocation3 + $0xb0] sm:$0xff]
        %v4647 = vld [vmem:[#allocation3 + $0xb8] sm:$0xff]
        %v4648 = vld [vmem:[#allocation3 + $0xc0] sm:$0xff]
        %v4649 = vld [vmem:[#allocation3 + $0xc8] sm:$0xff]
        %v4650 = vld [vmem:[#allocation3 + $0xd0] sm:$0xff]
        %v4651 = vld [vmem:[#allocation3 + $0xd8] sm:$0xff]
        %v4652 = vld [vmem:[#allocation3 + $0xe0] sm:$0xff]
        %v4653 = vld [vmem:[#allocation3 + $0xe8] sm:$0xff]
        %v4654 = vld [vmem:[#allocation3 + $0xf0] sm:$0xff]
        %v4655 = vld [vmem:[#allocation3 + $0xf8] sm:$0xff]
        %v4656 = vld [vmem:[%s2] sm:$0x1]
        %v4658 = vlaneseq
        %v4659 = vshrl.u32 %v4658, 7
        %v4660 = vsub.s32 0, %v4659
        %v4661 = vrot.slane %v4656, %v4660
        %v4663 = vadd.f32 %v4624, %v4661
        %v4664 = vadd.f32 %v4625, %v4661
        %v4665 = vadd.f32 %v4626, %v4661
        %v4666 = vadd.f32 %v4627, %v4661
        %v4667 = vadd.f32 %v4628, %v4661
        %v4668 = vadd.f32 %v4629, %v4661
        %v4669 = vadd.f32 %v4630, %v4661
        %v4670 = vadd.f32 %v4631, %v4661
        %v4671 = vadd.f32 %v4632, %v4661
        %v4672 = vadd.f32 %v4633, %v4661
        %v4673 = vadd.f32 %v4634, %v4661
        %v4674 = vadd.f32 %v4635, %v4661
        %v4675 = vadd.f32 %v4636, %v4661
        %v4676 = vadd.f32 %v4637, %v4661
        %v4677 = vadd.f32 %v4638, %v4661
        %v4678 = vadd.f32 %v4639, %v4661
        %v4679 = vadd.f32 %v4640, %v4661
        %v4680 = vadd.f32 %v4641, %v4661
        %v4681 = vadd.f32 %v4642, %v4661
        %v4682 = vadd.f32 %v4643, %v4661
        %v4683 = vadd.f32 %v4644, %v4661
        %v4684 = vadd.f32 %v4645, %v4661
        %v4685 = vadd.f32 %v4646, %v4661
        %v4686 = vadd.f32 %v4647, %v4661
        %v4687 = vadd.f32 %v4648, %v4661
        %v4688 = vadd.f32 %v4649, %v4661
        %v4689 = vadd.f32 %v4650, %v4661
        %v4690 = vadd.f32 %v4651, %v4661
        %v4691 = vadd.f32 %v4652, %v4661
        %v4692 = vadd.f32 %v4653, %v4661
        %v4693 = vadd.f32 %v4654, %v4661
        %v4694 = vadd.f32 %v4655, %v4661
        %4695 = vst.msk [vmem:[%s203] sm:$0xff] %vm311, %v4663
        %4696 = vst.msk [vmem:[%s203 + $0x8] sm:$0xff] %vm311, %v4664
        %4697 = vst.msk [vmem:[%s203 + $0x10] sm:$0xff] %vm311, %v4665
        %4698 = vst.msk [vmem:[%s203 + $0x18] sm:$0xff] %vm311, %v4666
        %4699 = vst.msk [vmem:[%s203 + $0x20] sm:$0xff] %vm311, %v4667
        %4700 = vst.msk [vmem:[%s203 + $0x28] sm:$0xff] %vm311, %v4668
        %4701 = vst.msk [vmem:[%s203 + $0x30] sm:$0xff] %vm311, %v4669
        %4702 = vst.msk [vmem:[%s203 + $0x38] sm:$0xff] %vm311, %v4670
        %4703 = vst.msk [vmem:[%s203 + $0x40] sm:$0xff] %vm311, %v4671
        %4704 = vst.msk [vmem:[%s203 + $0x48] sm:$0xff] %vm311, %v4672
        %4705 = vst.msk [vmem:[%s203 + $0x50] sm:$0xff] %vm311, %v4673
        %4706 = vst.msk [vmem:[%s203 + $0x58] sm:$0xff] %vm311, %v4674
        %4707 = vst.msk [vmem:[%s203 + $0x60] sm:$0xff] %vm311, %v4675
        %4708 = vst.msk [vmem:[%s203 + $0x68] sm:$0xff] %vm311, %v4676
        %4709 = vst.msk [vmem:[%s203 + $0x70] sm:$0xff] %vm311, %v4677
        %4710 = vst.msk [vmem:[%s203 + $0x78] sm:$0xff] %vm311, %v4678
        %4711 = vst.msk [vmem:[%s203 + $0x80] sm:$0xff] %vm311, %v4679
        %4712 = vst.msk [vmem:[%s203 + $0x88] sm:$0xff] %vm311, %v4680
        %4713 = vst.msk [vmem:[%s203 + $0x90] sm:$0xff] %vm311, %v4681
        %4714 = vst.msk [vmem:[%s203 + $0x98] sm:$0xff] %vm311, %v4682
        %4715 = vst.msk [vmem:[%s203 + $0xa0] sm:$0xff] %vm311, %v4683
        %4716 = vst.msk [vmem:[%s203 + $0xa8] sm:$0xff] %vm311, %v4684
        %4717 = vst.msk [vmem:[%s203 + $0xb0] sm:$0xff] %vm311, %v4685
        %4718 = vst.msk [vmem:[%s203 + $0xb8] sm:$0xff] %vm311, %v4686
        %4719 = vst.msk [vmem:[%s203 + $0xc0] sm:$0xff] %vm311, %v4687
        %4720 = vst.msk [vmem:[%s203 + $0xc8] sm:$0xff] %vm311, %v4688
        %4721 = vst.msk [vmem:[%s203 + $0xd0] sm:$0xff] %vm311, %v4689
        %4722 = vst.msk [vmem:[%s203 + $0xd8] sm:$0xff] %vm311, %v4690
        %4723 = vst.msk [vmem:[%s203 + $0xe0] sm:$0xff] %vm311, %v4691
        %4724 = vst.msk [vmem:[%s203 + $0xe8] sm:$0xff] %vm311, %v4692
        %4725 = vst.msk [vmem:[%s203 + $0xf0] sm:$0xff] %vm311, %v4693
        %4726 = vst.msk [vmem:[%s203 + $0xf8] sm:$0xff] %vm311, %v4694
        %s4727 = sand.u32 %s97, 1
        %s4728 = scalar_lea.sflag [#allocation6], %s4727
        %s4729 = sand.u32 %s97, 1
        %s4730 = smul.addr %s4729, 256
        %s4731 = scalar_lea.vmem [#allocation9], %s4730
        // Predicated region
        $region41: #{tpu_custom_call.1} parent=31 // pred_check
          %p4732 = pneg %p107
        $region42: #{tpu_custom_call.1} parent=31 // pred_check_branch
          %4734 = sbr.rel (%p4732) target = $region44
        $region43: #{tpu_custom_call.1} parent=31 // pred_region
          %s4736 = ssub.s32 4096, 4096
          %4737 = vsyncadd %s4728, %s4736
          %s4738 = smul.addr %s21, 32
          %s4739 = smul.addr %s4738, 128
          %s4740 = scalar_lea.hbm %s3, %s4739
          %s4741 = sshll.u32 %s4731, 4
          %s4742 = int_to_ptr.vmem [resolvable:$true] %s4741
          %4747 = dma.vmem_to_hbm [thread:$0]  %s4742, 4096, %s4740, %s4728, 128, 128, 8
        $region44: #{tpu_custom_call.1} parent=31 // pred_fallthru
          _
      $region32: #{tpu_custom_call.1} parent=5 // pred_fallthru
        _
      %p4748 = scmp.le.s32.totalorder 2, %s16
      // Predicated region
      $region45: #{tpu_custom_call.1} parent=5 // pred_check
        %p4749 = pneg %p4748
      $region46: #{tpu_custom_call.1} parent=5 // pred_check_branch
        %4751 = sbr.rel (%p4749) target = $region48
      $region47: #{tpu_custom_call.1} parent=5 // pred_region
        %s4752 = ssub.s32 %s16, 2
        // Predicated region
        $region49: #{tpu_custom_call.1} parent=47 // pred_check
          %p4753 = pneg %p113
        $region50: #{tpu_custom_call.1} parent=47 // pred_check_branch
          %4755 = sbr.rel (%p4753) target = $region52
        $region51: #{tpu_custom_call.1} parent=47 // pred_region
          %s4756 = sand.u32 %s98, 1
          %s4757 = scalar_lea.sflag [#allocation6], %s4756
          %s4758 = sand.u32 %s98, 1
          %s4759 = smul.addr %s4758, 256
          %s4760 = scalar_lea.vmem [#allocation9], %s4759
          %4761 = dma.done %s4757, 4096
        $region52: #{tpu_custom_call.1} parent=47 // pred_fallthru
          _
      $region48: #{tpu_custom_call.1} parent=5 // pred_fallthru
        _
    $region6: #{tpu_custom_call.1} parent=1 // loop_footer
      %s20 = sadd.s32 1, %s16
    $region7: #{tpu_custom_call.1} parent=1 // loop_footer_branch
      %15 = sbr.rel target = $region3
    $region8: #{tpu_custom_call.1} parent=1 // loop_exit
      _
    %4762 = vsyncpa [#allocation5], 1
    %s4763 = scalar_lea.sflag [#allocation5], 1
    %4764 = vsyncpa %s4763, 1
    %4765 = vsyncpa [#allocation8], 1
    %4766 = vsyncpa [#allocation6], 1
    %s4767 = scalar_lea.sflag [#allocation6], 1
    %4768 = vsyncpa %s4767, 1

</llo_original>
